<compile_context>
chip_gen: v7x
topology: tpu7x:2x2x1
jax: 0.10.0
libtpu: 0.0.40
codegen_flags: <defaults>
</compile_context>

<pallas_src>
import functools

import jax
import jax.numpy as jnp
from jax import lax
from jax.experimental import pallas as pl
from jax.experimental.pallas import tpu as pltpu

BN_EPS = 1e-5


# ----------------------------- kernel helpers --------------------------------

def _zero_pad_border(pad_ref, h_in, w_in):
    """Zero only the 1-pixel border of a (h_in+2, w_in+2, C) VMEM scratch."""
    c = pad_ref.shape[-1]
    zrow = jnp.zeros((1, w_in + 2, c), jnp.float32)
    zcol = jnp.zeros((h_in + 2, 1, c), jnp.float32)
    pad_ref[0:1, :, :] = zrow
    pad_ref[h_in + 1:h_in + 2, :, :] = zrow
    pad_ref[:, 0:1, :] = zcol
    pad_ref[:, w_in + 1:w_in + 2, :] = zcol


def _dw3x3(pad_ref, taps, bias, h_out, w_out, s):
    """3x3 depthwise conv + bias + ReLU on a zero-padded (Hp, Wp, C) scratch.

    taps: (9, C) f32 value (row k = kh*3+kw, BN scale folded), bias: (1, C) f32.
    Stride s (the following 1x1-conv stride is folded in by the caller).
    For s > 1 the padded input is phase-deinterleaved with s*s strided ref reads;
    every tap is then a contiguous slice (no per-tap strided sublane reads).
    """
    c = pad_ref.shape[-1]
    acc = jnp.zeros((h_out, w_out, c), jnp.float32)
    if s == 1:
        for kh in range(3):
            for kw in range(3):
                win = pad_ref[kh:kh + h_out, kw:kw + w_out, :].astype(jnp.float32)
                acc = acc + win * taps[kh * 3 + kw]
    else:
        slabs = {}
        for ph in range(s):
            for pw in range(s):
                nh = (2 - ph) // s + h_out
                nw = (2 - pw) // s + w_out
                slabs[(ph, pw)] = pad_ref[
                    pl.ds(ph, nh, stride=s), pl.ds(pw, nw, stride=s), :
                ].astype(jnp.float32)
        for kh in range(3):
            for kw in range(3):
                slab = slabs[(kh % s, kw % s)]
                oh, ow = kh // s, kw // s
                acc = acc + slab[oh:oh + h_out, ow:ow + w_out, :] * taps[kh * 3 + kw]
    return jnp.maximum(acc + bias, 0.0)


# ----------------------------- Pallas kernel ---------------------------------

def _fused_block_kernel(x_ref, wdw1_ref, b1_ref, wpw1_ref, b2_ref,
                        wdw2_ref, b3_ref, wpw2_ref, b4_ref,
                        o_ref, xpad_ref, mid_ref,
                        *, nb, se1, se2, h, w, h2, w2, h4, w4):
    """Full depthwise-separable block for a block of `nb` batch images.

    x_ref:    (nb, H, W, C0)        NHWC input block
    wdw*_ref: (9, C)                depthwise taps (BN scale folded)
    wpw*_ref: (Cin, Cout)           pointwise weights (BN scale folded)
    b*_ref:   (1, C)                folded BN biases
    o_ref:    (nb, h4*w4, C2)       output block (pixels x channels)
    xpad_ref: (H+2, W+2, C0)        VMEM scratch (padded stage-1 input, reused per image)
    mid_ref:  (h2+2, w2+2, C1)      VMEM scratch (padded stage-3 input, reused per image)
    """
    f32 = jnp.float32
    c0 = x_ref.shape[-1]
    c1 = wpw1_ref.shape[-1]
    c2 = wpw2_ref.shape[-1]

    # Border-only zero init; the interior is fully overwritten for every image.
    _zero_pad_border(xpad_ref, h, w)
    _zero_pad_border(mid_ref, h2, w2)

    # Hoist weights / biases out of the per-image loop.
    taps1 = wdw1_ref[...].astype(f32)
    taps2 = wdw2_ref[...].astype(f32)
    bias1 = b1_ref[...].astype(f32)
    bias2 = b2_ref[...].astype(f32)
    bias3 = b3_ref[...].astype(f32)
    bias4 = b4_ref[...].astype(f32)
    wpw1 = wpw1_ref[...]
    wpw2 = wpw2_ref[...]

    for b in range(nb):
        # stage 1: depthwise 3x3 (pw1 stride folded) + bias + ReLU
        xpad_ref[1:1 + h, 1:1 + w, :] = x_ref[b].astype(f32)
        y1 = _dw3x3(xpad_ref, taps1, bias1, h2, w2, se1)                 # (h2,w2,c0)

        # stage 2: pointwise 1x1 on the MXU + bias + ReLU
        # (MXU kept even at small C: it is otherwise idle and the VPU alternative is
        #  lane-sparse at these channel widths.)
        y2 = jnp.dot(y1.reshape(h2 * w2, c0), wpw1, preferred_element_type=f32)
        y2 = jnp.maximum(y2 + bias2, 0.0)

        # stage 3: depthwise 3x3 (pw2 stride folded) + bias + ReLU
        mid_ref[1:1 + h2, 1:1 + w2, :] = y2.reshape(h2, w2, c1)
        y3 = _dw3x3(mid_ref, taps2, bias3, h4, w4, se2)                  # (h4,w4,c1)

        # stage 4: pointwise 1x1 on the MXU + bias + ReLU
        y4 = jnp.dot(y3.reshape(h4 * w4, c1), wpw2, preferred_element_type=f32)
        y4 = jnp.maximum(y4 + bias4, 0.0)
        o_ref[b, :, :] = y4.astype(o_ref.dtype)


# ----------------------------- JAX wrappers -----------------------------------

def depthwise_separable_block_nhwc(x_nhwc,
                                   w_dw1, scale1, bias1,
                                   w_pw1, scale2, bias2,
                                   w_dw2, scale3, bias3,
                                   w_pw2, scale4, bias4,
                                   *, stride, batch_block=1):
    """Fused forward of DepthWiseSeparableBlock (is_common=True), NHWC in/out."""
    s0, s1_, s2_, s3_ = stride
    n, h, w, c0 = x_nhwc.shape
    c1 = w_pw1.shape[0]
    c2 = w_pw2.shape[0]

    # Fold the 1x1-conv strides into the preceding depthwise strided read:
    # a stride-s 1x1 conv (kernel=1, pad=0) is spatial subsampling and
    # floor(floor(a/s0)/s1) == floor(a/(s0*s1)); bias/ReLU are elementwise.
    se1 = s0 * s1_
    se2 = s2_ * s3_
    h2 = (h + 2 - 3) // se1 + 1
    w2 = (w + 2 - 3) // se1 + 1
    h4 = (h2 + 2 - 3) // se2 + 1
    w4 = (w2 + 2 - 3) // se2 + 1

    # Fold BN scale into the conv weights (inference-mode BN); bias stays separate.
    f32 = jnp.float32
    wdw1_t = (jnp.transpose(w_dw1, (1, 2, 0)).reshape(9, c0) * scale1[None, :]).astype(f32)
    wpw1_t = (jnp.transpose(w_pw1) * scale2[None, :]).astype(f32)            # (C0, C1)
    wdw2_t = (jnp.transpose(w_dw2, (1, 2, 0)).reshape(9, c1) * scale3[None, :]).astype(f32)
    wpw2_t = (jnp.transpose(w_pw2) * scale4[None, :]).astype(f32)            # (C1, C2)

    # Batch blocking: nb images per grid step (amortizes per-step overhead on
    # single-TC v5e/v6e; keep nb small enough that >=2 steps remain for v7x megacore).
    nb = max(1, min(batch_block, n))
    n_pad = ((n + nb - 1) // nb) * nb
    x_in = x_nhwc
    if n_pad != n:
        x_in = jnp.pad(x_nhwc, ((0, n_pad - n), (0, 0), (0, 0), (0, 0)))

    kernel = functools.partial(_fused_block_kernel,
                               nb=nb, se1=se1, se2=se2, h=h, w=w,
                               h2=h2, w2=w2, h4=h4, w4=w4)

    flops = 2 * n_pad * (h2 * w2 * c0 * 9 + h2 * w2 * c0 * c1
                         + h4 * w4 * c1 * 9 + h4 * w4 * c1 * c2)
    bytes_accessed = 4 * (n_pad * h * w * c0 + n_pad * h4 * w4 * c2
                          + 9 * (c0 + c1) + c0 * c1 + c1 * c2
                          + 2 * (c0 + 2 * c1 + c2))

    out = pl.pallas_call(
        kernel,
        out_shape=jax.ShapeDtypeStruct((n_pad, h4 * w4, c2), x_nhwc.dtype),
        grid_spec=pltpu.PrefetchScalarGridSpec(
            num_scalar_prefetch=0,
            grid=(n_pad // nb,),
            in_specs=[
                pl.BlockSpec((nb, h, w, c0), lambda i: (i, 0, 0, 0)),
                pl.BlockSpec((9, c0), lambda i: (0, 0)),
                pl.BlockSpec((1, c0), lambda i: (0, 0)),
                pl.BlockSpec((c0, c1), lambda i: (0, 0)),
                pl.BlockSpec((1, c1), lambda i: (0, 0)),
                pl.BlockSpec((9, c1), lambda i: (0, 0)),
                pl.BlockSpec((1, c1), lambda i: (0, 0)),
                pl.BlockSpec((c1, c2), lambda i: (0, 0)),
                pl.BlockSpec((1, c2), lambda i: (0, 0)),
            ],
            out_specs=pl.BlockSpec((nb, h4 * w4, c2), lambda i: (i, 0, 0)),
            scratch_shapes=[
                pltpu.VMEM((h + 2, w + 2, c0), jnp.float32),      # padded stage-1 input
                pltpu.VMEM((h2 + 2, w2 + 2, c1), jnp.float32),    # padded stage-3 input
            ],
        ),
        compiler_params=pltpu.CompilerParams(
            dimension_semantics=("parallel",),
            vmem_limit_bytes=32 * 1024 * 1024),
        cost_estimate=pl.CostEstimate(
            flops=flops, transcendentals=0, bytes_accessed=bytes_accessed),
    )(x_in,
      wdw1_t, bias1.reshape(1, c0).astype(f32),
      wpw1_t, bias2.reshape(1, c1).astype(f32),
      wdw2_t, bias3.reshape(1, c1).astype(f32),
      wpw2_t, bias4.reshape(1, c2).astype(f32))

    if n_pad != n:
        out = out[:n]
    return out.reshape(n, h4, w4, c2)


def depthwise_separable_block(x_nchw, *params, stride, batch_block=1):
    """NCHW adapter matching the PyTorch module interface."""
    x_nhwc = jnp.transpose(x_nchw, (0, 2, 3, 1))
    out_nhwc = depthwise_separable_block_nhwc(
        x_nhwc, *params, stride=stride, batch_block=batch_block)
    return jnp.transpose(out_nhwc, (0, 3, 1, 2))


def fold_bn(gamma, beta, mean, var, eps=BN_EPS):
    scale = gamma / jnp.sqrt(var + eps)
    bias = beta - mean * scale
    return scale, bias


# ----------------------------- Reference (pure JAX) ---------------------------

def _ref_conv_bn_relu(x, w_oihw, scale, bias, stride, padding, groups):
    y = lax.conv_general_dilated(
        x, w_oihw, (stride, stride),
        [(padding, padding), (padding, padding)],
        feature_group_count=groups,
        dimension_numbers=("NCHW", "OIHW", "NCHW"))
    y = y * scale[None, :, None, None] + bias[None, :, None, None]
    return jnp.maximum(y, 0.0)


# ----------------------------- Main --------------------------------------------

if __name__ == "__main__":
    dim = [16, 32, 64]          # dim[0] -> dim[1] -> dim[2]
    stride = [1, 1, 2, 1]       # strides for the four ConvBlocks
    N, H, W = 2, 16, 16

    key = jax.random.PRNGKey(0)
    keys = jax.random.split(key, 16)

    def bn_params(k, c):
        k1, k2, k3, k4 = jax.random.split(k, 4)
        gamma = jax.random.uniform(k1, (c,), minval=0.5, maxval=1.5)
        beta = 0.1 * jax.random.normal(k2, (c,))
        mean = 0.1 * jax.random.normal(k3, (c,))
        var = jax.random.uniform(k4, (c,), minval=0.5, maxval=1.5)
        return fold_bn(gamma, beta, mean, var)

    # Deterministic parameter init (shapes match nn.Conv2d / nn.BatchNorm2d).
    w_dw1 = 0.1 * jax.random.normal(keys[1], (dim[0], 3, 3), jnp.float32)    # (C0,1,3,3) squeezed
    s1, b1 = bn_params(keys[2], dim[0])
    w_pw1 = 0.1 * jax.random.normal(keys[3], (dim[1], dim[0]), jnp.float32)  # (C1,C0,1,1) squeezed
    s2, b2 = bn_params(keys[4], dim[1])
    w_dw2 = 0.1 * jax.random.normal(keys[5], (dim[1], 3, 3), jnp.float32)
    s3, b3 = bn_params(keys[6], dim[1])
    w_pw2 = 0.1 * jax.random.normal(keys[7], (dim[2], dim[1]), jnp.float32)
    s4, b4 = bn_params(keys[8], dim[2])

    # Input in PyTorch NCHW layout.
    x_nchw = jax.random.normal(keys[0], (N, dim[0], H, W), jnp.float32)

    @jax.jit
    def forward_bb1(x):            # one image per grid step (2 parallel steps)
        return depthwise_separable_block(
            x, w_dw1, s1, b1, w_pw1, s2, b2, w_dw2, s3, b3, w_pw2, s4, b4,
            stride=stride, batch_block=1)

    @jax.jit
    def forward_bb2(x):            # whole batch in one grid step (amortized overhead)
        return depthwise_separable_block(
            x, w_dw1, s1, b1, w_pw1, s2, b2, w_dw2, s3, b3, w_pw2, s4, b4,
            stride=stride, batch_block=2)

    out1 = jax.block_until_ready(forward_bb1(x_nchw))
    out2 = jax.block_until_ready(forward_bb2(x_nchw))

    # Pure-JAX reference (NCHW throughout).
    def reference(x):
        y = _ref_conv_bn_relu(x, w_dw1[:, None], s1, b1, stride[0], 1, dim[0])
        y = _ref_conv_bn_relu(y, w_pw1[:, :, None, None], s2, b2, stride[1], 0, 1)
        y = _ref_conv_bn_relu(y, w_dw2[:, None], s3, b3, stride[2], 1, dim[1])
        y = _ref_conv_bn_relu(y, w_pw2[:, :, None, None], s4, b4, stride[3], 0, 1)
        return y

    ref = jax.block_until_ready(reference(x_nchw))

    assert out1.shape == (N, dim[2], H // 2, W // 2), out1.shape
    assert out2.shape == (N, dim[2], H // 2, W // 2), out2.shape
    assert jnp.allclose(out1, ref, atol=1e-3, rtol=1e-3), float(jnp.max(jnp.abs(out1 - ref)))
    assert jnp.allclose(out2, ref, atol=1e-3, rtol=1e-3), float(jnp.max(jnp.abs(out2 - ref)))
    print("KERNEL_OK")
</pallas_src>

<mosaic_0001>
module attributes {stable_mosaic.version = 11 : i64} {
  func.func @_fused_block_kernel(%arg0: i32, %arg1: memref<1x16x16x16xf32, #tpu.memory_space<vmem>>, %arg2: memref<9x16xf32, #tpu.memory_space<vmem>>, %arg3: memref<1x16xf32, #tpu.memory_space<vmem>>, %arg4: memref<16x32xf32, #tpu.memory_space<vmem>>, %arg5: memref<1x32xf32, #tpu.memory_space<vmem>>, %arg6: memref<9x32xf32, #tpu.memory_space<vmem>>, %arg7: memref<1x32xf32, #tpu.memory_space<vmem>>, %arg8: memref<32x64xf32, #tpu.memory_space<vmem>>, %arg9: memref<1x64xf32, #tpu.memory_space<vmem>>, %arg10: memref<1x64x64xf32, #tpu.memory_space<vmem>>, %arg11: memref<18x18x16xf32, #tpu.memory_space<vmem>>, %arg12: memref<18x18x32xf32, #tpu.memory_space<vmem>>) attributes {dimension_semantics = [#tpu.dimension_semantics<parallel>], iteration_bounds = array<i64: 2>, scalar_prefetch = 0 : i64, scratch_operands = 2 : i64, tpu.core_type = #tpu.core_type<tc>, window_params = [{transform_indices = @transform_0, window_bounds = array<i64: 1, 16, 16, 16>}, {pipeline_mode = #tpu.pipeline_mode<synchronous>, transform_indices = @transform_1, window_bounds = array<i64: 9, 16>}, {pipeline_mode = #tpu.pipeline_mode<synchronous>, transform_indices = @transform_2, window_bounds = array<i64: 1, 16>}, {pipeline_mode = #tpu.pipeline_mode<synchronous>, transform_indices = @transform_3, window_bounds = array<i64: 16, 32>}, {pipeline_mode = #tpu.pipeline_mode<synchronous>, transform_indices = @transform_4, window_bounds = array<i64: 1, 32>}, {pipeline_mode = #tpu.pipeline_mode<synchronous>, transform_indices = @transform_5, window_bounds = array<i64: 9, 32>}, {pipeline_mode = #tpu.pipeline_mode<synchronous>, transform_indices = @transform_6, window_bounds = array<i64: 1, 32>}, {pipeline_mode = #tpu.pipeline_mode<synchronous>, transform_indices = @transform_7, window_bounds = array<i64: 32, 64>}, {pipeline_mode = #tpu.pipeline_mode<synchronous>, transform_indices = @transform_8, window_bounds = array<i64: 1, 64>}, {transform_indices = @transform_9, window_bounds = array<i64: 1, 64, 64>}]} {
    %cst = arith.constant 0.000000e+00 : f32
    %0 = vector.broadcast %cst : f32 to vector<1x18x16xf32>
    %cst_0 = arith.constant 0.000000e+00 : f32
    %1 = vector.broadcast %cst_0 : f32 to vector<18x1x16xf32>
    %c0 = arith.constant 0 : index
    %c0_1 = arith.constant 0 : index
    %c0_2 = arith.constant 0 : index
    %2 = vector.load %arg11[%c0, %c0_1, %c0_2] : memref<18x18x16xf32, #tpu.memory_space<vmem>>, vector<1x18x16xf32>
    tpu.vector_store %arg11[%c0, %c0_1, %c0_2], %0 {strides = array<i32>} : memref<18x18x16xf32, #tpu.memory_space<vmem>>, vector<1x18x16xf32>,
    %c17 = arith.constant 17 : index
    %c0_3 = arith.constant 0 : index
    %c0_4 = arith.constant 0 : index
    %3 = vector.load %arg11[%c17, %c0_3, %c0_4] : memref<18x18x16xf32, #tpu.memory_space<vmem>>, vector<1x18x16xf32>
    tpu.vector_store %arg11[%c17, %c0_3, %c0_4], %0 {strides = array<i32>} : memref<18x18x16xf32, #tpu.memory_space<vmem>>, vector<1x18x16xf32>,
    %c0_5 = arith.constant 0 : index
    %c0_6 = arith.constant 0 : index
    %c0_7 = arith.constant 0 : index
    %4 = vector.load %arg11[%c0_5, %c0_6, %c0_7] : memref<18x18x16xf32, #tpu.memory_space<vmem>>, vector<18x1x16xf32>
    tpu.vector_store %arg11[%c0_5, %c0_6, %c0_7], %1 {strides = array<i32>} : memref<18x18x16xf32, #tpu.memory_space<vmem>>, vector<18x1x16xf32>,
    %c0_8 = arith.constant 0 : index
    %c17_9 = arith.constant 17 : index
    %c0_10 = arith.constant 0 : index
    %5 = vector.load %arg11[%c0_8, %c17_9, %c0_10] : memref<18x18x16xf32, #tpu.memory_space<vmem>>, vector<18x1x16xf32>
    tpu.vector_store %arg11[%c0_8, %c17_9, %c0_10], %1 {strides = array<i32>} : memref<18x18x16xf32, #tpu.memory_space<vmem>>, vector<18x1x16xf32>,
    %cst_11 = arith.constant 0.000000e+00 : f32
    %6 = vector.broadcast %cst_11 : f32 to vector<1x18x32xf32>
    %cst_12 = arith.constant 0.000000e+00 : f32
    %7 = vector.broadcast %cst_12 : f32 to vector<18x1x32xf32>
    %c0_13 = arith.constant 0 : index
    %c0_14 = arith.constant 0 : index
    %c0_15 = arith.constant 0 : index
    %8 = vector.load %arg12[%c0_13, %c0_14, %c0_15] : memref<18x18x32xf32, #tpu.memory_space<vmem>>, vector<1x18x32xf32>
    tpu.vector_store %arg12[%c0_13, %c0_14, %c0_15], %6 {strides = array<i32>} : memref<18x18x32xf32, #tpu.memory_space<vmem>>, vector<1x18x32xf32>,
    %c17_16 = arith.constant 17 : index
    %c0_17 = arith.constant 0 : index
    %c0_18 = arith.constant 0 : index
    %9 = vector.load %arg12[%c17_16, %c0_17, %c0_18] : memref<18x18x32xf32, #tpu.memory_space<vmem>>, vector<1x18x32xf32>
    tpu.vector_store %arg12[%c17_16, %c0_17, %c0_18], %6 {strides = array<i32>} : memref<18x18x32xf32, #tpu.memory_space<vmem>>, vector<1x18x32xf32>,
    %c0_19 = arith.constant 0 : index
    %c0_20 = arith.constant 0 : index
    %c0_21 = arith.constant 0 : index
    %10 = vector.load %arg12[%c0_19, %c0_20, %c0_21] : memref<18x18x32xf32, #tpu.memory_space<vmem>>, vector<18x1x32xf32>
    tpu.vector_store %arg12[%c0_19, %c0_20, %c0_21], %7 {strides = array<i32>} : memref<18x18x32xf32, #tpu.memory_space<vmem>>, vector<18x1x32xf32>,
    %c0_22 = arith.constant 0 : index
    %c17_23 = arith.constant 17 : index
    %c0_24 = arith.constant 0 : index
    %11 = vector.load %arg12[%c0_22, %c17_23, %c0_24] : memref<18x18x32xf32, #tpu.memory_space<vmem>>, vector<18x1x32xf32>
    tpu.vector_store %arg12[%c0_22, %c17_23, %c0_24], %7 {strides = array<i32>} : memref<18x18x32xf32, #tpu.memory_space<vmem>>, vector<18x1x32xf32>,
    %c0_25 = arith.constant 0 : index
    %c0_26 = arith.constant 0 : index
    %12 = vector.load %arg2[%c0_25, %c0_26] : memref<9x16xf32, #tpu.memory_space<vmem>>, vector<9x16xf32>
    %c0_27 = arith.constant 0 : index
    %c0_28 = arith.constant 0 : index
    %13 = vector.load %arg6[%c0_27, %c0_28] : memref<9x32xf32, #tpu.memory_space<vmem>>, vector<9x32xf32>
    %c0_29 = arith.constant 0 : index
    %c0_30 = arith.constant 0 : index
    %14 = vector.load %arg3[%c0_29, %c0_30] : memref<1x16xf32, #tpu.memory_space<vmem>>, vector<1x16xf32>
    %c0_31 = arith.constant 0 : index
    %c0_32 = arith.constant 0 : index
    %15 = vector.load %arg5[%c0_31, %c0_32] : memref<1x32xf32, #tpu.memory_space<vmem>>, vector<1x32xf32>
    %c0_33 = arith.constant 0 : index
    %c0_34 = arith.constant 0 : index
    %16 = vector.load %arg7[%c0_33, %c0_34] : memref<1x32xf32, #tpu.memory_space<vmem>>, vector<1x32xf32>
    %c0_35 = arith.constant 0 : index
    %c0_36 = arith.constant 0 : index
    %17 = vector.load %arg9[%c0_35, %c0_36] : memref<1x64xf32, #tpu.memory_space<vmem>>, vector<1x64xf32>
    %c0_37 = arith.constant 0 : index
    %c0_38 = arith.constant 0 : index
    %18 = vector.load %arg4[%c0_37, %c0_38] : memref<16x32xf32, #tpu.memory_space<vmem>>, vector<16x32xf32>
    %c0_39 = arith.constant 0 : index
    %c0_40 = arith.constant 0 : index
    %19 = vector.load %arg8[%c0_39, %c0_40] : memref<32x64xf32, #tpu.memory_space<vmem>>, vector<32x64xf32>
    %c0_41 = arith.constant 0 : index
    %c0_42 = arith.constant 0 : index
    %c0_43 = arith.constant 0 : index
    %c0_44 = arith.constant 0 : index
    %20 = vector.load %arg1[%c0_41, %c0_42, %c0_43, %c0_44] : memref<1x16x16x16xf32, #tpu.memory_space<vmem>>, vector<1x16x16x16xf32>
    %21 = vector.shape_cast %20 : vector<1x16x16x16xf32> to vector<16x16x16xf32>
    %c1 = arith.constant 1 : index
    %c1_45 = arith.constant 1 : index
    %c0_46 = arith.constant 0 : index
    %22 = vector.load %arg11[%c1, %c1_45, %c0_46] : memref<18x18x16xf32, #tpu.memory_space<vmem>>, vector<16x16x16xf32>
    tpu.vector_store %arg11[%c1, %c1_45, %c0_46], %21 {strides = array<i32>} : memref<18x18x16xf32, #tpu.memory_space<vmem>>, vector<16x16x16xf32>,
    %cst_47 = arith.constant 0.000000e+00 : f32
    %23 = vector.broadcast %cst_47 : f32 to vector<16x16x16xf32>
    %c0_48 = arith.constant 0 : index
    %c0_49 = arith.constant 0 : index
    %c0_50 = arith.constant 0 : index
    %24 = vector.load %arg11[%c0_48, %c0_49, %c0_50] : memref<18x18x16xf32, #tpu.memory_space<vmem>>, vector<16x16x16xf32>
    %25 = vector.extract_strided_slice %12 {offsets = [0, 0], sizes = [1, 16], strides = [1, 1]} : vector<9x16xf32> to vector<1x16xf32>
    %26 = vector.shape_cast %25 : vector<1x16xf32> to vector<16xf32>
    %27 = vector.shape_cast %26 : vector<16xf32> to vector<1x1x16xf32>
    %28 = vector.broadcast %27 : vector<1x1x16xf32> to vector<16x16x16xf32>
    %29 = arith.mulf %24, %28 : vector<16x16x16xf32>
    %30 = arith.addf %23, %29 : vector<16x16x16xf32>
    %c0_51 = arith.constant 0 : index
    %c1_52 = arith.constant 1 : index
    %c0_53 = arith.constant 0 : index
    %31 = vector.load %arg11[%c0_51, %c1_52, %c0_53] : memref<18x18x16xf32, #tpu.memory_space<vmem>>, vector<16x16x16xf32>
    %32 = vector.extract_strided_slice %12 {offsets = [1, 0], sizes = [1, 16], strides = [1, 1]} : vector<9x16xf32> to vector<1x16xf32>
    %33 = vector.shape_cast %32 : vector<1x16xf32> to vector<16xf32>
    %34 = vector.shape_cast %33 : vector<16xf32> to vector<1x1x16xf32>
    %35 = vector.broadcast %34 : vector<1x1x16xf32> to vector<16x16x16xf32>
    %36 = arith.mulf %31, %35 : vector<16x16x16xf32>
    %37 = arith.addf %30, %36 : vector<16x16x16xf32>
    %c0_54 = arith.constant 0 : index
    %c2 = arith.constant 2 : index
    %c0_55 = arith.constant 0 : index
    %38 = vector.load %arg11[%c0_54, %c2, %c0_55] : memref<18x18x16xf32, #tpu.memory_space<vmem>>, vector<16x16x16xf32>
    %39 = vector.extract_strided_slice %12 {offsets = [2, 0], sizes = [1, 16], strides = [1, 1]} : vector<9x16xf32> to vector<1x16xf32>
    %40 = vector.shape_cast %39 : vector<1x16xf32> to vector<16xf32>
    %41 = vector.shape_cast %40 : vector<16xf32> to vector<1x1x16xf32>
    %42 = vector.broadcast %41 : vector<1x1x16xf32> to vector<16x16x16xf32>
    %43 = arith.mulf %38, %42 : vector<16x16x16xf32>
    %44 = arith.addf %37, %43 : vector<16x16x16xf32>
    %c1_56 = arith.constant 1 : index
    %c0_57 = arith.constant 0 : index
    %c0_58 = arith.constant 0 : index
    %45 = vector.load %arg11[%c1_56, %c0_57, %c0_58] : memref<18x18x16xf32, #tpu.memory_space<vmem>>, vector<16x16x16xf32>
    %46 = vector.extract_strided_slice %12 {offsets = [3, 0], sizes = [1, 16], strides = [1, 1]} : vector<9x16xf32> to vector<1x16xf32>
    %47 = vector.shape_cast %46 : vector<1x16xf32> to vector<16xf32>
    %48 = vector.shape_cast %47 : vector<16xf32> to vector<1x1x16xf32>
    %49 = vector.broadcast %48 : vector<1x1x16xf32> to vector<16x16x16xf32>
    %50 = arith.mulf %45, %49 : vector<16x16x16xf32>
    %51 = arith.addf %44, %50 : vector<16x16x16xf32>
    %c1_59 = arith.constant 1 : index
    %c1_60 = arith.constant 1 : index
    %c0_61 = arith.constant 0 : index
    %52 = vector.load %arg11[%c1_59, %c1_60, %c0_61] : memref<18x18x16xf32, #tpu.memory_space<vmem>>, vector<16x16x16xf32>
    %53 = vector.extract_strided_slice %12 {offsets = [4, 0], sizes = [1, 16], strides = [1, 1]} : vector<9x16xf32> to vector<1x16xf32>
    %54 = vector.shape_cast %53 : vector<1x16xf32> to vector<16xf32>
    %55 = vector.shape_cast %54 : vector<16xf32> to vector<1x1x16xf32>
    %56 = vector.broadcast %55 : vector<1x1x16xf32> to vector<16x16x16xf32>
    %57 = arith.mulf %52, %56 : vector<16x16x16xf32>
    %58 = arith.addf %51, %57 : vector<16x16x16xf32>
    %c1_62 = arith.constant 1 : index
    %c2_63 = arith.constant 2 : index
    %c0_64 = arith.constant 0 : index
    %59 = vector.load %arg11[%c1_62, %c2_63, %c0_64] : memref<18x18x16xf32, #tpu.memory_space<vmem>>, vector<16x16x16xf32>
    %60 = vector.extract_strided_slice %12 {offsets = [5, 0], sizes = [1, 16], strides = [1, 1]} : vector<9x16xf32> to vector<1x16xf32>
    %61 = vector.shape_cast %60 : vector<1x16xf32> to vector<16xf32>
    %62 = vector.shape_cast %61 : vector<16xf32> to vector<1x1x16xf32>
    %63 = vector.broadcast %62 : vector<1x1x16xf32> to vector<16x16x16xf32>
    %64 = arith.mulf %59, %63 : vector<16x16x16xf32>
    %65 = arith.addf %58, %64 : vector<16x16x16xf32>
    %c2_65 = arith.constant 2 : index
    %c0_66 = arith.constant 0 : index
    %c0_67 = arith.constant 0 : index
    %66 = vector.load %arg11[%c2_65, %c0_66, %c0_67] : memref<18x18x16xf32, #tpu.memory_space<vmem>>, vector<16x16x16xf32>
    %67 = vector.extract_strided_slice %12 {offsets = [6, 0], sizes = [1, 16], strides = [1, 1]} : vector<9x16xf32> to vector<1x16xf32>
    %68 = vector.shape_cast %67 : vector<1x16xf32> to vector<16xf32>
    %69 = vector.shape_cast %68 : vector<16xf32> to vector<1x1x16xf32>
    %70 = vector.broadcast %69 : vector<1x1x16xf32> to vector<16x16x16xf32>
    %71 = arith.mulf %66, %70 : vector<16x16x16xf32>
    %72 = arith.addf %65, %71 : vector<16x16x16xf32>
    %c2_68 = arith.constant 2 : index
    %c1_69 = arith.constant 1 : index
    %c0_70 = arith.constant 0 : index
    %73 = vector.load %arg11[%c2_68, %c1_69, %c0_70] : memref<18x18x16xf32, #tpu.memory_space<vmem>>, vector<16x16x16xf32>
    %74 = vector.extract_strided_slice %12 {offsets = [7, 0], sizes = [1, 16], strides = [1, 1]} : vector<9x16xf32> to vector<1x16xf32>
    %75 = vector.shape_cast %74 : vector<1x16xf32> to vector<16xf32>
    %76 = vector.shape_cast %75 : vector<16xf32> to vector<1x1x16xf32>
    %77 = vector.broadcast %76 : vector<1x1x16xf32> to vector<16x16x16xf32>
    %78 = arith.mulf %73, %77 : vector<16x16x16xf32>
    %79 = arith.addf %72, %78 : vector<16x16x16xf32>
    %c2_71 = arith.constant 2 : index
    %c2_72 = arith.constant 2 : index
    %c0_73 = arith.constant 0 : index
    %80 = vector.load %arg11[%c2_71, %c2_72, %c0_73] : memref<18x18x16xf32, #tpu.memory_space<vmem>>, vector<16x16x16xf32>
    %81 = vector.extract_strided_slice %12 {offsets = [8, 0], sizes = [1, 16], strides = [1, 1]} : vector<9x16xf32> to vector<1x16xf32>
    %82 = vector.shape_cast %81 : vector<1x16xf32> to vector<16xf32>
    %83 = vector.shape_cast %82 : vector<16xf32> to vector<1x1x16xf32>
    %84 = vector.broadcast %83 : vector<1x1x16xf32> to vector<16x16x16xf32>
    %85 = arith.mulf %80, %84 : vector<16x16x16xf32>
    %86 = arith.addf %79, %85 : vector<16x16x16xf32>
    %87 = vector.shape_cast %14 : vector<1x16xf32> to vector<1x1x16xf32>
    %88 = vector.broadcast %87 : vector<1x1x16xf32> to vector<16x16x16xf32>
    %89 = arith.addf %86, %88 : vector<16x16x16xf32>
    %cst_74 = arith.constant 0.000000e+00 : f32
    %90 = vector.broadcast %cst_74 : f32 to vector<16x16x16xf32>
    %91 = arith.maximumf %89, %90 : vector<16x16x16xf32>
    %92 = vector.shape_cast %91 : vector<16x16x16xf32> to vector<256x16xf32>
    %cst_75 = arith.constant dense<0.000000e+00> : vector<256x32xf32>
    %93 = tpu.matmul %92, %18, %cst_75 {dimension_numbers = #tpu.dot_dimension_numbers<[1], [0], [0], [1], [0, 0, 1, 1], [], []>} : vector<256x16xf32>, vector<16x32xf32>, vector<256x32xf32> -> vector<256x32xf32>
    %94 = vector.broadcast %15 : vector<1x32xf32> to vector<256x32xf32>
    %95 = arith.addf %93, %94 : vector<256x32xf32>
    %cst_76 = arith.constant 0.000000e+00 : f32
    %96 = vector.broadcast %cst_76 : f32 to vector<256x32xf32>
    %97 = arith.maximumf %95, %96 : vector<256x32xf32>
    %98 = vector.shape_cast %97 : vector<256x32xf32> to vector<16x16x32xf32>
    %c1_77 = arith.constant 1 : index
    %c1_78 = arith.constant 1 : index
    %c0_79 = arith.constant 0 : index
    %99 = vector.load %arg12[%c1_77, %c1_78, %c0_79] : memref<18x18x32xf32, #tpu.memory_space<vmem>>, vector<16x16x32xf32>
    tpu.vector_store %arg12[%c1_77, %c1_78, %c0_79], %98 {strides = array<i32>} : memref<18x18x32xf32, #tpu.memory_space<vmem>>, vector<16x16x32xf32>,
    %cst_80 = arith.constant 0.000000e+00 : f32
    %100 = vector.broadcast %cst_80 : f32 to vector<8x8x32xf32>
    %c0_81 = arith.constant 0 : index
    %c0_82 = arith.constant 0 : index
    %c0_83 = arith.constant 0 : index
    %101 = tpu.strided_load %arg12[%c0_81, %c0_82, %c0_83] {strides = array<i32: 2, 2, 1>} : memref<18x18x32xf32, #tpu.memory_space<vmem>>, vector<9x9x32xf32>
    %c0_84 = arith.constant 0 : index
    %c1_85 = arith.constant 1 : index
    %c0_86 = arith.constant 0 : index
    %102 = tpu.strided_load %arg12[%c0_84, %c1_85, %c0_86] {strides = array<i32: 2, 2, 1>} : memref<18x18x32xf32, #tpu.memory_space<vmem>>, vector<9x8x32xf32>
    %c1_87 = arith.constant 1 : index
    %c0_88 = arith.constant 0 : index
    %c0_89 = arith.constant 0 : index
    %103 = tpu.strided_load %arg12[%c1_87, %c0_88, %c0_89] {strides = array<i32: 2, 2, 1>} : memref<18x18x32xf32, #tpu.memory_space<vmem>>, vector<8x9x32xf32>
    %c1_90 = arith.constant 1 : index
    %c1_91 = arith.constant 1 : index
    %c0_92 = arith.constant 0 : index
    %104 = tpu.strided_load %arg12[%c1_90, %c1_91, %c0_92] {strides = array<i32: 2, 2, 1>} : memref<18x18x32xf32, #tpu.memory_space<vmem>>, vector<8x8x32xf32>
    %105 = vector.extract_strided_slice %101 {offsets = [0, 0, 0], sizes = [8, 8, 32], strides = [1, 1, 1]} : vector<9x9x32xf32> to vector<8x8x32xf32>
    %106 = vector.extract_strided_slice %13 {offsets = [0, 0], sizes = [1, 32], strides = [1, 1]} : vector<9x32xf32> to vector<1x32xf32>
    %107 = vector.shape_cast %106 : vector<1x32xf32> to vector<32xf32>
    %108 = vector.shape_cast %107 : vector<32xf32> to vector<1x1x32xf32>
    %109 = vector.broadcast %108 : vector<1x1x32xf32> to vector<8x8x32xf32>
    %110 = arith.mulf %105, %109 : vector<8x8x32xf32>
    %111 = arith.addf %100, %110 : vector<8x8x32xf32>
    %112 = vector.extract_strided_slice %102 {offsets = [0, 0, 0], sizes = [8, 8, 32], strides = [1, 1, 1]} : vector<9x8x32xf32> to vector<8x8x32xf32>
    %113 = vector.extract_strided_slice %13 {offsets = [1, 0], sizes = [1, 32], strides = [1, 1]} : vector<9x32xf32> to vector<1x32xf32>
    %114 = vector.shape_cast %113 : vector<1x32xf32> to vector<32xf32>
    %115 = vector.shape_cast %114 : vector<32xf32> to vector<1x1x32xf32>
    %116 = vector.broadcast %115 : vector<1x1x32xf32> to vector<8x8x32xf32>
    %117 = arith.mulf %112, %116 : vector<8x8x32xf32>
    %118 = arith.addf %111, %117 : vector<8x8x32xf32>
    %119 = vector.extract_strided_slice %101 {offsets = [0, 1, 0], sizes = [8, 8, 32], strides = [1, 1, 1]} : vector<9x9x32xf32> to vector<8x8x32xf32>
    %120 = vector.extract_strided_slice %13 {offsets = [2, 0], sizes = [1, 32], strides = [1, 1]} : vector<9x32xf32> to vector<1x32xf32>
    %121 = vector.shape_cast %120 : vector<1x32xf32> to vector<32xf32>
    %122 = vector.shape_cast %121 : vector<32xf32> to vector<1x1x32xf32>
    %123 = vector.broadcast %122 : vector<1x1x32xf32> to vector<8x8x32xf32>
    %124 = arith.mulf %119, %123 : vector<8x8x32xf32>
    %125 = arith.addf %118, %124 : vector<8x8x32xf32>
    %126 = vector.extract_strided_slice %103 {offsets = [0, 0, 0], sizes = [8, 8, 32], strides = [1, 1, 1]} : vector<8x9x32xf32> to vector<8x8x32xf32>
    %127 = vector.extract_strided_slice %13 {offsets = [3, 0], sizes = [1, 32], strides = [1, 1]} : vector<9x32xf32> to vector<1x32xf32>
    %128 = vector.shape_cast %127 : vector<1x32xf32> to vector<32xf32>
    %129 = vector.shape_cast %128 : vector<32xf32> to vector<1x1x32xf32>
    %130 = vector.broadcast %129 : vector<1x1x32xf32> to vector<8x8x32xf32>
    %131 = arith.mulf %126, %130 : vector<8x8x32xf32>
    %132 = arith.addf %125, %131 : vector<8x8x32xf32>
    %133 = vector.extract_strided_slice %13 {offsets = [4, 0], sizes = [1, 32], strides = [1, 1]} : vector<9x32xf32> to vector<1x32xf32>
    %134 = vector.shape_cast %133 : vector<1x32xf32> to vector<32xf32>
    %135 = vector.shape_cast %134 : vector<32xf32> to vector<1x1x32xf32>
    %136 = vector.broadcast %135 : vector<1x1x32xf32> to vector<8x8x32xf32>
    %137 = arith.mulf %104, %136 : vector<8x8x32xf32>
    %138 = arith.addf %132, %137 : vector<8x8x32xf32>
    %139 = vector.extract_strided_slice %103 {offsets = [0, 1, 0], sizes = [8, 8, 32], strides = [1, 1, 1]} : vector<8x9x32xf32> to vector<8x8x32xf32>
    %140 = vector.extract_strided_slice %13 {offsets = [5, 0], sizes = [1, 32], strides = [1, 1]} : vector<9x32xf32> to vector<1x32xf32>
    %141 = vector.shape_cast %140 : vector<1x32xf32> to vector<32xf32>
    %142 = vector.shape_cast %141 : vector<32xf32> to vector<1x1x32xf32>
    %143 = vector.broadcast %142 : vector<1x1x32xf32> to vector<8x8x32xf32>
    %144 = arith.mulf %139, %143 : vector<8x8x32xf32>
    %145 = arith.addf %138, %144 : vector<8x8x32xf32>
    %146 = vector.extract_strided_slice %101 {offsets = [1, 0, 0], sizes = [8, 8, 32], strides = [1, 1, 1]} : vector<9x9x32xf32> to vector<8x8x32xf32>
    %147 = vector.extract_strided_slice %13 {offsets = [6, 0], sizes = [1, 32], strides = [1, 1]} : vector<9x32xf32> to vector<1x32xf32>
    %148 = vector.shape_cast %147 : vector<1x32xf32> to vector<32xf32>
    %149 = vector.shape_cast %148 : vector<32xf32> to vector<1x1x32xf32>
    %150 = vector.broadcast %149 : vector<1x1x32xf32> to vector<8x8x32xf32>
    %151 = arith.mulf %146, %150 : vector<8x8x32xf32>
    %152 = arith.addf %145, %151 : vector<8x8x32xf32>
    %153 = vector.extract_strided_slice %102 {offsets = [1, 0, 0], sizes = [8, 8, 32], strides = [1, 1, 1]} : vector<9x8x32xf32> to vector<8x8x32xf32>
    %154 = vector.extract_strided_slice %13 {offsets = [7, 0], sizes = [1, 32], strides = [1, 1]} : vector<9x32xf32> to vector<1x32xf32>
    %155 = vector.shape_cast %154 : vector<1x32xf32> to vector<32xf32>
    %156 = vector.shape_cast %155 : vector<32xf32> to vector<1x1x32xf32>
    %157 = vector.broadcast %156 : vector<1x1x32xf32> to vector<8x8x32xf32>
    %158 = arith.mulf %153, %157 : vector<8x8x32xf32>
    %159 = arith.addf %152, %158 : vector<8x8x32xf32>
    %160 = vector.extract_strided_slice %101 {offsets = [1, 1, 0], sizes = [8, 8, 32], strides = [1, 1, 1]} : vector<9x9x32xf32> to vector<8x8x32xf32>
    %161 = vector.extract_strided_slice %13 {offsets = [8, 0], sizes = [1, 32], strides = [1, 1]} : vector<9x32xf32> to vector<1x32xf32>
    %162 = vector.shape_cast %161 : vector<1x32xf32> to vector<32xf32>
    %163 = vector.shape_cast %162 : vector<32xf32> to vector<1x1x32xf32>
    %164 = vector.broadcast %163 : vector<1x1x32xf32> to vector<8x8x32xf32>
    %165 = arith.mulf %160, %164 : vector<8x8x32xf32>
    %166 = arith.addf %159, %165 : vector<8x8x32xf32>
    %167 = vector.shape_cast %16 : vector<1x32xf32> to vector<1x1x32xf32>
    %168 = vector.broadcast %167 : vector<1x1x32xf32> to vector<8x8x32xf32>
    %169 = arith.addf %166, %168 : vector<8x8x32xf32>
    %cst_93 = arith.constant 0.000000e+00 : f32
    %170 = vector.broadcast %cst_93 : f32 to vector<8x8x32xf32>
    %171 = arith.maximumf %169, %170 : vector<8x8x32xf32>
    %172 = vector.shape_cast %171 : vector<8x8x32xf32> to vector<64x32xf32>
    %cst_94 = arith.constant dense<0.000000e+00> : vector<64x64xf32>
    %173 = tpu.matmul %172, %19, %cst_94 {dimension_numbers = #tpu.dot_dimension_numbers<[1], [0], [0], [1], [0, 0, 1, 1], [], []>} : vector<64x32xf32>, vector<32x64xf32>, vector<64x64xf32> -> vector<64x64xf32>
    %174 = vector.broadcast %17 : vector<1x64xf32> to vector<64x64xf32>
    %175 = arith.addf %173, %174 : vector<64x64xf32>
    %cst_95 = arith.constant 0.000000e+00 : f32
    %176 = vector.broadcast %cst_95 : f32 to vector<64x64xf32>
    %177 = arith.maximumf %175, %176 : vector<64x64xf32>
    %c0_96 = arith.constant 0 : index
    %c0_97 = arith.constant 0 : index
    %c0_98 = arith.constant 0 : index
    %178 = vector.load %arg10[%c0_96, %c0_97, %c0_98] : memref<1x64x64xf32, #tpu.memory_space<vmem>>, vector<1x64x64xf32>
    %179 = vector.shape_cast %178 : vector<1x64x64xf32> to vector<64x64xf32>
    %180 = vector.shape_cast %177 : vector<64x64xf32> to vector<1x64x64xf32>
    tpu.vector_store %arg10[%c0_96, %c0_97, %c0_98], %180 {strides = array<i32>} : memref<1x64x64xf32, #tpu.memory_space<vmem>>, vector<1x64x64xf32>,
    return
  }
  func.func @transform_0(%arg0: i32) -> (i32, i32, i32, i32) {
    %c0_i32 = arith.constant 0 : i32
    %c0_i32_0 = arith.constant 0 : i32
    %c0_i32_1 = arith.constant 0 : i32
    %c0_i32_2 = arith.constant 0 : i32
    return %arg0, %c0_i32, %c0_i32_0, %c0_i32_1 : i32, i32, i32, i32
  }
  func.func @transform_1(%arg0: i32) -> (i32, i32) {
    %c0_i32 = arith.constant 0 : i32
    %c0_i32_0 = arith.constant 0 : i32
    %c0_i32_1 = arith.constant 0 : i32
    return %c0_i32, %c0_i32_0 : i32, i32
  }
  func.func @transform_2(%arg0: i32) -> (i32, i32) {
    %c0_i32 = arith.constant 0 : i32
    %c0_i32_0 = arith.constant 0 : i32
    %c0_i32_1 = arith.constant 0 : i32
    return %c0_i32, %c0_i32_0 : i32, i32
  }
  func.func @transform_3(%arg0: i32) -> (i32, i32) {
    %c0_i32 = arith.constant 0 : i32
    %c0_i32_0 = arith.constant 0 : i32
    %c0_i32_1 = arith.constant 0 : i32
    return %c0_i32, %c0_i32_0 : i32, i32
  }
  func.func @transform_4(%arg0: i32) -> (i32, i32) {
    %c0_i32 = arith.constant 0 : i32
    %c0_i32_0 = arith.constant 0 : i32
    %c0_i32_1 = arith.constant 0 : i32
    return %c0_i32, %c0_i32_0 : i32, i32
  }
  func.func @transform_5(%arg0: i32) -> (i32, i32) {
    %c0_i32 = arith.constant 0 : i32
    %c0_i32_0 = arith.constant 0 : i32
    %c0_i32_1 = arith.constant 0 : i32
    return %c0_i32, %c0_i32_0 : i32, i32
  }
  func.func @transform_6(%arg0: i32) -> (i32, i32) {
    %c0_i32 = arith.constant 0 : i32
    %c0_i32_0 = arith.constant 0 : i32
    %c0_i32_1 = arith.constant 0 : i32
    return %c0_i32, %c0_i32_0 : i32, i32
  }
  func.func @transform_7(%arg0: i32) -> (i32, i32) {
    %c0_i32 = arith.constant 0 : i32
    %c0_i32_0 = arith.constant 0 : i32
    %c0_i32_1 = arith.constant 0 : i32
    return %c0_i32, %c0_i32_0 : i32, i32
  }
  func.func @transform_8(%arg0: i32) -> (i32, i32) {
    %c0_i32 = arith.constant 0 : i32
    %c0_i32_0 = arith.constant 0 : i32
    %c0_i32_1 = arith.constant 0 : i32
    return %c0_i32, %c0_i32_0 : i32, i32
  }
  func.func @transform_9(%arg0: i32) -> (i32, i32, i32) {
    %c0_i32 = arith.constant 0 : i32
    %c0_i32_0 = arith.constant 0 : i32
    %c0_i32_1 = arith.constant 0 : i32
    return %arg0, %c0_i32, %c0_i32_0 : i32, i32, i32
  }
}

</mosaic_0001>

<llo_original>
// kernel: forward_bb1.1
$region0: #{forward_bb1.1}
  #allocation0 [shape = 'u32[]', space=smem, size = 0x4, offset = 0x4, fixed_abs, tag = 'smem constant byte address 0x4 - core index']
  #allocation1 [shape = 'u32[144,128]{1,0:T(1,128)}', space=vmem, size = 0x12000, scoped, tag = 'internal scratch']
  #allocation2 [shape = 'f32[18,18,16]{2,1,0:T(8,128)}', space=vmem, size = 0x36000, scoped, tag = 'scratch operand']
  #allocation3 [shape = 'f32[18,18,32]{2,1,0:T(8,128)}', space=vmem, size = 0x36000, scoped, tag = 'scratch operand']
  %s0 = inlined_call_operand.vmem [shape: f32[2,16,16,16], index: 0, kind: input, shape index: {}]
  %s1 = inlined_call_operand.vmem [shape: f32[9,16], index: 1, kind: input, shape index: {}]
  %s2 = inlined_call_operand.vmem [shape: f32[1,16], index: 2, kind: input, shape index: {}]
  %s3 = inlined_call_operand.vmem [shape: f32[16,32], index: 3, kind: input, shape index: {}]
  %s4 = inlined_call_operand.vmem [shape: f32[1,32], index: 4, kind: input, shape index: {}]
  %s5 = inlined_call_operand.vmem [shape: f32[9,32], index: 5, kind: input, shape index: {}]
  %s6 = inlined_call_operand.vmem [shape: f32[1,32], index: 6, kind: input, shape index: {}]
  %s7 = inlined_call_operand.vmem [shape: f32[32,64], index: 7, kind: input, shape index: {}]
  %s8 = inlined_call_operand.vmem [shape: f32[1,64], index: 8, kind: input, shape index: {}]
  %s9 = inlined_call_operand.hbm [shape: f32[2,64,64], index: 9, kind: output, shape index: {}]
  %s10 = sld [smem:[#allocation0]]
  $region69: #{forward_bb1.1} parent=0
    _
  %s12 = ssub.s32 1, %s10
  %s13 = scalar_select 0, %s12, %s10
  $region1: #{forward_bb1.1} parent=0
    #allocation4 [shape = 'u8[65536]{0}', space=vmem, size = 0x10000, scoped, tag = 'output window, operand 0']
    #allocation5 [shape = 's32[2]{0}', space=sflag, size = 0x8, scoped, tag = 'scoped memory for forward_bb1.1']
    %14 = vsyncpa [#allocation5], 0
    %s15 = scalar_lea.sflag [#allocation5], 1
    %16 = vsyncpa %s15, 0
    loop: start=0, step=1, limit=4
    $region2: #{forward_bb1.1} parent=1 // loop_pre_header
      _
    $region3: #{forward_bb1.1} parent=1 // loop_header
      %s18 = sphi 0, %s22
      %p19 = scmp.ge.s32.totalorder %s18, 4
      %s28 = sphi 0, %s30
      %s31 = sphi 0, %s28
      %s32 = sphi 0, %s31
      %s48 = sphi 0, %s32
      %s52 = sphi 0, %s52
      %s54 = sphi 0, %s52
      %s55 = sphi 0, %s54
      %s69 = sphi 0, %s55
      %s73 = sphi 0, %s73
      %s75 = sphi 0, %s73
      %s76 = sphi 0, %s75
      %s90 = sphi 0, %s76
      %s94 = sphi 0, %s94
      %s96 = sphi 0, %s94
      %s97 = sphi 0, %s96
      %s111 = sphi 0, %s97
      %s115 = sphi 0, %s115
      %s117 = sphi 0, %s115
      %s118 = sphi 0, %s117
      %s132 = sphi 0, %s118
      %s136 = sphi 0, %s136
      %s138 = sphi 0, %s136
      %s139 = sphi 0, %s138
      %s153 = sphi 0, %s139
      %s157 = sphi 0, %s157
      %s159 = sphi 0, %s157
      %s160 = sphi 0, %s159
      %s174 = sphi 0, %s160
      %s178 = sphi 0, %s178
      %s180 = sphi 0, %s178
      %s181 = sphi 0, %s180
      %s195 = sphi 0, %s181
      %s199 = sphi 0, %s199
      %s201 = sphi 0, %s199
      %s202 = sphi 0, %s201
      %s216 = sphi 0, %s202
      %s222 = sphi 0, %s224
      %s225 = sphi 0, %s222
      %s226 = sphi 0, %s225
      %s242 = sphi 0, %s226
    $region4: #{forward_bb1.1} parent=1 // loop_header_branch
      %21 = sbr.rel (%p19) target = $region8
    $region5: #{forward_bb1.1} parent=1 // loop_body
      %s23 = ssub.s32 %s18, 1
      %s24 = ssub.s32 %s18, 2
      %s25 = sadd.s32 %s18, 1
      %s26 = ssub.s32 %s18, %s25
      %p27 = scmp.eq.s32.totalorder %s26, 0
      %s29 = sadd.s32 %s28, 1
      %s30 = scalar_select %p27, %s28, %s29
      %p33 = pneg %p27
      %p34 = scmp.eq.s32.totalorder %s18, 1
      %p35 = por %p33, %p34
      %p36 = scmp.ne.s32.totalorder %s28, %s31
      %p37 = scmp.eq.s32.totalorder %s18, 0
      %p38 = por %p36, %p37
      %p39 = scmp.ne.s32.totalorder %s28, %s31
      %p40 = scmp.eq.s32.totalorder %s23, 1
      %p41 = por %p39, %p40
      %p42 = scmp.ne.s32.totalorder %s31, %s32
      %p43 = scmp.eq.s32.totalorder %s23, 0
      %p44 = por %p42, %p43
      %p45 = scmp.ne.s32.totalorder %s31, %s32
      %p46 = scmp.eq.s32.totalorder %s24, 1
      %p47 = por %p45, %p46
      %p49 = scmp.ne.s32.totalorder %s32, %s48
      %p50 = scmp.eq.s32.totalorder %s24, 0
      %p51 = por %p49, %p50
      %s53 = sadd.s32 %s52, 1
      %p56 = scmp.eq.s32.totalorder %s18, 1
      %p57 = scmp.ne.s32.totalorder %s52, %s54
      %p58 = scmp.eq.s32.totalorder %s18, 0
      %p59 = por %p57, %p58
      %p60 = scmp.ne.s32.totalorder %s52, %s54
      %p61 = scmp.eq.s32.totalorder %s23, 1
      %p62 = por %p60, %p61
      %p63 = scmp.ne.s32.totalorder %s54, %s55
      %p64 = scmp.eq.s32.totalorder %s23, 0
      %p65 = por %p63, %p64
      %p66 = scmp.ne.s32.totalorder %s54, %s55
      %p67 = scmp.eq.s32.totalorder %s24, 1
      %p68 = por %p66, %p67
      %p70 = scmp.ne.s32.totalorder %s55, %s69
      %p71 = scmp.eq.s32.totalorder %s24, 0
      %p72 = por %p70, %p71
      %s74 = sadd.s32 %s73, 1
      %p77 = scmp.eq.s32.totalorder %s18, 1
      %p78 = scmp.ne.s32.totalorder %s73, %s75
      %p79 = scmp.eq.s32.totalorder %s18, 0
      %p80 = por %p78, %p79
      %p81 = scmp.ne.s32.totalorder %s73, %s75
      %p82 = scmp.eq.s32.totalorder %s23, 1
      %p83 = por %p81, %p82
      %p84 = scmp.ne.s32.totalorder %s75, %s76
      %p85 = scmp.eq.s32.totalorder %s23, 0
      %p86 = por %p84, %p85
      %p87 = scmp.ne.s32.totalorder %s75, %s76
      %p88 = scmp.eq.s32.totalorder %s24, 1
      %p89 = por %p87, %p88
      %p91 = scmp.ne.s32.totalorder %s76, %s90
      %p92 = scmp.eq.s32.totalorder %s24, 0
      %p93 = por %p91, %p92
      %s95 = sadd.s32 %s94, 1
      %p98 = scmp.eq.s32.totalorder %s18, 1
      %p99 = scmp.ne.s32.totalorder %s94, %s96
      %p100 = scmp.eq.s32.totalorder %s18, 0
      %p101 = por %p99, %p100
      %p102 = scmp.ne.s32.totalorder %s94, %s96
      %p103 = scmp.eq.s32.totalorder %s23, 1
      %p104 = por %p102, %p103
      %p105 = scmp.ne.s32.totalorder %s96, %s97
      %p106 = scmp.eq.s32.totalorder %s23, 0
      %p107 = por %p105, %p106
      %p108 = scmp.ne.s32.totalorder %s96, %s97
      %p109 = scmp.eq.s32.totalorder %s24, 1
      %p110 = por %p108, %p109
      %p112 = scmp.ne.s32.totalorder %s97, %s111
      %p113 = scmp.eq.s32.totalorder %s24, 0
      %p114 = por %p112, %p113
      %s116 = sadd.s32 %s115, 1
      %p119 = scmp.eq.s32.totalorder %s18, 1
      %p120 = scmp.ne.s32.totalorder %s115, %s117
      %p121 = scmp.eq.s32.totalorder %s18, 0
      %p122 = por %p120, %p121
      %p123 = scmp.ne.s32.totalorder %s115, %s117
      %p124 = scmp.eq.s32.totalorder %s23, 1
      %p125 = por %p123, %p124
      %p126 = scmp.ne.s32.totalorder %s117, %s118
      %p127 = scmp.eq.s32.totalorder %s23, 0
      %p128 = por %p126, %p127
      %p129 = scmp.ne.s32.totalorder %s117, %s118
      %p130 = scmp.eq.s32.totalorder %s24, 1
      %p131 = por %p129, %p130
      %p133 = scmp.ne.s32.totalorder %s118, %s132
      %p134 = scmp.eq.s32.totalorder %s24, 0
      %p135 = por %p133, %p134
      %s137 = sadd.s32 %s136, 1
      %p140 = scmp.eq.s32.totalorder %s18, 1
      %p141 = scmp.ne.s32.totalorder %s136, %s138
      %p142 = scmp.eq.s32.totalorder %s18, 0
      %p143 = por %p141, %p142
      %p144 = scmp.ne.s32.totalorder %s136, %s138
      %p145 = scmp.eq.s32.totalorder %s23, 1
      %p146 = por %p144, %p145
      %p147 = scmp.ne.s32.totalorder %s138, %s139
      %p148 = scmp.eq.s32.totalorder %s23, 0
      %p149 = por %p147, %p148
      %p150 = scmp.ne.s32.totalorder %s138, %s139
      %p151 = scmp.eq.s32.totalorder %s24, 1
      %p152 = por %p150, %p151
      %p154 = scmp.ne.s32.totalorder %s139, %s153
      %p155 = scmp.eq.s32.totalorder %s24, 0
      %p156 = por %p154, %p155
      %s158 = sadd.s32 %s157, 1
      %p161 = scmp.eq.s32.totalorder %s18, 1
      %p162 = scmp.ne.s32.totalorder %s157, %s159
      %p163 = scmp.eq.s32.totalorder %s18, 0
      %p164 = por %p162, %p163
      %p165 = scmp.ne.s32.totalorder %s157, %s159
      %p166 = scmp.eq.s32.totalorder %s23, 1
      %p167 = por %p165, %p166
      %p168 = scmp.ne.s32.totalorder %s159, %s160
      %p169 = scmp.eq.s32.totalorder %s23, 0
      %p170 = por %p168, %p169
      %p171 = scmp.ne.s32.totalorder %s159, %s160
      %p172 = scmp.eq.s32.totalorder %s24, 1
      %p173 = por %p171, %p172
      %p175 = scmp.ne.s32.totalorder %s160, %s174
      %p176 = scmp.eq.s32.totalorder %s24, 0
      %p177 = por %p175, %p176
      %s179 = sadd.s32 %s178, 1
      %p182 = scmp.eq.s32.totalorder %s18, 1
      %p183 = scmp.ne.s32.totalorder %s178, %s180
      %p184 = scmp.eq.s32.totalorder %s18, 0
      %p185 = por %p183, %p184
      %p186 = scmp.ne.s32.totalorder %s178, %s180
      %p187 = scmp.eq.s32.totalorder %s23, 1
      %p188 = por %p186, %p187
      %p189 = scmp.ne.s32.totalorder %s180, %s181
      %p190 = scmp.eq.s32.totalorder %s23, 0
      %p191 = por %p189, %p190
      %p192 = scmp.ne.s32.totalorder %s180, %s181
      %p193 = scmp.eq.s32.totalorder %s24, 1
      %p194 = por %p192, %p193
      %p196 = scmp.ne.s32.totalorder %s181, %s195
      %p197 = scmp.eq.s32.totalorder %s24, 0
      %p198 = por %p196, %p197
      %s200 = sadd.s32 %s199, 1
      %p203 = scmp.eq.s32.totalorder %s18, 1
      %p204 = scmp.ne.s32.totalorder %s199, %s201
      %p205 = scmp.eq.s32.totalorder %s18, 0
      %p206 = por %p204, %p205
      %p207 = scmp.ne.s32.totalorder %s199, %s201
      %p208 = scmp.eq.s32.totalorder %s23, 1
      %p209 = por %p207, %p208
      %p210 = scmp.ne.s32.totalorder %s201, %s202
      %p211 = scmp.eq.s32.totalorder %s23, 0
      %p212 = por %p210, %p211
      %p213 = scmp.ne.s32.totalorder %s201, %s202
      %p214 = scmp.eq.s32.totalorder %s24, 1
      %p215 = por %p213, %p214
      %p217 = scmp.ne.s32.totalorder %s202, %s216
      %p218 = scmp.eq.s32.totalorder %s24, 0
      %p219 = por %p217, %p218
      %s220 = ssub.s32 %s18, %s25
      %p221 = scmp.eq.s32.totalorder %s220, 0
      %s223 = sadd.s32 %s222, 1
      %s224 = scalar_select %p221, %s222, %s223
      %p227 = pneg %p221
      %p228 = scmp.eq.s32.totalorder %s18, 1
      %p229 = por %p227, %p228
      %p230 = scmp.ne.s32.totalorder %s222, %s225
      %p231 = scmp.eq.s32.totalorder %s18, 0
      %p232 = por %p230, %p231
      %p233 = scmp.ne.s32.totalorder %s222, %s225
      %p234 = scmp.eq.s32.totalorder %s23, 1
      %p235 = por %p233, %p234
      %p236 = scmp.ne.s32.totalorder %s225, %s226
      %p237 = scmp.eq.s32.totalorder %s23, 0
      %p238 = por %p236, %p237
      %p239 = scmp.ne.s32.totalorder %s225, %s226
      %p240 = scmp.eq.s32.totalorder %s24, 1
      %p241 = por %p239, %p240
      %p243 = scmp.ne.s32.totalorder %s226, %s242
      %p244 = scmp.eq.s32.totalorder %s24, 0
      %p245 = por %p243, %p244
      %p246 = scmp.le.s32.totalorder 1, %s18
      %p247 = scmp.lt.s32.totalorder %s18, 3
      %p248 = pnand %p246, %p247
      %p249 = pneg %p248
      // Predicated region
      $region9: #{forward_bb1.1} parent=5 // pred_check
        _
      $region10: #{forward_bb1.1} parent=5 // pred_check_branch
        %251 = sbr.rel (%p248) target = $region12
      $region11: #{forward_bb1.1} parent=5 // pred_region
        %s252 = ssub.s32 %s18, 1
        // Predicated region
        $region13: #{forward_bb1.1} parent=11 // pred_check
          %p253 = pneg %p65
        $region14: #{forward_bb1.1} parent=11 // pred_check_branch
          %255 = sbr.rel (%p253) target = $region16
        $region15: #{forward_bb1.1} parent=11 // pred_region
          _
        $region16: #{forward_bb1.1} parent=11 // pred_fallthru
          _
        // Predicated region
        $region17: #{forward_bb1.1} parent=11 // pred_check
          %p256 = pneg %p86
        $region18: #{forward_bb1.1} parent=11 // pred_check_branch
          %258 = sbr.rel (%p256) target = $region20
        $region19: #{forward_bb1.1} parent=11 // pred_region
          _
        $region20: #{forward_bb1.1} parent=11 // pred_fallthru
          _
        // Predicated region
        $region21: #{forward_bb1.1} parent=11 // pred_check
          %p259 = pneg %p107
        $region22: #{forward_bb1.1} parent=11 // pred_check_branch
          %261 = sbr.rel (%p259) target = $region24
        $region23: #{forward_bb1.1} parent=11 // pred_region
          _
        $region24: #{forward_bb1.1} parent=11 // pred_fallthru
          _
        // Predicated region
        $region25: #{forward_bb1.1} parent=11 // pred_check
          %p262 = pneg %p128
        $region26: #{forward_bb1.1} parent=11 // pred_check_branch
          %264 = sbr.rel (%p262) target = $region28
        $region27: #{forward_bb1.1} parent=11 // pred_region
          _
        $region28: #{forward_bb1.1} parent=11 // pred_fallthru
          _
        // Predicated region
        $region29: #{forward_bb1.1} parent=11 // pred_check
          %p265 = pneg %p149
        $region30: #{forward_bb1.1} parent=11 // pred_check_branch
          %267 = sbr.rel (%p265) target = $region32
        $region31: #{forward_bb1.1} parent=11 // pred_region
          _
        $region32: #{forward_bb1.1} parent=11 // pred_fallthru
          _
        // Predicated region
        $region33: #{forward_bb1.1} parent=11 // pred_check
          %p268 = pneg %p170
        $region34: #{forward_bb1.1} parent=11 // pred_check_branch
          %270 = sbr.rel (%p268) target = $region36
        $region35: #{forward_bb1.1} parent=11 // pred_region
          _
        $region36: #{forward_bb1.1} parent=11 // pred_fallthru
          _
        // Predicated region
        $region37: #{forward_bb1.1} parent=11 // pred_check
          %p271 = pneg %p191
        $region38: #{forward_bb1.1} parent=11 // pred_check_branch
          %273 = sbr.rel (%p271) target = $region40
        $region39: #{forward_bb1.1} parent=11 // pred_region
          _
        $region40: #{forward_bb1.1} parent=11 // pred_fallthru
          _
        // Predicated region
        $region41: #{forward_bb1.1} parent=11 // pred_check
          %p274 = pneg %p212
        $region42: #{forward_bb1.1} parent=11 // pred_check_branch
          %276 = sbr.rel (%p274) target = $region44
        $region43: #{forward_bb1.1} parent=11 // pred_region
          _
        $region44: #{forward_bb1.1} parent=11 // pred_fallthru
          _
      $region12: #{forward_bb1.1} parent=5 // pred_fallthru
        _
      %p277 = scmp.lt.s32.totalorder %s18, 2
      // Predicated region
      $region45: #{forward_bb1.1} parent=5 // pred_check
        %p278 = pneg %p277
      $region46: #{forward_bb1.1} parent=5 // pred_check_branch
        %280 = sbr.rel (%p278) target = $region48
      $region47: #{forward_bb1.1} parent=5 // pred_region
        // Predicated region
        $region49: #{forward_bb1.1} parent=47 // pred_check
          %p281 = pneg %p38
        $region50: #{forward_bb1.1} parent=47 // pred_check_branch
          %283 = sbr.rel (%p281) target = $region52
        $region51: #{forward_bb1.1} parent=47 // pred_region
          %p284 = scmp.lt.s32.totalorder %s18, 1
          %s285 = scalar_select %p284, %s18, 1
          %s286 = smul.addr %s285, 32
          %s287 = smul.addr %s286, 8
          %s288 = scalar_lea.vmem %s0, %s287
        $region52: #{forward_bb1.1} parent=47 // pred_fallthru
          _
      $region48: #{forward_bb1.1} parent=5 // pred_fallthru
        _
      %p289 = scmp.le.s32.totalorder 1, %s18
      %p290 = scmp.lt.s32.totalorder %s18, 3
      %p291 = pnand %p289, %p290
      %p292 = pneg %p291
      // Predicated region
      $region53: #{forward_bb1.1} parent=5 // pred_check
        _
      $region54: #{forward_bb1.1} parent=5 // pred_check_branch
        %294 = sbr.rel (%p291) target = $region56
      $region55: #{forward_bb1.1} parent=5 // pred_region
        %s295 = ssub.s32 %s18, 1
        %p296 = scmp.lt.s32.totalorder %s23, 1
        %s297 = scalar_select %p296, %s23, 1
        %s298 = smul.addr %s297, 32
        %s299 = smul.addr %s298, 8
        %s300 = scalar_lea.vmem %s0, %s299
        %p301 = pneg %p44
        %p302 = pneg %p41
        %p303 = pneg %p65
        %p304 = pneg %p62
        %p305 = pneg %p86
        %p306 = pneg %p83
        %p307 = pneg %p107
        %p308 = pneg %p104
        %p309 = pneg %p128
        %p310 = pneg %p125
        %p311 = pneg %p149
        %p312 = pneg %p146
        %p313 = pneg %p170
        %p314 = pneg %p167
        %p315 = pneg %p191
        %p316 = pneg %p188
        %p317 = pneg %p212
        %p318 = pneg %p209
        %p319 = pneg %p238
        %p320 = pneg %p235
        %s321 = sand.u32 %s225, 1
        %s322 = scalar_lea.sflag [#allocation5], %s321
        %s323 = sand.u32 %s225, 1
        %s324 = smul.addr %s323, 64
        %s325 = scalar_lea.vmem [#allocation4], %s324
        %p326 = scmp.lt.s32.totalorder %s23, 1
        %s327 = scalar_select %p326, %s23, 1
        %s328 = smul.addr %s327, 32
        %s329 = smul.addr %s328, 8
        %s330 = scalar_lea.vmem %s0, %s329
        %vm331 = vcmask 130048
        %332 = vst.msk [vmem:[#allocation2] sm:$0xff] %vm331, 0.0
        %333 = vst.msk [vmem:[#allocation2 + $0x8] sm:$0xff] %vm331, 0.0
        %vm334 = vcmask 123904
        %335 = vst.msk [vmem:[#allocation2 + $0x10] sm:$0x3] %vm334, 0.0
        %s336 = scalar_lea.vmem [#allocation2], 408
        %337 = vst.msk [vmem:[%s336] sm:$0xff] %vm331, 0.0
        %338 = vst.msk [vmem:[%s336 + $0x8] sm:$0xff] %vm331, 0.0
        %339 = vst.msk [vmem:[%s336 + $0x10] sm:$0x3] %vm334, 0.0
        %vm340 = vcmask 122880
        %341 = vst.msk [vmem:[#allocation2] sm:$0x1] %vm340, 0.0
        %342 = vst.msk [vmem:[#allocation2 + $0x18] sm:$0x1] %vm340, 0.0
        %343 = vst.msk [vmem:[#allocation2 + $0x30] sm:$0x1] %vm340, 0.0
        %344 = vst.msk [vmem:[#allocation2 + $0x48] sm:$0x1] %vm340, 0.0
        %345 = vst.msk [vmem:[#allocation2 + $0x60] sm:$0x1] %vm340, 0.0
        %346 = vst.msk [vmem:[#allocation2 + $0x78] sm:$0x1] %vm340, 0.0
        %347 = vst.msk [vmem:[#allocation2 + $0x90] sm:$0x1] %vm340, 0.0
        %348 = vst.msk [vmem:[#allocation2 + $0xa8] sm:$0x1] %vm340, 0.0
        %349 = vst.msk [vmem:[#allocation2 + $0xc0] sm:$0x1] %vm340, 0.0
        %350 = vst.msk [vmem:[#allocation2 + $0xd8] sm:$0x1] %vm340, 0.0
        %351 = vst.msk [vmem:[#allocation2 + $0xf0] sm:$0x1] %vm340, 0.0
        %352 = vst.msk [vmem:[#allocation2 + $0x108] sm:$0x1] %vm340, 0.0
        %353 = vst.msk [vmem:[#allocation2 + $0x120] sm:$0x1] %vm340, 0.0
        %354 = vst.msk [vmem:[#allocation2 + $0x138] sm:$0x1] %vm340, 0.0
        %355 = vst.msk [vmem:[#allocation2 + $0x150] sm:$0x1] %vm340, 0.0
        %356 = vst.msk [vmem:[#allocation2 + $0x168] sm:$0x1] %vm340, 0.0
        %357 = vst.msk [vmem:[#allocation2 + $0x180] sm:$0x1] %vm340, 0.0
        %358 = vst.msk [vmem:[#allocation2 + $0x198] sm:$0x1] %vm340, 0.0
        %359 = vst.msk [vmem:[#allocation2 + $0x11] sm:$0x1] %vm340, 0.0
        %360 = vst.msk [vmem:[#allocation2 + $0x29] sm:$0x1] %vm340, 0.0
        %361 = vst.msk [vmem:[#allocation2 + $0x41] sm:$0x1] %vm340, 0.0
        %362 = vst.msk [vmem:[#allocation2 + $0x59] sm:$0x1] %vm340, 0.0
        %363 = vst.msk [vmem:[#allocation2 + $0x71] sm:$0x1] %vm340, 0.0
        %364 = vst.msk [vmem:[#allocation2 + $0x89] sm:$0x1] %vm340, 0.0
        %365 = vst.msk [vmem:[#allocation2 + $0xa1] sm:$0x1] %vm340, 0.0
        %366 = vst.msk [vmem:[#allocation2 + $0xb9] sm:$0x1] %vm340, 0.0
        %367 = vst.msk [vmem:[#allocation2 + $0xd1] sm:$0x1] %vm340, 0.0
        %368 = vst.msk [vmem:[#allocation2 + $0xe9] sm:$0x1] %vm340, 0.0
        %369 = vst.msk [vmem:[#allocation2 + $0x101] sm:$0x1] %vm340, 0.0
        %370 = vst.msk [vmem:[#allocation2 + $0x119] sm:$0x1] %vm340, 0.0
        %371 = vst.msk [vmem:[#allocation2 + $0x131] sm:$0x1] %vm340, 0.0
        %372 = vst.msk [vmem:[#allocation2 + $0x149] sm:$0x1] %vm340, 0.0
        %373 = vst.msk [vmem:[#allocation2 + $0x161] sm:$0x1] %vm340, 0.0
        %374 = vst.msk [vmem:[#allocation2 + $0x179] sm:$0x1] %vm340, 0.0
        %375 = vst.msk [vmem:[#allocation2 + $0x191] sm:$0x1] %vm340, 0.0
        %376 = vst.msk [vmem:[#allocation2 + $0x1a9] sm:$0x1] %vm340, 0.0
        %vm377 = vcmask 261120
        %378 = vst.msk [vmem:[#allocation3] sm:$0xff] %vm377, 0.0
        %379 = vst.msk [vmem:[#allocation3 + $0x8] sm:$0xff] %vm377, 0.0
        %vm380 = vcmask 254976
        %381 = vst.msk [vmem:[#allocation3 + $0x10] sm:$0x3] %vm380, 0.0
        %s382 = scalar_lea.vmem [#allocation3], 408
        %383 = vst.msk [vmem:[%s382] sm:$0xff] %vm377, 0.0
        %384 = vst.msk [vmem:[%s382 + $0x8] sm:$0xff] %vm377, 0.0
        %385 = vst.msk [vmem:[%s382 + $0x10] sm:$0x3] %vm380, 0.0
        %vm386 = vcmask 253952
        %387 = vst.msk [vmem:[#allocation3] sm:$0x1] %vm386, 0.0
        %388 = vst.msk [vmem:[#allocation3 + $0x18] sm:$0x1] %vm386, 0.0
        %389 = vst.msk [vmem:[#allocation3 + $0x30] sm:$0x1] %vm386, 0.0
        %390 = vst.msk [vmem:[#allocation3 + $0x48] sm:$0x1] %vm386, 0.0
        %391 = vst.msk [vmem:[#allocation3 + $0x60] sm:$0x1] %vm386, 0.0
        %392 = vst.msk [vmem:[#allocation3 + $0x78] sm:$0x1] %vm386, 0.0
        %393 = vst.msk [vmem:[#allocation3 + $0x90] sm:$0x1] %vm386, 0.0
        %394 = vst.msk [vmem:[#allocation3 + $0xa8] sm:$0x1] %vm386, 0.0
        %395 = vst.msk [vmem:[#allocation3 + $0xc0] sm:$0x1] %vm386, 0.0
        %396 = vst.msk [vmem:[#allocation3 + $0xd8] sm:$0x1] %vm386, 0.0
        %397 = vst.msk [vmem:[#allocation3 + $0xf0] sm:$0x1] %vm386, 0.0
        %398 = vst.msk [vmem:[#allocation3 + $0x108] sm:$0x1] %vm386, 0.0
        %399 = vst.msk [vmem:[#allocation3 + $0x120] sm:$0x1] %vm386, 0.0
        %400 = vst.msk [vmem:[#allocation3 + $0x138] sm:$0x1] %vm386, 0.0
        %401 = vst.msk [vmem:[#allocation3 + $0x150] sm:$0x1] %vm386, 0.0
        %402 = vst.msk [vmem:[#allocation3 + $0x168] sm:$0x1] %vm386, 0.0
        %403 = vst.msk [vmem:[#allocation3 + $0x180] sm:$0x1] %vm386, 0.0
        %404 = vst.msk [vmem:[#allocation3 + $0x198] sm:$0x1] %vm386, 0.0
        %405 = vst.msk [vmem:[#allocation3 + $0x11] sm:$0x1] %vm386, 0.0
        %406 = vst.msk [vmem:[#allocation3 + $0x29] sm:$0x1] %vm386, 0.0
        %407 = vst.msk [vmem:[#allocation3 + $0x41] sm:$0x1] %vm386, 0.0
        %408 = vst.msk [vmem:[#allocation3 + $0x59] sm:$0x1] %vm386, 0.0
        %409 = vst.msk [vmem:[#allocation3 + $0x71] sm:$0x1] %vm386, 0.0
        %410 = vst.msk [vmem:[#allocation3 + $0x89] sm:$0x1] %vm386, 0.0
        %411 = vst.msk [vmem:[#allocation3 + $0xa1] sm:$0x1] %vm386, 0.0
        %412 = vst.msk [vmem:[#allocation3 + $0xb9] sm:$0x1] %vm386, 0.0
        %413 = vst.msk [vmem:[#allocation3 + $0xd1] sm:$0x1] %vm386, 0.0
        %414 = vst.msk [vmem:[#allocation3 + $0xe9] sm:$0x1] %vm386, 0.0
        %415 = vst.msk [vmem:[#allocation3 + $0x101] sm:$0x1] %vm386, 0.0
        %416 = vst.msk [vmem:[#allocation3 + $0x119] sm:$0x1] %vm386, 0.0
        %417 = vst.msk [vmem:[#allocation3 + $0x131] sm:$0x1] %vm386, 0.0
        %418 = vst.msk [vmem:[#allocation3 + $0x149] sm:$0x1] %vm386, 0.0
        %419 = vst.msk [vmem:[#allocation3 + $0x161] sm:$0x1] %vm386, 0.0
        %420 = vst.msk [vmem:[#allocation3 + $0x179] sm:$0x1] %vm386, 0.0
        %421 = vst.msk [vmem:[#allocation3 + $0x191] sm:$0x1] %vm386, 0.0
        %422 = vst.msk [vmem:[#allocation3 + $0x1a9] sm:$0x1] %vm386, 0.0
        %v423 = vld [vmem:[%s1] sm:$0xff]
        %v424 = vld [vmem:[%s1 + $0x8] sm:$0x1]
        %v425 = vld [vmem:[%s5] sm:$0xff]
        %v426 = vld [vmem:[%s5 + $0x8] sm:$0x1]
        %v427 = vld [vmem:[%s2] sm:$0x1]
        %v428 = vld [vmem:[%s4] sm:$0x1]
        %v429 = vld [vmem:[%s6] sm:$0x1]
        %v430 = vld [vmem:[%s8] sm:$0x1]
        %v431 = vld [vmem:[%s3] sm:$0xff]
        %v432 = vld [vmem:[%s3 + $0x8] sm:$0xff]
        %v433 = vld [vmem:[%s7] sm:$0xff]
        %v434 = vld [vmem:[%s7 + $0x8] sm:$0xff]
        %v435 = vld [vmem:[%s7 + $0x10] sm:$0xff]
        %v436 = vld [vmem:[%s7 + $0x18] sm:$0xff]
        %v437 = vld [vmem:[%s330] sm:$0xff]
        %v438 = vld [vmem:[%s330 + $0x8] sm:$0xff]
        %v439 = vld [vmem:[%s330 + $0x10] sm:$0xff]
        %v440 = vld [vmem:[%s330 + $0x18] sm:$0xff]
        %v441 = vld [vmem:[%s330 + $0x20] sm:$0xff]
        %v442 = vld [vmem:[%s330 + $0x28] sm:$0xff]
        %v443 = vld [vmem:[%s330 + $0x30] sm:$0xff]
        %v444 = vld [vmem:[%s330 + $0x38] sm:$0xff]
        %v445 = vld [vmem:[%s330 + $0x40] sm:$0xff]
        %v446 = vld [vmem:[%s330 + $0x48] sm:$0xff]
        %v447 = vld [vmem:[%s330 + $0x50] sm:$0xff]
        %v448 = vld [vmem:[%s330 + $0x58] sm:$0xff]
        %v449 = vld [vmem:[%s330 + $0x60] sm:$0xff]
        %v450 = vld [vmem:[%s330 + $0x68] sm:$0xff]
        %v451 = vld [vmem:[%s330 + $0x70] sm:$0xff]
        %v452 = vld [vmem:[%s330 + $0x78] sm:$0xff]
        %v453 = vld [vmem:[%s330 + $0x80] sm:$0xff]
        %v454 = vld [vmem:[%s330 + $0x88] sm:$0xff]
        %v455 = vld [vmem:[%s330 + $0x90] sm:$0xff]
        %v456 = vld [vmem:[%s330 + $0x98] sm:$0xff]
        %v457 = vld [vmem:[%s330 + $0xa0] sm:$0xff]
        %v458 = vld [vmem:[%s330 + $0xa8] sm:$0xff]
        %v459 = vld [vmem:[%s330 + $0xb0] sm:$0xff]
        %v460 = vld [vmem:[%s330 + $0xb8] sm:$0xff]
        %v461 = vld [vmem:[%s330 + $0xc0] sm:$0xff]
        %v462 = vld [vmem:[%s330 + $0xc8] sm:$0xff]
        %v463 = vld [vmem:[%s330 + $0xd0] sm:$0xff]
        %v464 = vld [vmem:[%s330 + $0xd8] sm:$0xff]
        %v465 = vld [vmem:[%s330 + $0xe0] sm:$0xff]
        %v466 = vld [vmem:[%s330 + $0xe8] sm:$0xff]
        %v467 = vld [vmem:[%s330 + $0xf0] sm:$0xff]
        %v468 = vld [vmem:[%s330 + $0xf8] sm:$0xff]
        %s469 = scalar_lea.vmem [#allocation2], 24
        %470 = vst.msk [vmem:[%s469 + $0x1] sm:$0xff] %vm331, %v437
        %471 = vst.msk [vmem:[%s469 + $0x9] sm:$0xff] %vm331, %v438
        %472 = vst.msk [vmem:[%s469 + $0x19] sm:$0xff] %vm331, %v439
        %473 = vst.msk [vmem:[%s469 + $0x21] sm:$0xff] %vm331, %v440
        %474 = vst.msk [vmem:[%s469 + $0x31] sm:$0xff] %vm331, %v441
        %475 = vst.msk [vmem:[%s469 + $0x39] sm:$0xff] %vm331, %v442
        %476 = vst.msk [vmem:[%s469 + $0x49] sm:$0xff] %vm331, %v443
        %477 = vst.msk [vmem:[%s469 + $0x51] sm:$0xff] %vm331, %v444
        %478 = vst.msk [vmem:[%s469 + $0x61] sm:$0xff] %vm331, %v445
        %479 = vst.msk [vmem:[%s469 + $0x69] sm:$0xff] %vm331, %v446
        %480 = vst.msk [vmem:[%s469 + $0x79] sm:$0xff] %vm331, %v447
        %481 = vst.msk [vmem:[%s469 + $0x81] sm:$0xff] %vm331, %v448
        %482 = vst.msk [vmem:[%s469 + $0x91] sm:$0xff] %vm331, %v449
        %483 = vst.msk [vmem:[%s469 + $0x99] sm:$0xff] %vm331, %v450
        %484 = vst.msk [vmem:[%s469 + $0xa9] sm:$0xff] %vm331, %v451
        %485 = vst.msk [vmem:[%s469 + $0xb1] sm:$0xff] %vm331, %v452
        %486 = vst.msk [vmem:[%s469 + $0xc1] sm:$0xff] %vm331, %v453
        %487 = vst.msk [vmem:[%s469 + $0xc9] sm:$0xff] %vm331, %v454
        %488 = vst.msk [vmem:[%s469 + $0xd9] sm:$0xff] %vm331, %v455
        %489 = vst.msk [vmem:[%s469 + $0xe1] sm:$0xff] %vm331, %v456
        %490 = vst.msk [vmem:[%s469 + $0xf1] sm:$0xff] %vm331, %v457
        %491 = vst.msk [vmem:[%s469 + $0xf9] sm:$0xff] %vm331, %v458
        %492 = vst.msk [vmem:[%s469 + $0x109] sm:$0xff] %vm331, %v459
        %493 = vst.msk [vmem:[%s469 + $0x111] sm:$0xff] %vm331, %v460
        %494 = vst.msk [vmem:[%s469 + $0x121] sm:$0xff] %vm331, %v461
        %495 = vst.msk [vmem:[%s469 + $0x129] sm:$0xff] %vm331, %v462
        %496 = vst.msk [vmem:[%s469 + $0x139] sm:$0xff] %vm331, %v463
        %497 = vst.msk [vmem:[%s469 + $0x141] sm:$0xff] %vm331, %v464
        %498 = vst.msk [vmem:[%s469 + $0x151] sm:$0xff] %vm331, %v465
        %499 = vst.msk [vmem:[%s469 + $0x159] sm:$0xff] %vm331, %v466
        %500 = vst.msk [vmem:[%s469 + $0x169] sm:$0xff] %vm331, %v467
        %501 = vst.msk [vmem:[%s469 + $0x171] sm:$0xff] %vm331, %v468
        %v502 = vld [vmem:[#allocation2] sm:$0xff]
        %v503 = vld [vmem:[#allocation2 + $0x8] sm:$0xff]
        %v504 = vld [vmem:[#allocation2 + $0x18] sm:$0xff]
        %v505 = vld [vmem:[#allocation2 + $0x20] sm:$0xff]
        %v506 = vld [vmem:[#allocation2 + $0x30] sm:$0xff]
        %v507 = vld [vmem:[#allocation2 + $0x38] sm:$0xff]
        %v508 = vld [vmem:[#allocation2 + $0x48] sm:$0xff]
        %v509 = vld [vmem:[#allocation2 + $0x50] sm:$0xff]
        %v510 = vld [vmem:[#allocation2 + $0x60] sm:$0xff]
        %v511 = vld [vmem:[#allocation2 + $0x68] sm:$0xff]
        %v512 = vld [vmem:[#allocation2 + $0x78] sm:$0xff]
        %v513 = vld [vmem:[#allocation2 + $0x80] sm:$0xff]
        %v514 = vld [vmem:[#allocation2 + $0x90] sm:$0xff]
        %v515 = vld [vmem:[#allocation2 + $0x98] sm:$0xff]
        %v516 = vld [vmem:[#allocation2 + $0xa8] sm:$0xff]
        %v517 = vld [vmem:[#allocation2 + $0xb0] sm:$0xff]
        %v518 = vld [vmem:[#allocation2 + $0xc0] sm:$0xff]
        %v519 = vld [vmem:[#allocation2 + $0xc8] sm:$0xff]
        %v520 = vld [vmem:[#allocation2 + $0xd8] sm:$0xff]
        %v521 = vld [vmem:[#allocation2 + $0xe0] sm:$0xff]
        %v522 = vld [vmem:[#allocation2 + $0xf0] sm:$0xff]
        %v523 = vld [vmem:[#allocation2 + $0xf8] sm:$0xff]
        %v524 = vld [vmem:[#allocation2 + $0x108] sm:$0xff]
        %v525 = vld [vmem:[#allocation2 + $0x110] sm:$0xff]
        %v526 = vld [vmem:[#allocation2 + $0x120] sm:$0xff]
        %v527 = vld [vmem:[#allocation2 + $0x128] sm:$0xff]
        %v528 = vld [vmem:[#allocation2 + $0x138] sm:$0xff]
        %v529 = vld [vmem:[#allocation2 + $0x140] sm:$0xff]
        %v530 = vld [vmem:[#allocation2 + $0x150] sm:$0xff]
        %v531 = vld [vmem:[#allocation2 + $0x158] sm:$0xff]
        %v532 = vld [vmem:[#allocation2 + $0x168] sm:$0xff]
        %v533 = vld [vmem:[#allocation2 + $0x170] sm:$0xff]
        %v534 = vlaneseq
        %v535 = vshrl.u32 %v534, 7
        %v536 = vsub.s32 0, %v535
        %v537 = vrot.slane %v423, %v536
        %v538 = vmul.f32 %v502, %v537
        %v539 = vmul.f32 %v503, %v537
        %v540 = vmul.f32 %v504, %v537
        %v541 = vmul.f32 %v505, %v537
        %v542 = vmul.f32 %v506, %v537
        %v543 = vmul.f32 %v507, %v537
        %v544 = vmul.f32 %v508, %v537
        %v545 = vmul.f32 %v509, %v537
        %v546 = vmul.f32 %v510, %v537
        %v547 = vmul.f32 %v511, %v537
        %v548 = vmul.f32 %v512, %v537
        %v549 = vmul.f32 %v513, %v537
        %v550 = vmul.f32 %v514, %v537
        %v551 = vmul.f32 %v515, %v537
        %v552 = vmul.f32 %v516, %v537
        %v553 = vmul.f32 %v517, %v537
        %v554 = vmul.f32 %v518, %v537
        %v555 = vmul.f32 %v519, %v537
        %v556 = vmul.f32 %v520, %v537
        %v557 = vmul.f32 %v521, %v537
        %v558 = vmul.f32 %v522, %v537
        %v559 = vmul.f32 %v523, %v537
        %v560 = vmul.f32 %v524, %v537
        %v561 = vmul.f32 %v525, %v537
        %v562 = vmul.f32 %v526, %v537
        %v563 = vmul.f32 %v527, %v537
        %v564 = vmul.f32 %v528, %v537
        %v565 = vmul.f32 %v529, %v537
        %v566 = vmul.f32 %v530, %v537
        %v567 = vmul.f32 %v531, %v537
        %v568 = vmul.f32 %v532, %v537
        %v569 = vmul.f32 %v533, %v537
        %v570 = vadd.f32 %v538, 0.0
        %v571 = vadd.f32 %v539, 0.0
        %v572 = vadd.f32 %v540, 0.0
        %v573 = vadd.f32 %v541, 0.0
        %v574 = vadd.f32 %v542, 0.0
        %v575 = vadd.f32 %v543, 0.0
        %v576 = vadd.f32 %v544, 0.0
        %v577 = vadd.f32 %v545, 0.0
        %v578 = vadd.f32 %v546, 0.0
        %v579 = vadd.f32 %v547, 0.0
        %v580 = vadd.f32 %v548, 0.0
        %v581 = vadd.f32 %v549, 0.0
        %v582 = vadd.f32 %v550, 0.0
        %v583 = vadd.f32 %v551, 0.0
        %v584 = vadd.f32 %v552, 0.0
        %v585 = vadd.f32 %v553, 0.0
        %v586 = vadd.f32 %v554, 0.0
        %v587 = vadd.f32 %v555, 0.0
        %v588 = vadd.f32 %v556, 0.0
        %v589 = vadd.f32 %v557, 0.0
        %v590 = vadd.f32 %v558, 0.0
        %v591 = vadd.f32 %v559, 0.0
        %v592 = vadd.f32 %v560, 0.0
        %v593 = vadd.f32 %v561, 0.0
        %v594 = vadd.f32 %v562, 0.0
        %v595 = vadd.f32 %v563, 0.0
        %v596 = vadd.f32 %v564, 0.0
        %v597 = vadd.f32 %v565, 0.0
        %v598 = vadd.f32 %v566, 0.0
        %v599 = vadd.f32 %v567, 0.0
        %v600 = vadd.f32 %v568, 0.0
        %v601 = vadd.f32 %v569, 0.0
        %v602 = vld [vmem:[#allocation2 + $0x1] sm:$0xff]
        %v603 = vld [vmem:[#allocation2 + $0x9] sm:$0xff]
        %v604 = vld [vmem:[#allocation2 + $0x19] sm:$0xff]
        %v605 = vld [vmem:[#allocation2 + $0x21] sm:$0xff]
        %v606 = vld [vmem:[#allocation2 + $0x31] sm:$0xff]
        %v607 = vld [vmem:[#allocation2 + $0x39] sm:$0xff]
        %v608 = vld [vmem:[#allocation2 + $0x49] sm:$0xff]
        %v609 = vld [vmem:[#allocation2 + $0x51] sm:$0xff]
        %v610 = vld [vmem:[#allocation2 + $0x61] sm:$0xff]
        %v611 = vld [vmem:[#allocation2 + $0x69] sm:$0xff]
        %v612 = vld [vmem:[#allocation2 + $0x79] sm:$0xff]
        %v613 = vld [vmem:[#allocation2 + $0x81] sm:$0xff]
        %v614 = vld [vmem:[#allocation2 + $0x91] sm:$0xff]
        %v615 = vld [vmem:[#allocation2 + $0x99] sm:$0xff]
        %v616 = vld [vmem:[#allocation2 + $0xa9] sm:$0xff]
        %v617 = vld [vmem:[#allocation2 + $0xb1] sm:$0xff]
        %v618 = vld [vmem:[#allocation2 + $0xc1] sm:$0xff]
        %v619 = vld [vmem:[#allocation2 + $0xc9] sm:$0xff]
        %v620 = vld [vmem:[#allocation2 + $0xd9] sm:$0xff]
        %v621 = vld [vmem:[#allocation2 + $0xe1] sm:$0xff]
        %v622 = vld [vmem:[#allocation2 + $0xf1] sm:$0xff]
        %v623 = vld [vmem:[#allocation2 + $0xf9] sm:$0xff]
        %v624 = vld [vmem:[#allocation2 + $0x109] sm:$0xff]
        %v625 = vld [vmem:[#allocation2 + $0x111] sm:$0xff]
        %v626 = vld [vmem:[#allocation2 + $0x121] sm:$0xff]
        %v627 = vld [vmem:[#allocation2 + $0x129] sm:$0xff]
        %v628 = vld [vmem:[#allocation2 + $0x139] sm:$0xff]
        %v629 = vld [vmem:[#allocation2 + $0x141] sm:$0xff]
        %v630 = vld [vmem:[#allocation2 + $0x151] sm:$0xff]
        %v631 = vld [vmem:[#allocation2 + $0x159] sm:$0xff]
        %v632 = vld [vmem:[#allocation2 + $0x169] sm:$0xff]
        %v633 = vld [vmem:[#allocation2 + $0x171] sm:$0xff]
        %v634 = vlaneseq
        %v635 = vshrl.u32 %v634, 7
        %v636 = vsub.s32 1, %v635
        %v637 = vrot.slane %v423, %v636
        %v638 = vmul.f32 %v602, %v637
        %v639 = vmul.f32 %v603, %v637
        %v640 = vmul.f32 %v604, %v637
        %v641 = vmul.f32 %v605, %v637
        %v642 = vmul.f32 %v606, %v637
        %v643 = vmul.f32 %v607, %v637
        %v644 = vmul.f32 %v608, %v637
        %v645 = vmul.f32 %v609, %v637
        %v646 = vmul.f32 %v610, %v637
        %v647 = vmul.f32 %v611, %v637
        %v648 = vmul.f32 %v612, %v637
        %v649 = vmul.f32 %v613, %v637
        %v650 = vmul.f32 %v614, %v637
        %v651 = vmul.f32 %v615, %v637
        %v652 = vmul.f32 %v616, %v637
        %v653 = vmul.f32 %v617, %v637
        %v654 = vmul.f32 %v618, %v637
        %v655 = vmul.f32 %v619, %v637
        %v656 = vmul.f32 %v620, %v637
        %v657 = vmul.f32 %v621, %v637
        %v658 = vmul.f32 %v622, %v637
        %v659 = vmul.f32 %v623, %v637
        %v660 = vmul.f32 %v624, %v637
        %v661 = vmul.f32 %v625, %v637
        %v662 = vmul.f32 %v626, %v637
        %v663 = vmul.f32 %v627, %v637
        %v664 = vmul.f32 %v628, %v637
        %v665 = vmul.f32 %v629, %v637
        %v666 = vmul.f32 %v630, %v637
        %v667 = vmul.f32 %v631, %v637
        %v668 = vmul.f32 %v632, %v637
        %v669 = vmul.f32 %v633, %v637
        %v670 = vadd.f32 %v570, %v638
        %v671 = vadd.f32 %v571, %v639
        %v672 = vadd.f32 %v572, %v640
        %v673 = vadd.f32 %v573, %v641
        %v674 = vadd.f32 %v574, %v642
        %v675 = vadd.f32 %v575, %v643
        %v676 = vadd.f32 %v576, %v644
        %v677 = vadd.f32 %v577, %v645
        %v678 = vadd.f32 %v578, %v646
        %v679 = vadd.f32 %v579, %v647
        %v680 = vadd.f32 %v580, %v648
        %v681 = vadd.f32 %v581, %v649
        %v682 = vadd.f32 %v582, %v650
        %v683 = vadd.f32 %v583, %v651
        %v684 = vadd.f32 %v584, %v652
        %v685 = vadd.f32 %v585, %v653
        %v686 = vadd.f32 %v586, %v654
        %v687 = vadd.f32 %v587, %v655
        %v688 = vadd.f32 %v588, %v656
        %v689 = vadd.f32 %v589, %v657
        %v690 = vadd.f32 %v590, %v658
        %v691 = vadd.f32 %v591, %v659
        %v692 = vadd.f32 %v592, %v660
        %v693 = vadd.f32 %v593, %v661
        %v694 = vadd.f32 %v594, %v662
        %v695 = vadd.f32 %v595, %v663
        %v696 = vadd.f32 %v596, %v664
        %v697 = vadd.f32 %v597, %v665
        %v698 = vadd.f32 %v598, %v666
        %v699 = vadd.f32 %v599, %v667
        %v700 = vadd.f32 %v600, %v668
        %v701 = vadd.f32 %v601, %v669
        %v702 = vld [vmem:[#allocation2 + $0x2] sm:$0xff]
        %v703 = vld [vmem:[#allocation2 + $0xa] sm:$0xff]
        %v704 = vld [vmem:[#allocation2 + $0x1a] sm:$0xff]
        %v705 = vld [vmem:[#allocation2 + $0x22] sm:$0xff]
        %v706 = vld [vmem:[#allocation2 + $0x32] sm:$0xff]
        %v707 = vld [vmem:[#allocation2 + $0x3a] sm:$0xff]
        %v708 = vld [vmem:[#allocation2 + $0x4a] sm:$0xff]
        %v709 = vld [vmem:[#allocation2 + $0x52] sm:$0xff]
        %v710 = vld [vmem:[#allocation2 + $0x62] sm:$0xff]
        %v711 = vld [vmem:[#allocation2 + $0x6a] sm:$0xff]
        %v712 = vld [vmem:[#allocation2 + $0x7a] sm:$0xff]
        %v713 = vld [vmem:[#allocation2 + $0x82] sm:$0xff]
        %v714 = vld [vmem:[#allocation2 + $0x92] sm:$0xff]
        %v715 = vld [vmem:[#allocation2 + $0x9a] sm:$0xff]
        %v716 = vld [vmem:[#allocation2 + $0xaa] sm:$0xff]
        %v717 = vld [vmem:[#allocation2 + $0xb2] sm:$0xff]
        %v718 = vld [vmem:[#allocation2 + $0xc2] sm:$0xff]
        %v719 = vld [vmem:[#allocation2 + $0xca] sm:$0xff]
        %v720 = vld [vmem:[#allocation2 + $0xda] sm:$0xff]
        %v721 = vld [vmem:[#allocation2 + $0xe2] sm:$0xff]
        %v722 = vld [vmem:[#allocation2 + $0xf2] sm:$0xff]
        %v723 = vld [vmem:[#allocation2 + $0xfa] sm:$0xff]
        %v724 = vld [vmem:[#allocation2 + $0x10a] sm:$0xff]
        %v725 = vld [vmem:[#allocation2 + $0x112] sm:$0xff]
        %v726 = vld [vmem:[#allocation2 + $0x122] sm:$0xff]
        %v727 = vld [vmem:[#allocation2 + $0x12a] sm:$0xff]
        %v728 = vld [vmem:[#allocation2 + $0x13a] sm:$0xff]
        %v729 = vld [vmem:[#allocation2 + $0x142] sm:$0xff]
        %v730 = vld [vmem:[#allocation2 + $0x152] sm:$0xff]
        %v731 = vld [vmem:[#allocation2 + $0x15a] sm:$0xff]
        %v732 = vld [vmem:[#allocation2 + $0x16a] sm:$0xff]
        %v733 = vld [vmem:[#allocation2 + $0x172] sm:$0xff]
        %v734 = vlaneseq
        %v735 = vshrl.u32 %v734, 7
        %v736 = vsub.s32 2, %v735
        %v737 = vrot.slane %v423, %v736
        %v738 = vmul.f32 %v702, %v737
        %v739 = vmul.f32 %v703, %v737
        %v740 = vmul.f32 %v704, %v737
        %v741 = vmul.f32 %v705, %v737
        %v742 = vmul.f32 %v706, %v737
        %v743 = vmul.f32 %v707, %v737
        %v744 = vmul.f32 %v708, %v737
        %v745 = vmul.f32 %v709, %v737
        %v746 = vmul.f32 %v710, %v737
        %v747 = vmul.f32 %v711, %v737
        %v748 = vmul.f32 %v712, %v737
        %v749 = vmul.f32 %v713, %v737
        %v750 = vmul.f32 %v714, %v737
        %v751 = vmul.f32 %v715, %v737
        %v752 = vmul.f32 %v716, %v737
        %v753 = vmul.f32 %v717, %v737
        %v754 = vmul.f32 %v718, %v737
        %v755 = vmul.f32 %v719, %v737
        %v756 = vmul.f32 %v720, %v737
        %v757 = vmul.f32 %v721, %v737
        %v758 = vmul.f32 %v722, %v737
        %v759 = vmul.f32 %v723, %v737
        %v760 = vmul.f32 %v724, %v737
        %v761 = vmul.f32 %v725, %v737
        %v762 = vmul.f32 %v726, %v737
        %v763 = vmul.f32 %v727, %v737
        %v764 = vmul.f32 %v728, %v737
        %v765 = vmul.f32 %v729, %v737
        %v766 = vmul.f32 %v730, %v737
        %v767 = vmul.f32 %v731, %v737
        %v768 = vmul.f32 %v732, %v737
        %v769 = vmul.f32 %v733, %v737
        %v770 = vadd.f32 %v670, %v738
        %v771 = vadd.f32 %v671, %v739
        %v772 = vadd.f32 %v672, %v740
        %v773 = vadd.f32 %v673, %v741
        %v774 = vadd.f32 %v674, %v742
        %v775 = vadd.f32 %v675, %v743
        %v776 = vadd.f32 %v676, %v744
        %v777 = vadd.f32 %v677, %v745
        %v778 = vadd.f32 %v678, %v746
        %v779 = vadd.f32 %v679, %v747
        %v780 = vadd.f32 %v680, %v748
        %v781 = vadd.f32 %v681, %v749
        %v782 = vadd.f32 %v682, %v750
        %v783 = vadd.f32 %v683, %v751
        %v784 = vadd.f32 %v684, %v752
        %v785 = vadd.f32 %v685, %v753
        %v786 = vadd.f32 %v686, %v754
        %v787 = vadd.f32 %v687, %v755
        %v788 = vadd.f32 %v688, %v756
        %v789 = vadd.f32 %v689, %v757
        %v790 = vadd.f32 %v690, %v758
        %v791 = vadd.f32 %v691, %v759
        %v792 = vadd.f32 %v692, %v760
        %v793 = vadd.f32 %v693, %v761
        %v794 = vadd.f32 %v694, %v762
        %v795 = vadd.f32 %v695, %v763
        %v796 = vadd.f32 %v696, %v764
        %v797 = vadd.f32 %v697, %v765
        %v798 = vadd.f32 %v698, %v766
        %v799 = vadd.f32 %v699, %v767
        %v800 = vadd.f32 %v700, %v768
        %v801 = vadd.f32 %v701, %v769
        %v802 = vld [vmem:[%s469] sm:$0xff]
        %v803 = vld [vmem:[%s469 + $0x8] sm:$0xff]
        %v804 = vld [vmem:[%s469 + $0x18] sm:$0xff]
        %v805 = vld [vmem:[%s469 + $0x20] sm:$0xff]
        %v806 = vld [vmem:[%s469 + $0x30] sm:$0xff]
        %v807 = vld [vmem:[%s469 + $0x38] sm:$0xff]
        %v808 = vld [vmem:[%s469 + $0x48] sm:$0xff]
        %v809 = vld [vmem:[%s469 + $0x50] sm:$0xff]
        %v810 = vld [vmem:[%s469 + $0x60] sm:$0xff]
        %v811 = vld [vmem:[%s469 + $0x68] sm:$0xff]
        %v812 = vld [vmem:[%s469 + $0x78] sm:$0xff]
        %v813 = vld [vmem:[%s469 + $0x80] sm:$0xff]
        %v814 = vld [vmem:[%s469 + $0x90] sm:$0xff]
        %v815 = vld [vmem:[%s469 + $0x98] sm:$0xff]
        %v816 = vld [vmem:[%s469 + $0xa8] sm:$0xff]
        %v817 = vld [vmem:[%s469 + $0xb0] sm:$0xff]
        %v818 = vld [vmem:[%s469 + $0xc0] sm:$0xff]
        %v819 = vld [vmem:[%s469 + $0xc8] sm:$0xff]
        %v820 = vld [vmem:[%s469 + $0xd8] sm:$0xff]
        %v821 = vld [vmem:[%s469 + $0xe0] sm:$0xff]
        %v822 = vld [vmem:[%s469 + $0xf0] sm:$0xff]
        %v823 = vld [vmem:[%s469 + $0xf8] sm:$0xff]
        %v824 = vld [vmem:[%s469 + $0x108] sm:$0xff]
        %v825 = vld [vmem:[%s469 + $0x110] sm:$0xff]
        %v826 = vld [vmem:[%s469 + $0x120] sm:$0xff]
        %v827 = vld [vmem:[%s469 + $0x128] sm:$0xff]
        %v828 = vld [vmem:[%s469 + $0x138] sm:$0xff]
        %v829 = vld [vmem:[%s469 + $0x140] sm:$0xff]
        %v830 = vld [vmem:[%s469 + $0x150] sm:$0xff]
        %v831 = vld [vmem:[%s469 + $0x158] sm:$0xff]
        %v832 = vld [vmem:[%s469 + $0x168] sm:$0xff]
        %v833 = vld [vmem:[%s469 + $0x170] sm:$0xff]
        %v834 = vlaneseq
        %v835 = vshrl.u32 %v834, 7
        %v836 = vsub.s32 3, %v835
        %v837 = vrot.slane %v423, %v836
        %v838 = vmul.f32 %v802, %v837
        %v839 = vmul.f32 %v803, %v837
        %v840 = vmul.f32 %v804, %v837
        %v841 = vmul.f32 %v805, %v837
        %v842 = vmul.f32 %v806, %v837
        %v843 = vmul.f32 %v807, %v837
        %v844 = vmul.f32 %v808, %v837
        %v845 = vmul.f32 %v809, %v837
        %v846 = vmul.f32 %v810, %v837
        %v847 = vmul.f32 %v811, %v837
        %v848 = vmul.f32 %v812, %v837
        %v849 = vmul.f32 %v813, %v837
        %v850 = vmul.f32 %v814, %v837
        %v851 = vmul.f32 %v815, %v837
        %v852 = vmul.f32 %v816, %v837
        %v853 = vmul.f32 %v817, %v837
        %v854 = vmul.f32 %v818, %v837
        %v855 = vmul.f32 %v819, %v837
        %v856 = vmul.f32 %v820, %v837
        %v857 = vmul.f32 %v821, %v837
        %v858 = vmul.f32 %v822, %v837
        %v859 = vmul.f32 %v823, %v837
        %v860 = vmul.f32 %v824, %v837
        %v861 = vmul.f32 %v825, %v837
        %v862 = vmul.f32 %v826, %v837
        %v863 = vmul.f32 %v827, %v837
        %v864 = vmul.f32 %v828, %v837
        %v865 = vmul.f32 %v829, %v837
        %v866 = vmul.f32 %v830, %v837
        %v867 = vmul.f32 %v831, %v837
        %v868 = vmul.f32 %v832, %v837
        %v869 = vmul.f32 %v833, %v837
        %v870 = vadd.f32 %v770, %v838
        %v871 = vadd.f32 %v771, %v839
        %v872 = vadd.f32 %v772, %v840
        %v873 = vadd.f32 %v773, %v841
        %v874 = vadd.f32 %v774, %v842
        %v875 = vadd.f32 %v775, %v843
        %v876 = vadd.f32 %v776, %v844
        %v877 = vadd.f32 %v777, %v845
        %v878 = vadd.f32 %v778, %v846
        %v879 = vadd.f32 %v779, %v847
        %v880 = vadd.f32 %v780, %v848
        %v881 = vadd.f32 %v781, %v849
        %v882 = vadd.f32 %v782, %v850
        %v883 = vadd.f32 %v783, %v851
        %v884 = vadd.f32 %v784, %v852
        %v885 = vadd.f32 %v785, %v853
        %v886 = vadd.f32 %v786, %v854
        %v887 = vadd.f32 %v787, %v855
        %v888 = vadd.f32 %v788, %v856
        %v889 = vadd.f32 %v789, %v857
        %v890 = vadd.f32 %v790, %v858
        %v891 = vadd.f32 %v791, %v859
        %v892 = vadd.f32 %v792, %v860
        %v893 = vadd.f32 %v793, %v861
        %v894 = vadd.f32 %v794, %v862
        %v895 = vadd.f32 %v795, %v863
        %v896 = vadd.f32 %v796, %v864
        %v897 = vadd.f32 %v797, %v865
        %v898 = vadd.f32 %v798, %v866
        %v899 = vadd.f32 %v799, %v867
        %v900 = vadd.f32 %v800, %v868
        %v901 = vadd.f32 %v801, %v869
        %v902 = vld [vmem:[%s469 + $0x1] sm:$0xff]
        %v903 = vld [vmem:[%s469 + $0x9] sm:$0xff]
        %v904 = vld [vmem:[%s469 + $0x19] sm:$0xff]
        %v905 = vld [vmem:[%s469 + $0x21] sm:$0xff]
        %v906 = vld [vmem:[%s469 + $0x31] sm:$0xff]
        %v907 = vld [vmem:[%s469 + $0x39] sm:$0xff]
        %v908 = vld [vmem:[%s469 + $0x49] sm:$0xff]
        %v909 = vld [vmem:[%s469 + $0x51] sm:$0xff]
        %v910 = vld [vmem:[%s469 + $0x61] sm:$0xff]
        %v911 = vld [vmem:[%s469 + $0x69] sm:$0xff]
        %v912 = vld [vmem:[%s469 + $0x79] sm:$0xff]
        %v913 = vld [vmem:[%s469 + $0x81] sm:$0xff]
        %v914 = vld [vmem:[%s469 + $0x91] sm:$0xff]
        %v915 = vld [vmem:[%s469 + $0x99] sm:$0xff]
        %v916 = vld [vmem:[%s469 + $0xa9] sm:$0xff]
        %v917 = vld [vmem:[%s469 + $0xb1] sm:$0xff]
        %v918 = vld [vmem:[%s469 + $0xc1] sm:$0xff]
        %v919 = vld [vmem:[%s469 + $0xc9] sm:$0xff]
        %v920 = vld [vmem:[%s469 + $0xd9] sm:$0xff]
        %v921 = vld [vmem:[%s469 + $0xe1] sm:$0xff]
        %v922 = vld [vmem:[%s469 + $0xf1] sm:$0xff]
        %v923 = vld [vmem:[%s469 + $0xf9] sm:$0xff]
        %v924 = vld [vmem:[%s469 + $0x109] sm:$0xff]
        %v925 = vld [vmem:[%s469 + $0x111] sm:$0xff]
        %v926 = vld [vmem:[%s469 + $0x121] sm:$0xff]
        %v927 = vld [vmem:[%s469 + $0x129] sm:$0xff]
        %v928 = vld [vmem:[%s469 + $0x139] sm:$0xff]
        %v929 = vld [vmem:[%s469 + $0x141] sm:$0xff]
        %v930 = vld [vmem:[%s469 + $0x151] sm:$0xff]
        %v931 = vld [vmem:[%s469 + $0x159] sm:$0xff]
        %v932 = vld [vmem:[%s469 + $0x169] sm:$0xff]
        %v933 = vld [vmem:[%s469 + $0x171] sm:$0xff]
        %v934 = vlaneseq
        %v935 = vshrl.u32 %v934, 7
        %v936 = vsub.s32 4, %v935
        %v937 = vrot.slane %v423, %v936
        %v938 = vmul.f32 %v902, %v937
        %v939 = vmul.f32 %v903, %v937
        %v940 = vmul.f32 %v904, %v937
        %v941 = vmul.f32 %v905, %v937
        %v942 = vmul.f32 %v906, %v937
        %v943 = vmul.f32 %v907, %v937
        %v944 = vmul.f32 %v908, %v937
        %v945 = vmul.f32 %v909, %v937
        %v946 = vmul.f32 %v910, %v937
        %v947 = vmul.f32 %v911, %v937
        %v948 = vmul.f32 %v912, %v937
        %v949 = vmul.f32 %v913, %v937
        %v950 = vmul.f32 %v914, %v937
        %v951 = vmul.f32 %v915, %v937
        %v952 = vmul.f32 %v916, %v937
        %v953 = vmul.f32 %v917, %v937
        %v954 = vmul.f32 %v918, %v937
        %v955 = vmul.f32 %v919, %v937
        %v956 = vmul.f32 %v920, %v937
        %v957 = vmul.f32 %v921, %v937
        %v958 = vmul.f32 %v922, %v937
        %v959 = vmul.f32 %v923, %v937
        %v960 = vmul.f32 %v924, %v937
        %v961 = vmul.f32 %v925, %v937
        %v962 = vmul.f32 %v926, %v937
        %v963 = vmul.f32 %v927, %v937
        %v964 = vmul.f32 %v928, %v937
        %v965 = vmul.f32 %v929, %v937
        %v966 = vmul.f32 %v930, %v937
        %v967 = vmul.f32 %v931, %v937
        %v968 = vmul.f32 %v932, %v937
        %v969 = vmul.f32 %v933, %v937
        %v970 = vadd.f32 %v870, %v938
        %v971 = vadd.f32 %v871, %v939
        %v972 = vadd.f32 %v872, %v940
        %v973 = vadd.f32 %v873, %v941
        %v974 = vadd.f32 %v874, %v942
        %v975 = vadd.f32 %v875, %v943
        %v976 = vadd.f32 %v876, %v944
        %v977 = vadd.f32 %v877, %v945
        %v978 = vadd.f32 %v878, %v946
        %v979 = vadd.f32 %v879, %v947
        %v980 = vadd.f32 %v880, %v948
        %v981 = vadd.f32 %v881, %v949
        %v982 = vadd.f32 %v882, %v950
        %v983 = vadd.f32 %v883, %v951
        %v984 = vadd.f32 %v884, %v952
        %v985 = vadd.f32 %v885, %v953
        %v986 = vadd.f32 %v886, %v954
        %v987 = vadd.f32 %v887, %v955
        %v988 = vadd.f32 %v888, %v956
        %v989 = vadd.f32 %v889, %v957
        %v990 = vadd.f32 %v890, %v958
        %v991 = vadd.f32 %v891, %v959
        %v992 = vadd.f32 %v892, %v960
        %v993 = vadd.f32 %v893, %v961
        %v994 = vadd.f32 %v894, %v962
        %v995 = vadd.f32 %v895, %v963
        %v996 = vadd.f32 %v896, %v964
        %v997 = vadd.f32 %v897, %v965
        %v998 = vadd.f32 %v898, %v966
        %v999 = vadd.f32 %v899, %v967
        %v1000 = vadd.f32 %v900, %v968
        %v1001 = vadd.f32 %v901, %v969
        %v1002 = vld [vmem:[%s469 + $0x2] sm:$0xff]
        %v1003 = vld [vmem:[%s469 + $0xa] sm:$0xff]
        %v1004 = vld [vmem:[%s469 + $0x1a] sm:$0xff]
        %v1005 = vld [vmem:[%s469 + $0x22] sm:$0xff]
        %v1006 = vld [vmem:[%s469 + $0x32] sm:$0xff]
        %v1007 = vld [vmem:[%s469 + $0x3a] sm:$0xff]
        %v1008 = vld [vmem:[%s469 + $0x4a] sm:$0xff]
        %v1009 = vld [vmem:[%s469 + $0x52] sm:$0xff]
        %v1010 = vld [vmem:[%s469 + $0x62] sm:$0xff]
        %v1011 = vld [vmem:[%s469 + $0x6a] sm:$0xff]
        %v1012 = vld [vmem:[%s469 + $0x7a] sm:$0xff]
        %v1013 = vld [vmem:[%s469 + $0x82] sm:$0xff]
        %v1014 = vld [vmem:[%s469 + $0x92] sm:$0xff]
        %v1015 = vld [vmem:[%s469 + $0x9a] sm:$0xff]
        %v1016 = vld [vmem:[%s469 + $0xaa] sm:$0xff]
        %v1017 = vld [vmem:[%s469 + $0xb2] sm:$0xff]
        %v1018 = vld [vmem:[%s469 + $0xc2] sm:$0xff]
        %v1019 = vld [vmem:[%s469 + $0xca] sm:$0xff]
        %v1020 = vld [vmem:[%s469 + $0xda] sm:$0xff]
        %v1021 = vld [vmem:[%s469 + $0xe2] sm:$0xff]
        %v1022 = vld [vmem:[%s469 + $0xf2] sm:$0xff]
        %v1023 = vld [vmem:[%s469 + $0xfa] sm:$0xff]
        %v1024 = vld [vmem:[%s469 + $0x10a] sm:$0xff]
        %v1025 = vld [vmem:[%s469 + $0x112] sm:$0xff]
        %v1026 = vld [vmem:[%s469 + $0x122] sm:$0xff]
        %v1027 = vld [vmem:[%s469 + $0x12a] sm:$0xff]
        %v1028 = vld [vmem:[%s469 + $0x13a] sm:$0xff]
        %v1029 = vld [vmem:[%s469 + $0x142] sm:$0xff]
        %v1030 = vld [vmem:[%s469 + $0x152] sm:$0xff]
        %v1031 = vld [vmem:[%s469 + $0x15a] sm:$0xff]
        %v1032 = vld [vmem:[%s469 + $0x16a] sm:$0xff]
        %v1033 = vld [vmem:[%s469 + $0x172] sm:$0xff]
        %v1034 = vlaneseq
        %v1035 = vshrl.u32 %v1034, 7
        %v1036 = vsub.s32 5, %v1035
        %v1037 = vrot.slane %v423, %v1036
        %v1038 = vmul.f32 %v1002, %v1037
        %v1039 = vmul.f32 %v1003, %v1037
        %v1040 = vmul.f32 %v1004, %v1037
        %v1041 = vmul.f32 %v1005, %v1037
        %v1042 = vmul.f32 %v1006, %v1037
        %v1043 = vmul.f32 %v1007, %v1037
        %v1044 = vmul.f32 %v1008, %v1037
        %v1045 = vmul.f32 %v1009, %v1037
        %v1046 = vmul.f32 %v1010, %v1037
        %v1047 = vmul.f32 %v1011, %v1037
        %v1048 = vmul.f32 %v1012, %v1037
        %v1049 = vmul.f32 %v1013, %v1037
        %v1050 = vmul.f32 %v1014, %v1037
        %v1051 = vmul.f32 %v1015, %v1037
        %v1052 = vmul.f32 %v1016, %v1037
        %v1053 = vmul.f32 %v1017, %v1037
        %v1054 = vmul.f32 %v1018, %v1037
        %v1055 = vmul.f32 %v1019, %v1037
        %v1056 = vmul.f32 %v1020, %v1037
        %v1057 = vmul.f32 %v1021, %v1037
        %v1058 = vmul.f32 %v1022, %v1037
        %v1059 = vmul.f32 %v1023, %v1037
        %v1060 = vmul.f32 %v1024, %v1037
        %v1061 = vmul.f32 %v1025, %v1037
        %v1062 = vmul.f32 %v1026, %v1037
        %v1063 = vmul.f32 %v1027, %v1037
        %v1064 = vmul.f32 %v1028, %v1037
        %v1065 = vmul.f32 %v1029, %v1037
        %v1066 = vmul.f32 %v1030, %v1037
        %v1067 = vmul.f32 %v1031, %v1037
        %v1068 = vmul.f32 %v1032, %v1037
        %v1069 = vmul.f32 %v1033, %v1037
        %v1070 = vadd.f32 %v970, %v1038
        %v1071 = vadd.f32 %v971, %v1039
        %v1072 = vadd.f32 %v972, %v1040
        %v1073 = vadd.f32 %v973, %v1041
        %v1074 = vadd.f32 %v974, %v1042
        %v1075 = vadd.f32 %v975, %v1043
        %v1076 = vadd.f32 %v976, %v1044
        %v1077 = vadd.f32 %v977, %v1045
        %v1078 = vadd.f32 %v978, %v1046
        %v1079 = vadd.f32 %v979, %v1047
        %v1080 = vadd.f32 %v980, %v1048
        %v1081 = vadd.f32 %v981, %v1049
        %v1082 = vadd.f32 %v982, %v1050
        %v1083 = vadd.f32 %v983, %v1051
        %v1084 = vadd.f32 %v984, %v1052
        %v1085 = vadd.f32 %v985, %v1053
        %v1086 = vadd.f32 %v986, %v1054
        %v1087 = vadd.f32 %v987, %v1055
        %v1088 = vadd.f32 %v988, %v1056
        %v1089 = vadd.f32 %v989, %v1057
        %v1090 = vadd.f32 %v990, %v1058
        %v1091 = vadd.f32 %v991, %v1059
        %v1092 = vadd.f32 %v992, %v1060
        %v1093 = vadd.f32 %v993, %v1061
        %v1094 = vadd.f32 %v994, %v1062
        %v1095 = vadd.f32 %v995, %v1063
        %v1096 = vadd.f32 %v996, %v1064
        %v1097 = vadd.f32 %v997, %v1065
        %v1098 = vadd.f32 %v998, %v1066
        %v1099 = vadd.f32 %v999, %v1067
        %v1100 = vadd.f32 %v1000, %v1068
        %v1101 = vadd.f32 %v1001, %v1069
        %s1102 = scalar_lea.vmem [#allocation2], 48
        %v1103 = vld [vmem:[%s1102] sm:$0xff]
        %v1104 = vld [vmem:[%s1102 + $0x8] sm:$0xff]
        %v1105 = vld [vmem:[%s1102 + $0x18] sm:$0xff]
        %v1106 = vld [vmem:[%s1102 + $0x20] sm:$0xff]
        %v1107 = vld [vmem:[%s1102 + $0x30] sm:$0xff]
        %v1108 = vld [vmem:[%s1102 + $0x38] sm:$0xff]
        %v1109 = vld [vmem:[%s1102 + $0x48] sm:$0xff]
        %v1110 = vld [vmem:[%s1102 + $0x50] sm:$0xff]
        %v1111 = vld [vmem:[%s1102 + $0x60] sm:$0xff]
        %v1112 = vld [vmem:[%s1102 + $0x68] sm:$0xff]
        %v1113 = vld [vmem:[%s1102 + $0x78] sm:$0xff]
        %v1114 = vld [vmem:[%s1102 + $0x80] sm:$0xff]
        %v1115 = vld [vmem:[%s1102 + $0x90] sm:$0xff]
        %v1116 = vld [vmem:[%s1102 + $0x98] sm:$0xff]
        %v1117 = vld [vmem:[%s1102 + $0xa8] sm:$0xff]
        %v1118 = vld [vmem:[%s1102 + $0xb0] sm:$0xff]
        %v1119 = vld [vmem:[%s1102 + $0xc0] sm:$0xff]
        %v1120 = vld [vmem:[%s1102 + $0xc8] sm:$0xff]
        %v1121 = vld [vmem:[%s1102 + $0xd8] sm:$0xff]
        %v1122 = vld [vmem:[%s1102 + $0xe0] sm:$0xff]
        %v1123 = vld [vmem:[%s1102 + $0xf0] sm:$0xff]
        %v1124 = vld [vmem:[%s1102 + $0xf8] sm:$0xff]
        %v1125 = vld [vmem:[%s1102 + $0x108] sm:$0xff]
        %v1126 = vld [vmem:[%s1102 + $0x110] sm:$0xff]
        %v1127 = vld [vmem:[%s1102 + $0x120] sm:$0xff]
        %v1128 = vld [vmem:[%s1102 + $0x128] sm:$0xff]
        %v1129 = vld [vmem:[%s1102 + $0x138] sm:$0xff]
        %v1130 = vld [vmem:[%s1102 + $0x140] sm:$0xff]
        %v1131 = vld [vmem:[%s1102 + $0x150] sm:$0xff]
        %v1132 = vld [vmem:[%s1102 + $0x158] sm:$0xff]
        %v1133 = vld [vmem:[%s1102 + $0x168] sm:$0xff]
        %v1134 = vld [vmem:[%s1102 + $0x170] sm:$0xff]
        %v1135 = vlaneseq
        %v1136 = vshrl.u32 %v1135, 7
        %v1137 = vsub.s32 6, %v1136
        %v1138 = vrot.slane %v423, %v1137
        %v1139 = vmul.f32 %v1103, %v1138
        %v1140 = vmul.f32 %v1104, %v1138
        %v1141 = vmul.f32 %v1105, %v1138
        %v1142 = vmul.f32 %v1106, %v1138
        %v1143 = vmul.f32 %v1107, %v1138
        %v1144 = vmul.f32 %v1108, %v1138
        %v1145 = vmul.f32 %v1109, %v1138
        %v1146 = vmul.f32 %v1110, %v1138
        %v1147 = vmul.f32 %v1111, %v1138
        %v1148 = vmul.f32 %v1112, %v1138
        %v1149 = vmul.f32 %v1113, %v1138
        %v1150 = vmul.f32 %v1114, %v1138
        %v1151 = vmul.f32 %v1115, %v1138
        %v1152 = vmul.f32 %v1116, %v1138
        %v1153 = vmul.f32 %v1117, %v1138
        %v1154 = vmul.f32 %v1118, %v1138
        %v1155 = vmul.f32 %v1119, %v1138
        %v1156 = vmul.f32 %v1120, %v1138
        %v1157 = vmul.f32 %v1121, %v1138
        %v1158 = vmul.f32 %v1122, %v1138
        %v1159 = vmul.f32 %v1123, %v1138
        %v1160 = vmul.f32 %v1124, %v1138
        %v1161 = vmul.f32 %v1125, %v1138
        %v1162 = vmul.f32 %v1126, %v1138
        %v1163 = vmul.f32 %v1127, %v1138
        %v1164 = vmul.f32 %v1128, %v1138
        %v1165 = vmul.f32 %v1129, %v1138
        %v1166 = vmul.f32 %v1130, %v1138
        %v1167 = vmul.f32 %v1131, %v1138
        %v1168 = vmul.f32 %v1132, %v1138
        %v1169 = vmul.f32 %v1133, %v1138
        %v1170 = vmul.f32 %v1134, %v1138
        %v1171 = vadd.f32 %v1070, %v1139
        %v1172 = vadd.f32 %v1071, %v1140
        %v1173 = vadd.f32 %v1072, %v1141
        %v1174 = vadd.f32 %v1073, %v1142
        %v1175 = vadd.f32 %v1074, %v1143
        %v1176 = vadd.f32 %v1075, %v1144
        %v1177 = vadd.f32 %v1076, %v1145
        %v1178 = vadd.f32 %v1077, %v1146
        %v1179 = vadd.f32 %v1078, %v1147
        %v1180 = vadd.f32 %v1079, %v1148
        %v1181 = vadd.f32 %v1080, %v1149
        %v1182 = vadd.f32 %v1081, %v1150
        %v1183 = vadd.f32 %v1082, %v1151
        %v1184 = vadd.f32 %v1083, %v1152
        %v1185 = vadd.f32 %v1084, %v1153
        %v1186 = vadd.f32 %v1085, %v1154
        %v1187 = vadd.f32 %v1086, %v1155
        %v1188 = vadd.f32 %v1087, %v1156
        %v1189 = vadd.f32 %v1088, %v1157
        %v1190 = vadd.f32 %v1089, %v1158
        %v1191 = vadd.f32 %v1090, %v1159
        %v1192 = vadd.f32 %v1091, %v1160
        %v1193 = vadd.f32 %v1092, %v1161
        %v1194 = vadd.f32 %v1093, %v1162
        %v1195 = vadd.f32 %v1094, %v1163
        %v1196 = vadd.f32 %v1095, %v1164
        %v1197 = vadd.f32 %v1096, %v1165
        %v1198 = vadd.f32 %v1097, %v1166
        %v1199 = vadd.f32 %v1098, %v1167
        %v1200 = vadd.f32 %v1099, %v1168
        %v1201 = vadd.f32 %v1100, %v1169
        %v1202 = vadd.f32 %v1101, %v1170
        %v1203 = vld [vmem:[%s1102 + $0x1] sm:$0xff]
        %v1204 = vld [vmem:[%s1102 + $0x9] sm:$0xff]
        %v1205 = vld [vmem:[%s1102 + $0x19] sm:$0xff]
        %v1206 = vld [vmem:[%s1102 + $0x21] sm:$0xff]
        %v1207 = vld [vmem:[%s1102 + $0x31] sm:$0xff]
        %v1208 = vld [vmem:[%s1102 + $0x39] sm:$0xff]
        %v1209 = vld [vmem:[%s1102 + $0x49] sm:$0xff]
        %v1210 = vld [vmem:[%s1102 + $0x51] sm:$0xff]
        %v1211 = vld [vmem:[%s1102 + $0x61] sm:$0xff]
        %v1212 = vld [vmem:[%s1102 + $0x69] sm:$0xff]
        %v1213 = vld [vmem:[%s1102 + $0x79] sm:$0xff]
        %v1214 = vld [vmem:[%s1102 + $0x81] sm:$0xff]
        %v1215 = vld [vmem:[%s1102 + $0x91] sm:$0xff]
        %v1216 = vld [vmem:[%s1102 + $0x99] sm:$0xff]
        %v1217 = vld [vmem:[%s1102 + $0xa9] sm:$0xff]
        %v1218 = vld [vmem:[%s1102 + $0xb1] sm:$0xff]
        %v1219 = vld [vmem:[%s1102 + $0xc1] sm:$0xff]
        %v1220 = vld [vmem:[%s1102 + $0xc9] sm:$0xff]
        %v1221 = vld [vmem:[%s1102 + $0xd9] sm:$0xff]
        %v1222 = vld [vmem:[%s1102 + $0xe1] sm:$0xff]
        %v1223 = vld [vmem:[%s1102 + $0xf1] sm:$0xff]
        %v1224 = vld [vmem:[%s1102 + $0xf9] sm:$0xff]
        %v1225 = vld [vmem:[%s1102 + $0x109] sm:$0xff]
        %v1226 = vld [vmem:[%s1102 + $0x111] sm:$0xff]
        %v1227 = vld [vmem:[%s1102 + $0x121] sm:$0xff]
        %v1228 = vld [vmem:[%s1102 + $0x129] sm:$0xff]
        %v1229 = vld [vmem:[%s1102 + $0x139] sm:$0xff]
        %v1230 = vld [vmem:[%s1102 + $0x141] sm:$0xff]
        %v1231 = vld [vmem:[%s1102 + $0x151] sm:$0xff]
        %v1232 = vld [vmem:[%s1102 + $0x159] sm:$0xff]
        %v1233 = vld [vmem:[%s1102 + $0x169] sm:$0xff]
        %v1234 = vld [vmem:[%s1102 + $0x171] sm:$0xff]
        %v1235 = vlaneseq
        %v1236 = vshrl.u32 %v1235, 7
        %v1237 = vsub.s32 7, %v1236
        %v1238 = vrot.slane %v423, %v1237
        %v1239 = vmul.f32 %v1203, %v1238
        %v1240 = vmul.f32 %v1204, %v1238
        %v1241 = vmul.f32 %v1205, %v1238
        %v1242 = vmul.f32 %v1206, %v1238
        %v1243 = vmul.f32 %v1207, %v1238
        %v1244 = vmul.f32 %v1208, %v1238
        %v1245 = vmul.f32 %v1209, %v1238
        %v1246 = vmul.f32 %v1210, %v1238
        %v1247 = vmul.f32 %v1211, %v1238
        %v1248 = vmul.f32 %v1212, %v1238
        %v1249 = vmul.f32 %v1213, %v1238
        %v1250 = vmul.f32 %v1214, %v1238
        %v1251 = vmul.f32 %v1215, %v1238
        %v1252 = vmul.f32 %v1216, %v1238
        %v1253 = vmul.f32 %v1217, %v1238
        %v1254 = vmul.f32 %v1218, %v1238
        %v1255 = vmul.f32 %v1219, %v1238
        %v1256 = vmul.f32 %v1220, %v1238
        %v1257 = vmul.f32 %v1221, %v1238
        %v1258 = vmul.f32 %v1222, %v1238
        %v1259 = vmul.f32 %v1223, %v1238
        %v1260 = vmul.f32 %v1224, %v1238
        %v1261 = vmul.f32 %v1225, %v1238
        %v1262 = vmul.f32 %v1226, %v1238
        %v1263 = vmul.f32 %v1227, %v1238
        %v1264 = vmul.f32 %v1228, %v1238
        %v1265 = vmul.f32 %v1229, %v1238
        %v1266 = vmul.f32 %v1230, %v1238
        %v1267 = vmul.f32 %v1231, %v1238
        %v1268 = vmul.f32 %v1232, %v1238
        %v1269 = vmul.f32 %v1233, %v1238
        %v1270 = vmul.f32 %v1234, %v1238
        %v1271 = vadd.f32 %v1171, %v1239
        %v1272 = vadd.f32 %v1172, %v1240
        %v1273 = vadd.f32 %v1173, %v1241
        %v1274 = vadd.f32 %v1174, %v1242
        %v1275 = vadd.f32 %v1175, %v1243
        %v1276 = vadd.f32 %v1176, %v1244
        %v1277 = vadd.f32 %v1177, %v1245
        %v1278 = vadd.f32 %v1178, %v1246
        %v1279 = vadd.f32 %v1179, %v1247
        %v1280 = vadd.f32 %v1180, %v1248
        %v1281 = vadd.f32 %v1181, %v1249
        %v1282 = vadd.f32 %v1182, %v1250
        %v1283 = vadd.f32 %v1183, %v1251
        %v1284 = vadd.f32 %v1184, %v1252
        %v1285 = vadd.f32 %v1185, %v1253
        %v1286 = vadd.f32 %v1186, %v1254
        %v1287 = vadd.f32 %v1187, %v1255
        %v1288 = vadd.f32 %v1188, %v1256
        %v1289 = vadd.f32 %v1189, %v1257
        %v1290 = vadd.f32 %v1190, %v1258
        %v1291 = vadd.f32 %v1191, %v1259
        %v1292 = vadd.f32 %v1192, %v1260
        %v1293 = vadd.f32 %v1193, %v1261
        %v1294 = vadd.f32 %v1194, %v1262
        %v1295 = vadd.f32 %v1195, %v1263
        %v1296 = vadd.f32 %v1196, %v1264
        %v1297 = vadd.f32 %v1197, %v1265
        %v1298 = vadd.f32 %v1198, %v1266
        %v1299 = vadd.f32 %v1199, %v1267
        %v1300 = vadd.f32 %v1200, %v1268
        %v1301 = vadd.f32 %v1201, %v1269
        %v1302 = vadd.f32 %v1202, %v1270
        %v1303 = vld [vmem:[%s1102 + $0x2] sm:$0xff]
        %v1304 = vld [vmem:[%s1102 + $0xa] sm:$0xff]
        %v1305 = vld [vmem:[%s1102 + $0x1a] sm:$0xff]
        %v1306 = vld [vmem:[%s1102 + $0x22] sm:$0xff]
        %v1307 = vld [vmem:[%s1102 + $0x32] sm:$0xff]
        %v1308 = vld [vmem:[%s1102 + $0x3a] sm:$0xff]
        %v1309 = vld [vmem:[%s1102 + $0x4a] sm:$0xff]
        %v1310 = vld [vmem:[%s1102 + $0x52] sm:$0xff]
        %v1311 = vld [vmem:[%s1102 + $0x62] sm:$0xff]
        %v1312 = vld [vmem:[%s1102 + $0x6a] sm:$0xff]
        %v1313 = vld [vmem:[%s1102 + $0x7a] sm:$0xff]
        %v1314 = vld [vmem:[%s1102 + $0x82] sm:$0xff]
        %v1315 = vld [vmem:[%s1102 + $0x92] sm:$0xff]
        %v1316 = vld [vmem:[%s1102 + $0x9a] sm:$0xff]
        %v1317 = vld [vmem:[%s1102 + $0xaa] sm:$0xff]
        %v1318 = vld [vmem:[%s1102 + $0xb2] sm:$0xff]
        %v1319 = vld [vmem:[%s1102 + $0xc2] sm:$0xff]
        %v1320 = vld [vmem:[%s1102 + $0xca] sm:$0xff]
        %v1321 = vld [vmem:[%s1102 + $0xda] sm:$0xff]
        %v1322 = vld [vmem:[%s1102 + $0xe2] sm:$0xff]
        %v1323 = vld [vmem:[%s1102 + $0xf2] sm:$0xff]
        %v1324 = vld [vmem:[%s1102 + $0xfa] sm:$0xff]
        %v1325 = vld [vmem:[%s1102 + $0x10a] sm:$0xff]
        %v1326 = vld [vmem:[%s1102 + $0x112] sm:$0xff]
        %v1327 = vld [vmem:[%s1102 + $0x122] sm:$0xff]
        %v1328 = vld [vmem:[%s1102 + $0x12a] sm:$0xff]
        %v1329 = vld [vmem:[%s1102 + $0x13a] sm:$0xff]
        %v1330 = vld [vmem:[%s1102 + $0x142] sm:$0xff]
        %v1331 = vld [vmem:[%s1102 + $0x152] sm:$0xff]
        %v1332 = vld [vmem:[%s1102 + $0x15a] sm:$0xff]
        %v1333 = vld [vmem:[%s1102 + $0x16a] sm:$0xff]
        %v1334 = vld [vmem:[%s1102 + $0x172] sm:$0xff]
        %v1335 = vlaneseq
        %v1336 = vshrl.u32 %v1335, 7
        %v1337 = vsub.s32 0, %v1336
        %v1338 = vrot.slane %v424, %v1337
        %v1339 = vmul.f32 %v1303, %v1338
        %v1340 = vmul.f32 %v1304, %v1338
        %v1341 = vmul.f32 %v1305, %v1338
        %v1342 = vmul.f32 %v1306, %v1338
        %v1343 = vmul.f32 %v1307, %v1338
        %v1344 = vmul.f32 %v1308, %v1338
        %v1345 = vmul.f32 %v1309, %v1338
        %v1346 = vmul.f32 %v1310, %v1338
        %v1347 = vmul.f32 %v1311, %v1338
        %v1348 = vmul.f32 %v1312, %v1338
        %v1349 = vmul.f32 %v1313, %v1338
        %v1350 = vmul.f32 %v1314, %v1338
        %v1351 = vmul.f32 %v1315, %v1338
        %v1352 = vmul.f32 %v1316, %v1338
        %v1353 = vmul.f32 %v1317, %v1338
        %v1354 = vmul.f32 %v1318, %v1338
        %v1355 = vmul.f32 %v1319, %v1338
        %v1356 = vmul.f32 %v1320, %v1338
        %v1357 = vmul.f32 %v1321, %v1338
        %v1358 = vmul.f32 %v1322, %v1338
        %v1359 = vmul.f32 %v1323, %v1338
        %v1360 = vmul.f32 %v1324, %v1338
        %v1361 = vmul.f32 %v1325, %v1338
        %v1362 = vmul.f32 %v1326, %v1338
        %v1363 = vmul.f32 %v1327, %v1338
        %v1364 = vmul.f32 %v1328, %v1338
        %v1365 = vmul.f32 %v1329, %v1338
        %v1366 = vmul.f32 %v1330, %v1338
        %v1367 = vmul.f32 %v1331, %v1338
        %v1368 = vmul.f32 %v1332, %v1338
        %v1369 = vmul.f32 %v1333, %v1338
        %v1370 = vmul.f32 %v1334, %v1338
        %v1371 = vadd.f32 %v1271, %v1339
        %v1372 = vadd.f32 %v1272, %v1340
        %v1373 = vadd.f32 %v1273, %v1341
        %v1374 = vadd.f32 %v1274, %v1342
        %v1375 = vadd.f32 %v1275, %v1343
        %v1376 = vadd.f32 %v1276, %v1344
        %v1377 = vadd.f32 %v1277, %v1345
        %v1378 = vadd.f32 %v1278, %v1346
        %v1379 = vadd.f32 %v1279, %v1347
        %v1380 = vadd.f32 %v1280, %v1348
        %v1381 = vadd.f32 %v1281, %v1349
        %v1382 = vadd.f32 %v1282, %v1350
        %v1383 = vadd.f32 %v1283, %v1351
        %v1384 = vadd.f32 %v1284, %v1352
        %v1385 = vadd.f32 %v1285, %v1353
        %v1386 = vadd.f32 %v1286, %v1354
        %v1387 = vadd.f32 %v1287, %v1355
        %v1388 = vadd.f32 %v1288, %v1356
        %v1389 = vadd.f32 %v1289, %v1357
        %v1390 = vadd.f32 %v1290, %v1358
        %v1391 = vadd.f32 %v1291, %v1359
        %v1392 = vadd.f32 %v1292, %v1360
        %v1393 = vadd.f32 %v1293, %v1361
        %v1394 = vadd.f32 %v1294, %v1362
        %v1395 = vadd.f32 %v1295, %v1363
        %v1396 = vadd.f32 %v1296, %v1364
        %v1397 = vadd.f32 %v1297, %v1365
        %v1398 = vadd.f32 %v1298, %v1366
        %v1399 = vadd.f32 %v1299, %v1367
        %v1400 = vadd.f32 %v1300, %v1368
        %v1401 = vadd.f32 %v1301, %v1369
        %v1402 = vadd.f32 %v1302, %v1370
        %v1404 = vlaneseq
        %v1405 = vshrl.u32 %v1404, 7
        %v1406 = vsub.s32 0, %v1405
        %v1407 = vrot.slane %v427, %v1406
        %v1409 = vadd.f32 %v1371, %v1407
        %v1410 = vadd.f32 %v1372, %v1407
        %v1411 = vadd.f32 %v1373, %v1407
        %v1412 = vadd.f32 %v1374, %v1407
        %v1413 = vadd.f32 %v1375, %v1407
        %v1414 = vadd.f32 %v1376, %v1407
        %v1415 = vadd.f32 %v1377, %v1407
        %v1416 = vadd.f32 %v1378, %v1407
        %v1417 = vadd.f32 %v1379, %v1407
        %v1418 = vadd.f32 %v1380, %v1407
        %v1419 = vadd.f32 %v1381, %v1407
        %v1420 = vadd.f32 %v1382, %v1407
        %v1421 = vadd.f32 %v1383, %v1407
        %v1422 = vadd.f32 %v1384, %v1407
        %v1423 = vadd.f32 %v1385, %v1407
        %v1424 = vadd.f32 %v1386, %v1407
        %v1425 = vadd.f32 %v1387, %v1407
        %v1426 = vadd.f32 %v1388, %v1407
        %v1427 = vadd.f32 %v1389, %v1407
        %v1428 = vadd.f32 %v1390, %v1407
        %v1429 = vadd.f32 %v1391, %v1407
        %v1430 = vadd.f32 %v1392, %v1407
        %v1431 = vadd.f32 %v1393, %v1407
        %v1432 = vadd.f32 %v1394, %v1407
        %v1433 = vadd.f32 %v1395, %v1407
        %v1434 = vadd.f32 %v1396, %v1407
        %v1435 = vadd.f32 %v1397, %v1407
        %v1436 = vadd.f32 %v1398, %v1407
        %v1437 = vadd.f32 %v1399, %v1407
        %v1438 = vadd.f32 %v1400, %v1407
        %v1439 = vadd.f32 %v1401, %v1407
        %v1440 = vadd.f32 %v1402, %v1407
        %v1441 = vmax.f32 %v1409, 0.0
        %v1442 = vmax.f32 %v1410, 0.0
        %v1443 = vmax.f32 %v1411, 0.0
        %v1444 = vmax.f32 %v1412, 0.0
        %v1445 = vmax.f32 %v1413, 0.0
        %v1446 = vmax.f32 %v1414, 0.0
        %v1447 = vmax.f32 %v1415, 0.0
        %v1448 = vmax.f32 %v1416, 0.0
        %v1449 = vmax.f32 %v1417, 0.0
        %v1450 = vmax.f32 %v1418, 0.0
        %v1451 = vmax.f32 %v1419, 0.0
        %v1452 = vmax.f32 %v1420, 0.0
        %v1453 = vmax.f32 %v1421, 0.0
        %v1454 = vmax.f32 %v1422, 0.0
        %v1455 = vmax.f32 %v1423, 0.0
        %v1456 = vmax.f32 %v1424, 0.0
        %v1457 = vmax.f32 %v1425, 0.0
        %v1458 = vmax.f32 %v1426, 0.0
        %v1459 = vmax.f32 %v1427, 0.0
        %v1460 = vmax.f32 %v1428, 0.0
        %v1461 = vmax.f32 %v1429, 0.0
        %v1462 = vmax.f32 %v1430, 0.0
        %v1463 = vmax.f32 %v1431, 0.0
        %v1464 = vmax.f32 %v1432, 0.0
        %v1465 = vmax.f32 %v1433, 0.0
        %v1466 = vmax.f32 %v1434, 0.0
        %v1467 = vmax.f32 %v1435, 0.0
        %v1468 = vmax.f32 %v1436, 0.0
        %v1469 = vmax.f32 %v1437, 0.0
        %v1470 = vmax.f32 %v1438, 0.0
        %v1471 = vmax.f32 %v1439, 0.0
        %v1472 = vmax.f32 %v1440, 0.0
        %v1474 = vlaneseq
        %v1475 = vshrl.u32 %v1474, 7
        %v1476 = vsub.s32 0, %v1475
        %v1477 = vrot.slane %v428, %v1476
        %v1480 = vsel %vm331, %v1441, 0
        %v1483 = vsel %vm331, %v1442, 0
        %v1486 = vsel %vm331, %v1443, 0
        %v1489 = vsel %vm331, %v1444, 0
        %v1492 = vsel %vm331, %v1445, 0
        %v1495 = vsel %vm331, %v1446, 0
        %v1498 = vsel %vm331, %v1447, 0
        %v1501 = vsel %vm331, %v1448, 0
        %v1504 = vsel %vm331, %v1449, 0
        %v1507 = vsel %vm331, %v1450, 0
        %v1510 = vsel %vm331, %v1451, 0
        %v1513 = vsel %vm331, %v1452, 0
        %v1516 = vsel %vm331, %v1453, 0
        %v1519 = vsel %vm331, %v1454, 0
        %v1522 = vsel %vm331, %v1455, 0
        %v1525 = vsel %vm331, %v1456, 0
        %v1528 = vsel %vm331, %v1457, 0
        %v1531 = vsel %vm331, %v1458, 0
        %v1534 = vsel %vm331, %v1459, 0
        %v1537 = vsel %vm331, %v1460, 0
        %v1540 = vsel %vm331, %v1461, 0
        %v1543 = vsel %vm331, %v1462, 0
        %v1546 = vsel %vm331, %v1463, 0
        %v1549 = vsel %vm331, %v1464, 0
        %v1552 = vsel %vm331, %v1465, 0
        %v1555 = vsel %vm331, %v1466, 0
        %v1558 = vsel %vm331, %v1467, 0
        %v1561 = vsel %vm331, %v1468, 0
        %v1564 = vsel %vm331, %v1469, 0
        %v1567 = vsel %vm331, %v1470, 0
        %v1570 = vsel %vm331, %v1471, 0
        %v1573 = vsel %vm331, %v1472, 0
        %1575 = vmatprep.subr.mxu0 0.0
        %1576 = vmatpush1.msra.mxu0 %v431
        %1577 = vmatprep.subr.mxu0 0.0
        %1578 = vmatpush1.msra.mxu0 %v432
        %1579 = vmatprep.subr.mxu0 0.0
        %1580 = vmatpush1.msra.mxu0 0.0
        %1581 = vmatprep.subr.mxu0 0.0
        %1582 = vmatpush1.msra.mxu0 0.0
        %1583 = vmatprep.subr.mxu0 0.0
        %1584 = vmatpush1.msra.mxu0 0.0
        %1585 = vmatprep.subr.mxu0 0.0
        %1586 = vmatpush1.msra.mxu0 0.0
        %1587 = vmatprep.subr.mxu0 0.0
        %1588 = vmatpush1.msra.mxu0 0.0
        %1589 = vmatprep.subr.mxu0 0.0
        %1590 = vmatpush1.msra.mxu0 0.0
        %1591 = vmatprep.subr.mxu0 0.0
        %1592 = vmatpush1.msra.mxu0 0.0
        %1593 = vmatprep.subr.mxu0 0.0
        %1594 = vmatpush1.msra.mxu0 0.0
        %1595 = vmatprep.subr.mxu0 0.0
        %1596 = vmatpush1.msra.mxu0 0.0
        %1597 = vmatprep.subr.mxu0 0.0
        %1598 = vmatpush1.msra.mxu0 0.0
        %1599 = vmatprep.subr.mxu0 0.0
        %1600 = vmatpush1.msra.mxu0 0.0
        %1601 = vmatprep.subr.mxu0 0.0
        %1602 = vmatpush1.msra.mxu0 0.0
        %1603 = vmatprep.subr.mxu0 0.0
        %1604 = vmatpush1.msra.mxu0 0.0
        %1605 = vmatprep.subr.mxu0 0.0
        %1606 = vmatpush1.msra.mxu0 0.0
        %1607 = vmatprep.subr.mxu0 0.0
        %1608 = vmatpush1.msra.mxu0 0.0
        %1609 = vmatprep.subr.mxu0 0.0
        %1610 = vmatpush1.msra.mxu0 0.0
        %1611 = vmatprep.subr.mxu0 0.0
        %1612 = vmatpush1.msra.mxu0 0.0
        %1613 = vmatprep.subr.mxu0 0.0
        %1614 = vmatpush1.msra.mxu0 0.0
        %1615 = vmatprep.subr.mxu0 0.0
        %1616 = vmatpush1.msra.mxu0 0.0
        %1617 = vmatprep.subr.mxu0 0.0
        %1618 = vmatpush1.msra.mxu0 0.0
        %1619 = vmatprep.subr.mxu0 0.0
        %1620 = vmatpush1.msra.mxu0 0.0
        %1621 = vmatprep.subr.mxu0 0.0
        %1622 = vmatpush1.msra.mxu0 0.0
        %1623 = vmatprep.subr.mxu0 0.0
        %1624 = vmatpush1.msra.mxu0 0.0
        %1625 = vmatprep.subr.mxu0 0.0
        %1626 = vmatpush1.msra.mxu0 0.0
        %1627 = vmatprep.subr.mxu0 0.0
        %1628 = vmatpush1.msra.mxu0 0.0
        %1629 = vmatprep.subr.mxu0 0.0
        %1630 = vmatpush1.msra.mxu0 0.0
        %1631 = vmatprep.subr.mxu0 0.0
        %1632 = vmatpush1.msra.mxu0 0.0
        %1633 = vmatprep.subr.mxu0 0.0
        %1634 = vmatpush1.msra.mxu0 0.0
        %1635 = vmatprep.subr.mxu0 0.0
        %1636 = vmatpush1.msra.mxu0 0.0
        %1637 = vmatprep.subr.mxu0 0.0
        %1638 = vmatpush1.msra.mxu0 0.0
        %1639 = vmatprep.mubr.f32.mxu0 0.0
        %1640 = vmatmul.mubr.f32.gmra.mrb[0].mxu0 %v1480
        %v1641 = vpop.f32.mrb[0].mxu0
        %v1642 = vadd.f32 %v1477, %v1641
        %v1643 = vpop.f32.mrb[0].mxu0
        %1644 = vmatprep.mubr.f32.mxu0 0.0
        %1645 = vmatmul.mubr.f32.gmra.mrb[0].mxu0 %v1483
        %v1646 = vpop.f32.mrb[0].mxu0
        %v1647 = vadd.f32 %v1477, %v1646
        %v1648 = vpop.f32.mrb[0].mxu0
        %1649 = vmatprep.mubr.f32.mxu0 0.0
        %1650 = vmatmul.mubr.f32.gmra.mrb[0].mxu0 %v1486
        %v1651 = vpop.f32.mrb[0].mxu0
        %v1652 = vadd.f32 %v1477, %v1651
        %v1653 = vpop.f32.mrb[0].mxu0
        %1654 = vmatprep.mubr.f32.mxu0 0.0
        %1655 = vmatmul.mubr.f32.gmra.mrb[0].mxu0 %v1489
        %v1656 = vpop.f32.mrb[0].mxu0
        %v1657 = vadd.f32 %v1477, %v1656
        %v1658 = vpop.f32.mrb[0].mxu0
        %1659 = vmatprep.mubr.f32.mxu0 0.0
        %1660 = vmatmul.mubr.f32.gmra.mrb[0].mxu0 %v1492
        %v1661 = vpop.f32.mrb[0].mxu0
        %v1662 = vadd.f32 %v1477, %v1661
        %v1663 = vpop.f32.mrb[0].mxu0
        %1664 = vmatprep.mubr.f32.mxu0 0.0
        %1665 = vmatmul.mubr.f32.gmra.mrb[0].mxu0 %v1495
        %v1666 = vpop.f32.mrb[0].mxu0
        %v1667 = vadd.f32 %v1477, %v1666
        %v1668 = vpop.f32.mrb[0].mxu0
        %1669 = vmatprep.mubr.f32.mxu0 0.0
        %1670 = vmatmul.mubr.f32.gmra.mrb[0].mxu0 %v1498
        %v1671 = vpop.f32.mrb[0].mxu0
        %v1672 = vadd.f32 %v1477, %v1671
        %v1673 = vpop.f32.mrb[0].mxu0
        %1674 = vmatprep.mubr.f32.mxu0 0.0
        %1675 = vmatmul.mubr.f32.gmra.mrb[0].mxu0 %v1501
        %v1676 = vpop.f32.mrb[0].mxu0
        %v1677 = vadd.f32 %v1477, %v1676
        %v1678 = vpop.f32.mrb[0].mxu0
        %1679 = vmatprep.mubr.f32.mxu0 0.0
        %1680 = vmatmul.mubr.f32.gmra.mrb[0].mxu0 %v1504
        %v1681 = vpop.f32.mrb[0].mxu0
        %v1682 = vadd.f32 %v1477, %v1681
        %v1683 = vpop.f32.mrb[0].mxu0
        %1684 = vmatprep.mubr.f32.mxu0 0.0
        %1685 = vmatmul.mubr.f32.gmra.mrb[0].mxu0 %v1507
        %v1686 = vpop.f32.mrb[0].mxu0
        %v1687 = vadd.f32 %v1477, %v1686
        %v1688 = vpop.f32.mrb[0].mxu0
        %1689 = vmatprep.mubr.f32.mxu0 0.0
        %1690 = vmatmul.mubr.f32.gmra.mrb[0].mxu0 %v1510
        %v1691 = vpop.f32.mrb[0].mxu0
        %v1692 = vadd.f32 %v1477, %v1691
        %v1693 = vpop.f32.mrb[0].mxu0
        %1694 = vmatprep.mubr.f32.mxu0 0.0
        %1695 = vmatmul.mubr.f32.gmra.mrb[0].mxu0 %v1513
        %v1696 = vpop.f32.mrb[0].mxu0
        %v1697 = vadd.f32 %v1477, %v1696
        %v1698 = vpop.f32.mrb[0].mxu0
        %1699 = vmatprep.mubr.f32.mxu0 0.0
        %1700 = vmatmul.mubr.f32.gmra.mrb[0].mxu0 %v1516
        %v1701 = vpop.f32.mrb[0].mxu0
        %v1702 = vadd.f32 %v1477, %v1701
        %v1703 = vpop.f32.mrb[0].mxu0
        %1704 = vmatprep.mubr.f32.mxu0 0.0
        %1705 = vmatmul.mubr.f32.gmra.mrb[0].mxu0 %v1519
        %v1706 = vpop.f32.mrb[0].mxu0
        %v1707 = vadd.f32 %v1477, %v1706
        %v1708 = vpop.f32.mrb[0].mxu0
        %1709 = vmatprep.mubr.f32.mxu0 0.0
        %1710 = vmatmul.mubr.f32.gmra.mrb[0].mxu0 %v1522
        %v1711 = vpop.f32.mrb[0].mxu0
        %v1712 = vadd.f32 %v1477, %v1711
        %v1713 = vpop.f32.mrb[0].mxu0
        %1714 = vmatprep.mubr.f32.mxu0 0.0
        %1715 = vmatmul.mubr.f32.gmra.mrb[0].mxu0 %v1525
        %v1716 = vpop.f32.mrb[0].mxu0
        %v1717 = vadd.f32 %v1477, %v1716
        %v1718 = vpop.f32.mrb[0].mxu0
        %1719 = vmatprep.mubr.f32.mxu0 0.0
        %1720 = vmatmul.mubr.f32.gmra.mrb[0].mxu0 %v1528
        %v1721 = vpop.f32.mrb[0].mxu0
        %v1722 = vadd.f32 %v1477, %v1721
        %v1723 = vpop.f32.mrb[0].mxu0
        %1724 = vmatprep.mubr.f32.mxu0 0.0
        %1725 = vmatmul.mubr.f32.gmra.mrb[0].mxu0 %v1531
        %v1726 = vpop.f32.mrb[0].mxu0
        %v1727 = vadd.f32 %v1477, %v1726
        %v1728 = vpop.f32.mrb[0].mxu0
        %1729 = vmatprep.mubr.f32.mxu0 0.0
        %1730 = vmatmul.mubr.f32.gmra.mrb[0].mxu0 %v1534
        %v1731 = vpop.f32.mrb[0].mxu0
        %v1732 = vadd.f32 %v1477, %v1731
        %v1733 = vpop.f32.mrb[0].mxu0
        %1734 = vmatprep.mubr.f32.mxu0 0.0
        %1735 = vmatmul.mubr.f32.gmra.mrb[0].mxu0 %v1537
        %v1736 = vpop.f32.mrb[0].mxu0
        %v1737 = vadd.f32 %v1477, %v1736
        %v1738 = vpop.f32.mrb[0].mxu0
        %1739 = vmatprep.mubr.f32.mxu0 0.0
        %1740 = vmatmul.mubr.f32.gmra.mrb[0].mxu0 %v1540
        %v1741 = vpop.f32.mrb[0].mxu0
        %v1742 = vadd.f32 %v1477, %v1741
        %v1743 = vpop.f32.mrb[0].mxu0
        %1744 = vmatprep.mubr.f32.mxu0 0.0
        %1745 = vmatmul.mubr.f32.gmra.mrb[0].mxu0 %v1543
        %v1746 = vpop.f32.mrb[0].mxu0
        %v1747 = vadd.f32 %v1477, %v1746
        %v1748 = vpop.f32.mrb[0].mxu0
        %1749 = vmatprep.mubr.f32.mxu0 0.0
        %1750 = vmatmul.mubr.f32.gmra.mrb[0].mxu0 %v1546
        %v1751 = vpop.f32.mrb[0].mxu0
        %v1752 = vadd.f32 %v1477, %v1751
        %v1753 = vpop.f32.mrb[0].mxu0
        %1754 = vmatprep.mubr.f32.mxu0 0.0
        %1755 = vmatmul.mubr.f32.gmra.mrb[0].mxu0 %v1549
        %v1756 = vpop.f32.mrb[0].mxu0
        %v1757 = vadd.f32 %v1477, %v1756
        %v1758 = vpop.f32.mrb[0].mxu0
        %1759 = vmatprep.mubr.f32.mxu0 0.0
        %1760 = vmatmul.mubr.f32.gmra.mrb[0].mxu0 %v1552
        %v1761 = vpop.f32.mrb[0].mxu0
        %v1762 = vadd.f32 %v1477, %v1761
        %v1763 = vpop.f32.mrb[0].mxu0
        %1764 = vmatprep.mubr.f32.mxu0 0.0
        %1765 = vmatmul.mubr.f32.gmra.mrb[0].mxu0 %v1555
        %v1766 = vpop.f32.mrb[0].mxu0
        %v1767 = vadd.f32 %v1477, %v1766
        %v1768 = vpop.f32.mrb[0].mxu0
        %1769 = vmatprep.mubr.f32.mxu0 0.0
        %1770 = vmatmul.mubr.f32.gmra.mrb[0].mxu0 %v1558
        %v1771 = vpop.f32.mrb[0].mxu0
        %v1772 = vadd.f32 %v1477, %v1771
        %v1773 = vpop.f32.mrb[0].mxu0
        %1774 = vmatprep.mubr.f32.mxu0 0.0
        %1775 = vmatmul.mubr.f32.gmra.mrb[0].mxu0 %v1561
        %v1776 = vpop.f32.mrb[0].mxu0
        %v1777 = vadd.f32 %v1477, %v1776
        %v1778 = vpop.f32.mrb[0].mxu0
        %1779 = vmatprep.mubr.f32.mxu0 0.0
        %1780 = vmatmul.mubr.f32.gmra.mrb[0].mxu0 %v1564
        %v1781 = vpop.f32.mrb[0].mxu0
        %v1782 = vadd.f32 %v1477, %v1781
        %v1783 = vpop.f32.mrb[0].mxu0
        %1784 = vmatprep.mubr.f32.mxu0 0.0
        %1785 = vmatmul.mubr.f32.gmra.mrb[0].mxu0 %v1567
        %v1786 = vpop.f32.mrb[0].mxu0
        %v1787 = vadd.f32 %v1477, %v1786
        %v1788 = vpop.f32.mrb[0].mxu0
        %1789 = vmatprep.mubr.f32.mxu0 0.0
        %1790 = vmatmul.mubr.f32.gmra.mrb[0].mxu0 %v1570
        %v1791 = vpop.f32.mrb[0].mxu0
        %v1792 = vadd.f32 %v1477, %v1791
        %v1793 = vpop.f32.mrb[0].mxu0
        %1794 = vmatprep.mubr.f32.mxu0 0.0
        %1795 = vmatmul.mubr.f32.gmra.mrb[0].mxu0 %v1573
        %v1796 = vpop.f32.mrb[0].mxu0
        %v1797 = vadd.f32 %v1477, %v1796
        %v1798 = vpop.f32.mrb[0].mxu0
        %1799 = vdwg.mxu0
        %v1800 = vmax.f32 %v1642, 0.0
        %v1801 = vmax.f32 %v1647, 0.0
        %v1802 = vmax.f32 %v1652, 0.0
        %v1803 = vmax.f32 %v1657, 0.0
        %v1804 = vmax.f32 %v1662, 0.0
        %v1805 = vmax.f32 %v1667, 0.0
        %v1806 = vmax.f32 %v1672, 0.0
        %v1807 = vmax.f32 %v1677, 0.0
        %v1808 = vmax.f32 %v1682, 0.0
        %v1809 = vmax.f32 %v1687, 0.0
        %v1810 = vmax.f32 %v1692, 0.0
        %v1811 = vmax.f32 %v1697, 0.0
        %v1812 = vmax.f32 %v1702, 0.0
        %v1813 = vmax.f32 %v1707, 0.0
        %v1814 = vmax.f32 %v1712, 0.0
        %v1815 = vmax.f32 %v1717, 0.0
        %v1816 = vmax.f32 %v1722, 0.0
        %v1817 = vmax.f32 %v1727, 0.0
        %v1818 = vmax.f32 %v1732, 0.0
        %v1819 = vmax.f32 %v1737, 0.0
        %v1820 = vmax.f32 %v1742, 0.0
        %v1821 = vmax.f32 %v1747, 0.0
        %v1822 = vmax.f32 %v1752, 0.0
        %v1823 = vmax.f32 %v1757, 0.0
        %v1824 = vmax.f32 %v1762, 0.0
        %v1825 = vmax.f32 %v1767, 0.0
        %v1826 = vmax.f32 %v1772, 0.0
        %v1827 = vmax.f32 %v1777, 0.0
        %v1828 = vmax.f32 %v1782, 0.0
        %v1829 = vmax.f32 %v1787, 0.0
        %v1830 = vmax.f32 %v1792, 0.0
        %v1831 = vmax.f32 %v1797, 0.0
        %s1832 = scalar_lea.vmem [#allocation3], 24
        %1833 = vst.msk [vmem:[%s1832 + $0x1] sm:$0xff] %vm377, %v1800
        %1834 = vst.msk [vmem:[%s1832 + $0x9] sm:$0xff] %vm377, %v1801
        %1835 = vst.msk [vmem:[%s1832 + $0x19] sm:$0xff] %vm377, %v1802
        %1836 = vst.msk [vmem:[%s1832 + $0x21] sm:$0xff] %vm377, %v1803
        %1837 = vst.msk [vmem:[%s1832 + $0x31] sm:$0xff] %vm377, %v1804
        %1838 = vst.msk [vmem:[%s1832 + $0x39] sm:$0xff] %vm377, %v1805
        %1839 = vst.msk [vmem:[%s1832 + $0x49] sm:$0xff] %vm377, %v1806
        %1840 = vst.msk [vmem:[%s1832 + $0x51] sm:$0xff] %vm377, %v1807
        %1841 = vst.msk [vmem:[%s1832 + $0x61] sm:$0xff] %vm377, %v1808
        %1842 = vst.msk [vmem:[%s1832 + $0x69] sm:$0xff] %vm377, %v1809
        %1843 = vst.msk [vmem:[%s1832 + $0x79] sm:$0xff] %vm377, %v1810
        %1844 = vst.msk [vmem:[%s1832 + $0x81] sm:$0xff] %vm377, %v1811
        %1845 = vst.msk [vmem:[%s1832 + $0x91] sm:$0xff] %vm377, %v1812
        %1846 = vst.msk [vmem:[%s1832 + $0x99] sm:$0xff] %vm377, %v1813
        %1847 = vst.msk [vmem:[%s1832 + $0xa9] sm:$0xff] %vm377, %v1814
        %1848 = vst.msk [vmem:[%s1832 + $0xb1] sm:$0xff] %vm377, %v1815
        %1849 = vst.msk [vmem:[%s1832 + $0xc1] sm:$0xff] %vm377, %v1816
        %1850 = vst.msk [vmem:[%s1832 + $0xc9] sm:$0xff] %vm377, %v1817
        %1851 = vst.msk [vmem:[%s1832 + $0xd9] sm:$0xff] %vm377, %v1818
        %1852 = vst.msk [vmem:[%s1832 + $0xe1] sm:$0xff] %vm377, %v1819
        %1853 = vst.msk [vmem:[%s1832 + $0xf1] sm:$0xff] %vm377, %v1820
        %1854 = vst.msk [vmem:[%s1832 + $0xf9] sm:$0xff] %vm377, %v1821
        %1855 = vst.msk [vmem:[%s1832 + $0x109] sm:$0xff] %vm377, %v1822
        %1856 = vst.msk [vmem:[%s1832 + $0x111] sm:$0xff] %vm377, %v1823
        %1857 = vst.msk [vmem:[%s1832 + $0x121] sm:$0xff] %vm377, %v1824
        %1858 = vst.msk [vmem:[%s1832 + $0x129] sm:$0xff] %vm377, %v1825
        %1859 = vst.msk [vmem:[%s1832 + $0x139] sm:$0xff] %vm377, %v1826
        %1860 = vst.msk [vmem:[%s1832 + $0x141] sm:$0xff] %vm377, %v1827
        %1861 = vst.msk [vmem:[%s1832 + $0x151] sm:$0xff] %vm377, %v1828
        %1862 = vst.msk [vmem:[%s1832 + $0x159] sm:$0xff] %vm377, %v1829
        %1863 = vst.msk [vmem:[%s1832 + $0x169] sm:$0xff] %vm377, %v1830
        %1864 = vst.msk [vmem:[%s1832 + $0x171] sm:$0xff] %vm377, %v1831
        %v1865 = vld [vmem:[#allocation3] ss:$2 sm:$0xff]
        %s1866 = scalar_lea.vmem [#allocation3], 16
        %v1867 = vld [vmem:[%s1866] ss:$2 sm:$0x1]
        %s1868 = scalar_lea.vmem [#allocation3], 48
        %v1869 = vld [vmem:[%s1868] ss:$2 sm:$0xff]
        %s1870 = scalar_lea.vmem [#allocation3], 64
        %v1871 = vld [vmem:[%s1870] ss:$2 sm:$0x1]
        %s1872 = scalar_lea.vmem [#allocation3], 96
        %v1873 = vld [vmem:[%s1872] ss:$2 sm:$0xff]
        %s1874 = scalar_lea.vmem [#allocation3], 112
        %v1875 = vld [vmem:[%s1874] ss:$2 sm:$0x1]
        %s1876 = scalar_lea.vmem [#allocation3], 144
        %v1877 = vld [vmem:[%s1876] ss:$2 sm:$0xff]
        %s1878 = scalar_lea.vmem [#allocation3], 160
        %v1879 = vld [vmem:[%s1878] ss:$2 sm:$0x1]
        %s1880 = scalar_lea.vmem [#allocation3], 192
        %v1881 = vld [vmem:[%s1880] ss:$2 sm:$0xff]
        %s1882 = scalar_lea.vmem [#allocation3], 208
        %v1883 = vld [vmem:[%s1882] ss:$2 sm:$0x1]
        %s1884 = scalar_lea.vmem [#allocation3], 240
        %v1885 = vld [vmem:[%s1884] ss:$2 sm:$0xff]
        %s1886 = scalar_lea.vmem [#allocation3], 256
        %v1887 = vld [vmem:[%s1886] ss:$2 sm:$0x1]
        %s1888 = scalar_lea.vmem [#allocation3], 288
        %v1889 = vld [vmem:[%s1888] ss:$2 sm:$0xff]
        %s1890 = scalar_lea.vmem [#allocation3], 304
        %v1891 = vld [vmem:[%s1890] ss:$2 sm:$0x1]
        %s1892 = scalar_lea.vmem [#allocation3], 336
        %v1893 = vld [vmem:[%s1892] ss:$2 sm:$0xff]
        %s1894 = scalar_lea.vmem [#allocation3], 352
        %v1895 = vld [vmem:[%s1894] ss:$2 sm:$0x1]
        %s1896 = scalar_lea.vmem [#allocation3], 384
        %v1897 = vld [vmem:[%s1896] ss:$2 sm:$0xff]
        %s1898 = scalar_lea.vmem [#allocation3], 400
        %v1899 = vld [vmem:[%s1898] ss:$2 sm:$0x1]
        %s1900 = scalar_lea.vmem [#allocation3], 1
        %v1901 = vld [vmem:[%s1900] ss:$2 sm:$0xff]
        %s1902 = scalar_lea.vmem [#allocation3], 49
        %v1903 = vld [vmem:[%s1902] ss:$2 sm:$0xff]
        %s1904 = scalar_lea.vmem [#allocation3], 97
        %v1905 = vld [vmem:[%s1904] ss:$2 sm:$0xff]
        %s1906 = scalar_lea.vmem [#allocation3], 145
        %v1907 = vld [vmem:[%s1906] ss:$2 sm:$0xff]
        %s1908 = scalar_lea.vmem [#allocation3], 193
        %v1909 = vld [vmem:[%s1908] ss:$2 sm:$0xff]
        %s1910 = scalar_lea.vmem [#allocation3], 241
        %v1911 = vld [vmem:[%s1910] ss:$2 sm:$0xff]
        %s1912 = scalar_lea.vmem [#allocation3], 289
        %v1913 = vld [vmem:[%s1912] ss:$2 sm:$0xff]
        %s1914 = scalar_lea.vmem [#allocation3], 337
        %v1915 = vld [vmem:[%s1914] ss:$2 sm:$0xff]
        %s1916 = scalar_lea.vmem [#allocation3], 385
        %v1917 = vld [vmem:[%s1916] ss:$2 sm:$0xff]
        %v1918 = vld [vmem:[%s1832] ss:$2 sm:$0xff]
        %s1919 = scalar_lea.vmem %s1832, 16 [#allocation3]
        %v1920 = vld [vmem:[%s1919] ss:$2 sm:$0x1]
        %s1921 = scalar_lea.vmem %s1832, 48 [#allocation3]
        %v1922 = vld [vmem:[%s1921] ss:$2 sm:$0xff]
        %s1923 = scalar_lea.vmem %s1832, 64 [#allocation3]
        %v1924 = vld [vmem:[%s1923] ss:$2 sm:$0x1]
        %s1925 = scalar_lea.vmem %s1832, 96 [#allocation3]
        %v1926 = vld [vmem:[%s1925] ss:$2 sm:$0xff]
        %s1927 = scalar_lea.vmem %s1832, 112 [#allocation3]
        %v1928 = vld [vmem:[%s1927] ss:$2 sm:$0x1]
        %s1929 = scalar_lea.vmem %s1832, 144 [#allocation3]
        %v1930 = vld [vmem:[%s1929] ss:$2 sm:$0xff]
        %s1931 = scalar_lea.vmem %s1832, 160 [#allocation3]
        %v1932 = vld [vmem:[%s1931] ss:$2 sm:$0x1]
        %s1933 = scalar_lea.vmem %s1832, 192 [#allocation3]
        %v1934 = vld [vmem:[%s1933] ss:$2 sm:$0xff]
        %s1935 = scalar_lea.vmem %s1832, 208 [#allocation3]
        %v1936 = vld [vmem:[%s1935] ss:$2 sm:$0x1]
        %s1937 = scalar_lea.vmem %s1832, 240 [#allocation3]
        %v1938 = vld [vmem:[%s1937] ss:$2 sm:$0xff]
        %s1939 = scalar_lea.vmem %s1832, 256 [#allocation3]
        %v1940 = vld [vmem:[%s1939] ss:$2 sm:$0x1]
        %s1941 = scalar_lea.vmem %s1832, 288 [#allocation3]
        %v1942 = vld [vmem:[%s1941] ss:$2 sm:$0xff]
        %s1943 = scalar_lea.vmem %s1832, 304 [#allocation3]
        %v1944 = vld [vmem:[%s1943] ss:$2 sm:$0x1]
        %s1945 = scalar_lea.vmem %s1832, 336 [#allocation3]
        %v1946 = vld [vmem:[%s1945] ss:$2 sm:$0xff]
        %s1947 = scalar_lea.vmem %s1832, 352 [#allocation3]
        %v1948 = vld [vmem:[%s1947] ss:$2 sm:$0x1]
        %s1949 = scalar_lea.vmem %s1832, 1 [#allocation3]
        %v1950 = vld [vmem:[%s1949] ss:$2 sm:$0xff]
        %s1951 = scalar_lea.vmem %s1832, 49 [#allocation3]
        %v1952 = vld [vmem:[%s1951] ss:$2 sm:$0xff]
        %s1953 = scalar_lea.vmem %s1832, 97 [#allocation3]
        %v1954 = vld [vmem:[%s1953] ss:$2 sm:$0xff]
        %s1955 = scalar_lea.vmem %s1832, 145 [#allocation3]
        %v1956 = vld [vmem:[%s1955] ss:$2 sm:$0xff]
        %s1957 = scalar_lea.vmem %s1832, 193 [#allocation3]
        %v1958 = vld [vmem:[%s1957] ss:$2 sm:$0xff]
        %s1959 = scalar_lea.vmem %s1832, 241 [#allocation3]
        %v1960 = vld [vmem:[%s1959] ss:$2 sm:$0xff]
        %s1961 = scalar_lea.vmem %s1832, 289 [#allocation3]
        %v1962 = vld [vmem:[%s1961] ss:$2 sm:$0xff]
        %s1963 = scalar_lea.vmem %s1832, 337 [#allocation3]
        %v1964 = vld [vmem:[%s1963] ss:$2 sm:$0xff]
        %v1965 = vlaneseq
        %v1966 = vshrl.u32 %v1965, 7
        %v1967 = vsub.s32 0, %v1966
        %v1968 = vrot.slane %v425, %v1967
        %v1969 = vmul.f32 %v1865, %v1968
        %v1970 = vmul.f32 %v1869, %v1968
        %v1971 = vmul.f32 %v1873, %v1968
        %v1972 = vmul.f32 %v1877, %v1968
        %v1973 = vmul.f32 %v1881, %v1968
        %v1974 = vmul.f32 %v1885, %v1968
        %v1975 = vmul.f32 %v1889, %v1968
        %v1976 = vmul.f32 %v1893, %v1968
        %v1977 = vadd.f32 %v1969, 0.0
        %v1978 = vadd.f32 %v1970, 0.0
        %v1979 = vadd.f32 %v1971, 0.0
        %v1980 = vadd.f32 %v1972, 0.0
        %v1981 = vadd.f32 %v1973, 0.0
        %v1982 = vadd.f32 %v1974, 0.0
        %v1983 = vadd.f32 %v1975, 0.0
        %v1984 = vadd.f32 %v1976, 0.0
        %v1985 = vlaneseq
        %v1986 = vshrl.u32 %v1985, 7
        %v1987 = vsub.s32 1, %v1986
        %v1988 = vrot.slane %v425, %v1987
        %v1989 = vmul.f32 %v1901, %v1988
        %v1990 = vmul.f32 %v1903, %v1988
        %v1991 = vmul.f32 %v1905, %v1988
        %v1992 = vmul.f32 %v1907, %v1988
        %v1993 = vmul.f32 %v1909, %v1988
        %v1994 = vmul.f32 %v1911, %v1988
        %v1995 = vmul.f32 %v1913, %v1988
        %v1996 = vmul.f32 %v1915, %v1988
        %v1997 = vadd.f32 %v1977, %v1989
        %v1998 = vadd.f32 %v1978, %v1990
        %v1999 = vadd.f32 %v1979, %v1991
        %v2000 = vadd.f32 %v1980, %v1992
        %v2001 = vadd.f32 %v1981, %v1993
        %v2002 = vadd.f32 %v1982, %v1994
        %v2003 = vadd.f32 %v1983, %v1995
        %v2004 = vadd.f32 %v1984, %v1996
        %v2005 = vlaneseq
        %v2006 = vshrl.u32 %v2005, 7
        %v2007 = vsub.s32 2, %v2006
        %v2008 = vrot.slane %v425, %v2007
        %v2009 = vmul.f32 %v1865, %v2008
        %v2010 = vmul.f32 %v1867, %v2008
        %v2011 = vmul.f32 %v1869, %v2008
        %v2012 = vmul.f32 %v1871, %v2008
        %v2013 = vmul.f32 %v1873, %v2008
        %v2014 = vmul.f32 %v1875, %v2008
        %v2015 = vmul.f32 %v1877, %v2008
        %v2016 = vmul.f32 %v1879, %v2008
        %v2017 = vmul.f32 %v1881, %v2008
        %v2018 = vmul.f32 %v1883, %v2008
        %v2019 = vmul.f32 %v1885, %v2008
        %v2020 = vmul.f32 %v1887, %v2008
        %v2021 = vmul.f32 %v1889, %v2008
        %v2022 = vmul.f32 %v1891, %v2008
        %v2023 = vmul.f32 %v1893, %v2008
        %v2024 = vmul.f32 %v1895, %v2008
        %vm2041 = vcmask 1046528
        %v2042 = vrot.slane %v2009, 1
        %v2043 = vrot.slane %v2010, 1
        %v2044 = vsel %vm2041, %v2042, %v2043
        %v2045 = vrot.slane %v2011, 1
        %v2046 = vrot.slane %v2012, 1
        %v2047 = vsel %vm2041, %v2045, %v2046
        %v2048 = vrot.slane %v2013, 1
        %v2049 = vrot.slane %v2014, 1
        %v2050 = vsel %vm2041, %v2048, %v2049
        %v2051 = vrot.slane %v2015, 1
        %v2052 = vrot.slane %v2016, 1
        %v2053 = vsel %vm2041, %v2051, %v2052
        %v2054 = vrot.slane %v2017, 1
        %v2055 = vrot.slane %v2018, 1
        %v2056 = vsel %vm2041, %v2054, %v2055
        %v2057 = vrot.slane %v2019, 1
        %v2058 = vrot.slane %v2020, 1
        %v2059 = vsel %vm2041, %v2057, %v2058
        %v2060 = vrot.slane %v2021, 1
        %v2061 = vrot.slane %v2022, 1
        %v2062 = vsel %vm2041, %v2060, %v2061
        %v2063 = vrot.slane %v2023, 1
        %v2064 = vrot.slane %v2024, 1
        %v2065 = vsel %vm2041, %v2063, %v2064
        %v2074 = vadd.f32 %v1997, %v2044
        %v2075 = vadd.f32 %v1998, %v2047
        %v2076 = vadd.f32 %v1999, %v2050
        %v2077 = vadd.f32 %v2000, %v2053
        %v2078 = vadd.f32 %v2001, %v2056
        %v2079 = vadd.f32 %v2002, %v2059
        %v2080 = vadd.f32 %v2003, %v2062
        %v2081 = vadd.f32 %v2004, %v2065
        %v2082 = vlaneseq
        %v2083 = vshrl.u32 %v2082, 7
        %v2084 = vsub.s32 3, %v2083
        %v2085 = vrot.slane %v425, %v2084
        %v2086 = vmul.f32 %v1918, %v2085
        %v2087 = vmul.f32 %v1922, %v2085
        %v2088 = vmul.f32 %v1926, %v2085
        %v2089 = vmul.f32 %v1930, %v2085
        %v2090 = vmul.f32 %v1934, %v2085
        %v2091 = vmul.f32 %v1938, %v2085
        %v2092 = vmul.f32 %v1942, %v2085
        %v2093 = vmul.f32 %v1946, %v2085
        %v2094 = vadd.f32 %v2074, %v2086
        %v2095 = vadd.f32 %v2075, %v2087
        %v2096 = vadd.f32 %v2076, %v2088
        %v2097 = vadd.f32 %v2077, %v2089
        %v2098 = vadd.f32 %v2078, %v2090
        %v2099 = vadd.f32 %v2079, %v2091
        %v2100 = vadd.f32 %v2080, %v2092
        %v2101 = vadd.f32 %v2081, %v2093
        %v2102 = vlaneseq
        %v2103 = vshrl.u32 %v2102, 7
        %v2104 = vsub.s32 4, %v2103
        %v2105 = vrot.slane %v425, %v2104
        %v2106 = vmul.f32 %v1950, %v2105
        %v2107 = vmul.f32 %v1952, %v2105
        %v2108 = vmul.f32 %v1954, %v2105
        %v2109 = vmul.f32 %v1956, %v2105
        %v2110 = vmul.f32 %v1958, %v2105
        %v2111 = vmul.f32 %v1960, %v2105
        %v2112 = vmul.f32 %v1962, %v2105
        %v2113 = vmul.f32 %v1964, %v2105
        %v2114 = vadd.f32 %v2094, %v2106
        %v2115 = vadd.f32 %v2095, %v2107
        %v2116 = vadd.f32 %v2096, %v2108
        %v2117 = vadd.f32 %v2097, %v2109
        %v2118 = vadd.f32 %v2098, %v2110
        %v2119 = vadd.f32 %v2099, %v2111
        %v2120 = vadd.f32 %v2100, %v2112
        %v2121 = vadd.f32 %v2101, %v2113
        %v2122 = vlaneseq
        %v2123 = vshrl.u32 %v2122, 7
        %v2124 = vsub.s32 5, %v2123
        %v2125 = vrot.slane %v425, %v2124
        %v2126 = vmul.f32 %v1918, %v2125
        %v2127 = vmul.f32 %v1920, %v2125
        %v2128 = vmul.f32 %v1922, %v2125
        %v2129 = vmul.f32 %v1924, %v2125
        %v2130 = vmul.f32 %v1926, %v2125
        %v2131 = vmul.f32 %v1928, %v2125
        %v2132 = vmul.f32 %v1930, %v2125
        %v2133 = vmul.f32 %v1932, %v2125
        %v2134 = vmul.f32 %v1934, %v2125
        %v2135 = vmul.f32 %v1936, %v2125
        %v2136 = vmul.f32 %v1938, %v2125
        %v2137 = vmul.f32 %v1940, %v2125
        %v2138 = vmul.f32 %v1942, %v2125
        %v2139 = vmul.f32 %v1944, %v2125
        %v2140 = vmul.f32 %v1946, %v2125
        %v2141 = vmul.f32 %v1948, %v2125
        %v2158 = vrot.slane %v2126, 1
        %v2159 = vrot.slane %v2127, 1
        %v2160 = vsel %vm2041, %v2158, %v2159
        %v2161 = vrot.slane %v2128, 1
        %v2162 = vrot.slane %v2129, 1
        %v2163 = vsel %vm2041, %v2161, %v2162
        %v2164 = vrot.slane %v2130, 1
        %v2165 = vrot.slane %v2131, 1
        %v2166 = vsel %vm2041, %v2164, %v2165
        %v2167 = vrot.slane %v2132, 1
        %v2168 = vrot.slane %v2133, 1
        %v2169 = vsel %vm2041, %v2167, %v2168
        %v2170 = vrot.slane %v2134, 1
        %v2171 = vrot.slane %v2135, 1
        %v2172 = vsel %vm2041, %v2170, %v2171
        %v2173 = vrot.slane %v2136, 1
        %v2174 = vrot.slane %v2137, 1
        %v2175 = vsel %vm2041, %v2173, %v2174
        %v2176 = vrot.slane %v2138, 1
        %v2177 = vrot.slane %v2139, 1
        %v2178 = vsel %vm2041, %v2176, %v2177
        %v2179 = vrot.slane %v2140, 1
        %v2180 = vrot.slane %v2141, 1
        %v2181 = vsel %vm2041, %v2179, %v2180
        %v2190 = vadd.f32 %v2114, %v2160
        %v2191 = vadd.f32 %v2115, %v2163
        %v2192 = vadd.f32 %v2116, %v2166
        %v2193 = vadd.f32 %v2117, %v2169
        %v2194 = vadd.f32 %v2118, %v2172
        %v2195 = vadd.f32 %v2119, %v2175
        %v2196 = vadd.f32 %v2120, %v2178
        %v2197 = vadd.f32 %v2121, %v2181
        %v2198 = vlaneseq
        %v2199 = vshrl.u32 %v2198, 7
        %v2200 = vsub.s32 6, %v2199
        %v2201 = vrot.slane %v425, %v2200
        %v2202 = vmul.f32 %v1869, %v2201
        %v2203 = vmul.f32 %v1873, %v2201
        %v2204 = vmul.f32 %v1877, %v2201
        %v2205 = vmul.f32 %v1881, %v2201
        %v2206 = vmul.f32 %v1885, %v2201
        %v2207 = vmul.f32 %v1889, %v2201
        %v2208 = vmul.f32 %v1893, %v2201
        %v2209 = vmul.f32 %v1897, %v2201
        %v2210 = vadd.f32 %v2190, %v2202
        %v2211 = vadd.f32 %v2191, %v2203
        %v2212 = vadd.f32 %v2192, %v2204
        %v2213 = vadd.f32 %v2193, %v2205
        %v2214 = vadd.f32 %v2194, %v2206
        %v2215 = vadd.f32 %v2195, %v2207
        %v2216 = vadd.f32 %v2196, %v2208
        %v2217 = vadd.f32 %v2197, %v2209
        %v2218 = vlaneseq
        %v2219 = vshrl.u32 %v2218, 7
        %v2220 = vsub.s32 7, %v2219
        %v2221 = vrot.slane %v425, %v2220
        %v2222 = vmul.f32 %v1903, %v2221
        %v2223 = vmul.f32 %v1905, %v2221
        %v2224 = vmul.f32 %v1907, %v2221
        %v2225 = vmul.f32 %v1909, %v2221
        %v2226 = vmul.f32 %v1911, %v2221
        %v2227 = vmul.f32 %v1913, %v2221
        %v2228 = vmul.f32 %v1915, %v2221
        %v2229 = vmul.f32 %v1917, %v2221
        %v2230 = vadd.f32 %v2210, %v2222
        %v2231 = vadd.f32 %v2211, %v2223
        %v2232 = vadd.f32 %v2212, %v2224
        %v2233 = vadd.f32 %v2213, %v2225
        %v2234 = vadd.f32 %v2214, %v2226
        %v2235 = vadd.f32 %v2215, %v2227
        %v2236 = vadd.f32 %v2216, %v2228
        %v2237 = vadd.f32 %v2217, %v2229
        %v2238 = vlaneseq
        %v2239 = vshrl.u32 %v2238, 7
        %v2240 = vsub.s32 0, %v2239
        %v2241 = vrot.slane %v426, %v2240
        %v2242 = vmul.f32 %v1869, %v2241
        %v2243 = vmul.f32 %v1871, %v2241
        %v2244 = vmul.f32 %v1873, %v2241
        %v2245 = vmul.f32 %v1875, %v2241
        %v2246 = vmul.f32 %v1877, %v2241
        %v2247 = vmul.f32 %v1879, %v2241
        %v2248 = vmul.f32 %v1881, %v2241
        %v2249 = vmul.f32 %v1883, %v2241
        %v2250 = vmul.f32 %v1885, %v2241
        %v2251 = vmul.f32 %v1887, %v2241
        %v2252 = vmul.f32 %v1889, %v2241
        %v2253 = vmul.f32 %v1891, %v2241
        %v2254 = vmul.f32 %v1893, %v2241
        %v2255 = vmul.f32 %v1895, %v2241
        %v2256 = vmul.f32 %v1897, %v2241
        %v2257 = vmul.f32 %v1899, %v2241
        %v2274 = vrot.slane %v2242, 1
        %v2275 = vrot.slane %v2243, 1
        %v2276 = vsel %vm2041, %v2274, %v2275
        %v2277 = vrot.slane %v2244, 1
        %v2278 = vrot.slane %v2245, 1
        %v2279 = vsel %vm2041, %v2277, %v2278
        %v2280 = vrot.slane %v2246, 1
        %v2281 = vrot.slane %v2247, 1
        %v2282 = vsel %vm2041, %v2280, %v2281
        %v2283 = vrot.slane %v2248, 1
        %v2284 = vrot.slane %v2249, 1
        %v2285 = vsel %vm2041, %v2283, %v2284
        %v2286 = vrot.slane %v2250, 1
        %v2287 = vrot.slane %v2251, 1
        %v2288 = vsel %vm2041, %v2286, %v2287
        %v2289 = vrot.slane %v2252, 1
        %v2290 = vrot.slane %v2253, 1
        %v2291 = vsel %vm2041, %v2289, %v2290
        %v2292 = vrot.slane %v2254, 1
        %v2293 = vrot.slane %v2255, 1
        %v2294 = vsel %vm2041, %v2292, %v2293
        %v2295 = vrot.slane %v2256, 1
        %v2296 = vrot.slane %v2257, 1
        %v2297 = vsel %vm2041, %v2295, %v2296
        %v2306 = vadd.f32 %v2230, %v2276
        %v2307 = vadd.f32 %v2231, %v2279
        %v2308 = vadd.f32 %v2232, %v2282
        %v2309 = vadd.f32 %v2233, %v2285
        %v2310 = vadd.f32 %v2234, %v2288
        %v2311 = vadd.f32 %v2235, %v2291
        %v2312 = vadd.f32 %v2236, %v2294
        %v2313 = vadd.f32 %v2237, %v2297
        %v2315 = vlaneseq
        %v2316 = vshrl.u32 %v2315, 7
        %v2317 = vsub.s32 0, %v2316
        %v2318 = vrot.slane %v429, %v2317
        %v2320 = vadd.f32 %v2306, %v2318
        %v2321 = vadd.f32 %v2307, %v2318
        %v2322 = vadd.f32 %v2308, %v2318
        %v2323 = vadd.f32 %v2309, %v2318
        %v2324 = vadd.f32 %v2310, %v2318
        %v2325 = vadd.f32 %v2311, %v2318
        %v2326 = vadd.f32 %v2312, %v2318
        %v2327 = vadd.f32 %v2313, %v2318
        %v2328 = vmax.f32 %v2320, 0.0
        %v2329 = vmax.f32 %v2321, 0.0
        %v2330 = vmax.f32 %v2322, 0.0
        %v2331 = vmax.f32 %v2323, 0.0
        %v2332 = vmax.f32 %v2324, 0.0
        %v2333 = vmax.f32 %v2325, 0.0
        %v2334 = vmax.f32 %v2326, 0.0
        %v2335 = vmax.f32 %v2327, 0.0
        %v2337 = vlaneseq
        %v2338 = vshrl.u32 %v2337, 7
        %v2339 = vsub.s32 0, %v2338
        %v2340 = vrot.slane %v430, %v2339
        %v2343 = vsel %vm377, %v2328, 0
        %v2346 = vsel %vm377, %v2329, 0
        %v2349 = vsel %vm377, %v2330, 0
        %v2352 = vsel %vm377, %v2331, 0
        %v2355 = vsel %vm377, %v2332, 0
        %v2358 = vsel %vm377, %v2333, 0
        %v2361 = vsel %vm377, %v2334, 0
        %v2364 = vsel %vm377, %v2335, 0
        %2366 = vmatprep.subr.mxu0 0.0
        %2367 = vmatpush1.msra.mxu0 %v433
        %2368 = vmatprep.subr.mxu0 0.0
        %2369 = vmatpush1.msra.mxu0 %v434
        %2370 = vmatprep.subr.mxu0 0.0
        %2371 = vmatpush1.msra.mxu0 %v435
        %2372 = vmatprep.subr.mxu0 0.0
        %2373 = vmatpush1.msra.mxu0 %v436
        %2374 = vmatprep.subr.mxu0 0.0
        %2375 = vmatpush1.msra.mxu0 0.0
        %2376 = vmatprep.subr.mxu0 0.0
        %2377 = vmatpush1.msra.mxu0 0.0
        %2378 = vmatprep.subr.mxu0 0.0
        %2379 = vmatpush1.msra.mxu0 0.0
        %2380 = vmatprep.subr.mxu0 0.0
        %2381 = vmatpush1.msra.mxu0 0.0
        %2382 = vmatprep.subr.mxu0 0.0
        %2383 = vmatpush1.msra.mxu0 0.0
        %2384 = vmatprep.subr.mxu0 0.0
        %2385 = vmatpush1.msra.mxu0 0.0
        %2386 = vmatprep.subr.mxu0 0.0
        %2387 = vmatpush1.msra.mxu0 0.0
        %2388 = vmatprep.subr.mxu0 0.0
        %2389 = vmatpush1.msra.mxu0 0.0
        %2390 = vmatprep.subr.mxu0 0.0
        %2391 = vmatpush1.msra.mxu0 0.0
        %2392 = vmatprep.subr.mxu0 0.0
        %2393 = vmatpush1.msra.mxu0 0.0
        %2394 = vmatprep.subr.mxu0 0.0
        %2395 = vmatpush1.msra.mxu0 0.0
        %2396 = vmatprep.subr.mxu0 0.0
        %2397 = vmatpush1.msra.mxu0 0.0
        %2398 = vmatprep.subr.mxu0 0.0
        %2399 = vmatpush1.msra.mxu0 0.0
        %2400 = vmatprep.subr.mxu0 0.0
        %2401 = vmatpush1.msra.mxu0 0.0
        %2402 = vmatprep.subr.mxu0 0.0
        %2403 = vmatpush1.msra.mxu0 0.0
        %2404 = vmatprep.subr.mxu0 0.0
        %2405 = vmatpush1.msra.mxu0 0.0
        %2406 = vmatprep.subr.mxu0 0.0
        %2407 = vmatpush1.msra.mxu0 0.0
        %2408 = vmatprep.subr.mxu0 0.0
        %2409 = vmatpush1.msra.mxu0 0.0
        %2410 = vmatprep.subr.mxu0 0.0
        %2411 = vmatpush1.msra.mxu0 0.0
        %2412 = vmatprep.subr.mxu0 0.0
        %2413 = vmatpush1.msra.mxu0 0.0
        %2414 = vmatprep.subr.mxu0 0.0
        %2415 = vmatpush1.msra.mxu0 0.0
        %2416 = vmatprep.subr.mxu0 0.0
        %2417 = vmatpush1.msra.mxu0 0.0
        %2418 = vmatprep.subr.mxu0 0.0
        %2419 = vmatpush1.msra.mxu0 0.0
        %2420 = vmatprep.subr.mxu0 0.0
        %2421 = vmatpush1.msra.mxu0 0.0
        %2422 = vmatprep.subr.mxu0 0.0
        %2423 = vmatpush1.msra.mxu0 0.0
        %2424 = vmatprep.subr.mxu0 0.0
        %2425 = vmatpush1.msra.mxu0 0.0
        %2426 = vmatprep.subr.mxu0 0.0
        %2427 = vmatpush1.msra.mxu0 0.0
        %2428 = vmatprep.subr.mxu0 0.0
        %2429 = vmatpush1.msra.mxu0 0.0
        %2430 = vmatprep.mubr.f32.mxu0 0.0
        %2431 = vmatmul.mubr.f32.gmra.mrb[0].mxu0 %v2343
        %v2432 = vpop.f32.mrb[0].mxu0
        %v2433 = vadd.f32 %v2340, %v2432
        %v2434 = vpop.f32.mrb[0].mxu0
        %2435 = vmatprep.mubr.f32.mxu0 0.0
        %2436 = vmatmul.mubr.f32.gmra.mrb[0].mxu0 %v2346
        %v2437 = vpop.f32.mrb[0].mxu0
        %v2438 = vadd.f32 %v2340, %v2437
        %v2439 = vpop.f32.mrb[0].mxu0
        %2440 = vmatprep.mubr.f32.mxu0 0.0
        %2441 = vmatmul.mubr.f32.gmra.mrb[0].mxu0 %v2349
        %v2442 = vpop.f32.mrb[0].mxu0
        %v2443 = vadd.f32 %v2340, %v2442
        %v2444 = vpop.f32.mrb[0].mxu0
        %2445 = vmatprep.mubr.f32.mxu0 0.0
        %2446 = vmatmul.mubr.f32.gmra.mrb[0].mxu0 %v2352
        %v2447 = vpop.f32.mrb[0].mxu0
        %v2448 = vadd.f32 %v2340, %v2447
        %v2449 = vpop.f32.mrb[0].mxu0
        %2450 = vmatprep.mubr.f32.mxu0 0.0
        %2451 = vmatmul.mubr.f32.gmra.mrb[0].mxu0 %v2355
        %v2452 = vpop.f32.mrb[0].mxu0
        %v2453 = vadd.f32 %v2340, %v2452
        %v2454 = vpop.f32.mrb[0].mxu0
        %2455 = vmatprep.mubr.f32.mxu0 0.0
        %2456 = vmatmul.mubr.f32.gmra.mrb[0].mxu0 %v2358
        %v2457 = vpop.f32.mrb[0].mxu0
        %v2458 = vadd.f32 %v2340, %v2457
        %v2459 = vpop.f32.mrb[0].mxu0
        %2460 = vmatprep.mubr.f32.mxu0 0.0
        %2461 = vmatmul.mubr.f32.gmra.mrb[0].mxu0 %v2361
        %v2462 = vpop.f32.mrb[0].mxu0
        %v2463 = vadd.f32 %v2340, %v2462
        %v2464 = vpop.f32.mrb[0].mxu0
        %2465 = vmatprep.mubr.f32.mxu0 0.0
        %2466 = vmatmul.mubr.f32.gmra.mrb[0].mxu0 %v2364
        %v2467 = vpop.f32.mrb[0].mxu0
        %v2468 = vadd.f32 %v2340, %v2467
        %v2469 = vpop.f32.mrb[0].mxu0
        %2470 = vdwg.mxu0
        %v2471 = vmax.f32 %v2433, 0.0
        %v2472 = vmax.f32 %v2438, 0.0
        %v2473 = vmax.f32 %v2443, 0.0
        %v2474 = vmax.f32 %v2448, 0.0
        %v2475 = vmax.f32 %v2453, 0.0
        %v2476 = vmax.f32 %v2458, 0.0
        %v2477 = vmax.f32 %v2463, 0.0
        %v2478 = vmax.f32 %v2468, 0.0
        %vm2479 = vcmask 523264
        %2480 = vst.msk [vmem:[%s325] sm:$0xff] %vm2479, %v2471
        %2481 = vst.msk [vmem:[%s325 + $0x8] sm:$0xff] %vm2479, %v2472
        %2482 = vst.msk [vmem:[%s325 + $0x10] sm:$0xff] %vm2479, %v2473
        %2483 = vst.msk [vmem:[%s325 + $0x18] sm:$0xff] %vm2479, %v2474
        %2484 = vst.msk [vmem:[%s325 + $0x20] sm:$0xff] %vm2479, %v2475
        %2485 = vst.msk [vmem:[%s325 + $0x28] sm:$0xff] %vm2479, %v2476
        %2486 = vst.msk [vmem:[%s325 + $0x30] sm:$0xff] %vm2479, %v2477
        %2487 = vst.msk [vmem:[%s325 + $0x38] sm:$0xff] %vm2479, %v2478
        %s2488 = sand.u32 %s225, 1
        %s2489 = scalar_lea.sflag [#allocation5], %s2488
        %s2490 = sand.u32 %s225, 1
        %s2491 = smul.addr %s2490, 64
        %s2492 = scalar_lea.vmem [#allocation4], %s2491
        // Predicated region
        $region57: #{forward_bb1.1} parent=55 // pred_check
          %p2493 = pneg %p235
        $region58: #{forward_bb1.1} parent=55 // pred_check_branch
          %2495 = sbr.rel (%p2493) target = $region60
        $region59: #{forward_bb1.1} parent=55 // pred_region
          %s2497 = ssub.s32 1024, 1024
          %2498 = vsyncadd %s2489, %s2497
          %s2499 = smul.addr %s23, 8
          %s2500 = smul.addr %s2499, 128
          %s2501 = scalar_lea.hbm %s9, %s2500
          %s2502 = sshll.u32 %s2492, 4
          %s2503 = int_to_ptr.vmem [resolvable:$true] %s2502
          %2508 = dma.vmem_to_hbm [thread:$0]  %s2503, 1024, %s2501, %s2489, 128, 128, 8
        $region60: #{forward_bb1.1} parent=55 // pred_fallthru
          _
      $region56: #{forward_bb1.1} parent=5 // pred_fallthru
        _
      %p2509 = scmp.le.s32.totalorder 2, %s18
      // Predicated region
      $region61: #{forward_bb1.1} parent=5 // pred_check
        %p2510 = pneg %p2509
      $region62: #{forward_bb1.1} parent=5 // pred_check_branch
        %2512 = sbr.rel (%p2510) target = $region64
      $region63: #{forward_bb1.1} parent=5 // pred_region
        %s2513 = ssub.s32 %s18, 2
        // Predicated region
        $region65: #{forward_bb1.1} parent=63 // pred_check
          %p2514 = pneg %p241
        $region66: #{forward_bb1.1} parent=63 // pred_check_branch
          %2516 = sbr.rel (%p2514) target = $region68
        $region67: #{forward_bb1.1} parent=63 // pred_region
          %s2517 = sand.u32 %s226, 1
          %s2518 = scalar_lea.sflag [#allocation5], %s2517
          %s2519 = sand.u32 %s226, 1
          %s2520 = smul.addr %s2519, 64
          %s2521 = scalar_lea.vmem [#allocation4], %s2520
          %2522 = dma.done %s2518, 1024
        $region68: #{forward_bb1.1} parent=63 // pred_fallthru
          _
      $region64: #{forward_bb1.1} parent=5 // pred_fallthru
        _
    $region6: #{forward_bb1.1} parent=1 // loop_footer
      %s22 = sadd.s32 1, %s18
    $region7: #{forward_bb1.1} parent=1 // loop_footer_branch
      %17 = sbr.rel target = $region3
    $region8: #{forward_bb1.1} parent=1 // loop_exit
      _
    %2523 = vsyncpa [#allocation5], 1
    %s2524 = scalar_lea.sflag [#allocation5], 1
    %2525 = vsyncpa %s2524, 1

</llo_original>
